<compile_context>
chip_gen: v5e
topology: v5e:2x2
jax: 0.10.0
libtpu: 0.0.40
codegen_flags: <defaults>
</compile_context>

<pallas_src>
import jax
import jax.numpy as jnp
import numpy as np
from jax.experimental import pallas as pl
from jax.experimental.pallas import tpu as pltpu

_TIME_BLOCK = 16         # timesteps per grid step (amortizes ~0.35us/step)
_COMPUTE_DTYPE = jnp.bfloat16


def _round_up(x, m):
    return (x + m - 1) // m * m


def _pick_tile(dim, unit, cap):
    """Tile size: multiple of `unit`, <= ~cap, balanced so padding `dim` up to
    a multiple of the tile is minimal (replaces the old divisor search)."""
    dim_u = _round_up(dim, unit)
    if dim_u <= cap:
        return dim_u
    n_blocks = -(-dim_u // cap)
    return _round_up(-(-dim_u // n_blocks), unit)


def _pick_batch_block(B):
    """(b_blk, B_pad): up to 128 rows per serial MXU step; >=2 batch blocks
    when the batch allows so v7x can shard the parallel axis over 2 TCs."""
    b8 = _round_up(B, 8)
    if b8 <= 16:
        return b8, b8                      # single full-batch block
    n_blocks = max(2, -(-b8 // 128))
    b_blk = _round_up(-(-b8 // n_blocks), 16)   # multiple of 16 (bf16 packing)
    return b_blk, n_blocks * b_blk


# ---------------------------------------------------------------------------
# Generic tiled (M,K)@(K,N)+bias kernel — used for the hoisted input
# projection and the FC over the vocab.  Fully parallel grid, K resident.
# ---------------------------------------------------------------------------
def _matmul_bias_kernel(a_ref, b_ref, bias_ref, o_ref):
    o_ref[...] = (jnp.dot(a_ref[...], b_ref[...],
                          preferred_element_type=jnp.float32)
                  + bias_ref[...]).astype(o_ref.dtype)


def _matmul_bias(a, b, bias, *, out_dtype=jnp.float32, tm_cap=512, tn_cap=1024):
    """a:(M,K) bf16, b:(K,N) bf16, bias:(1,N) f32 -> (M,N) out_dtype."""
    M, K = a.shape
    N = b.shape[1]
    tm = _pick_tile(M, 16, tm_cap)        # 16 covers bf16 sublane packing
    tn = _pick_tile(N, 128, tn_cap)       # lane-dense stores
    M_pad = _round_up(M, tm)
    N_pad = _round_up(N, tn)
    if M_pad != M:
        a = jnp.pad(a, ((0, M_pad - M), (0, 0)))
    if N_pad != N:
        b = jnp.pad(b, ((0, 0), (0, N_pad - N)))
        bias = jnp.pad(bias, ((0, 0), (0, N_pad - N)))

    a_it = a.dtype.itemsize
    b_it = b.dtype.itemsize
    o_it = np.dtype(out_dtype).itemsize
    blk_bytes = tm * K * a_it + K * tn * b_it + tn * 4 + tm * tn * o_it
    vmem_limit = int(min(max(3 * blk_bytes + (2 << 20), 32 << 20), 60 << 20))
    cost = pl.CostEstimate(
        flops=2 * M_pad * K * N_pad,
        transcendentals=0,
        bytes_accessed=(M_pad * K * a_it + K * N_pad * b_it
                        + M_pad * N_pad * o_it + N_pad * 4))

    out = pl.pallas_call(
        _matmul_bias_kernel,
        out_shape=jax.ShapeDtypeStruct((M_pad, N_pad), out_dtype),
        grid_spec=pltpu.PrefetchScalarGridSpec(
            num_scalar_prefetch=0,
            grid=(M_pad // tm, N_pad // tn),
            in_specs=[
                pl.BlockSpec((tm, K), lambda i, j: (i, 0)),
                pl.BlockSpec((K, tn), lambda i, j: (0, j)),
                pl.BlockSpec((1, tn), lambda i, j: (0, j)),
            ],
            out_specs=pl.BlockSpec((tm, tn), lambda i, j: (i, j)),
        ),
        compiler_params=pltpu.CompilerParams(
            dimension_semantics=("parallel", "parallel"),
            vmem_limit_bytes=vmem_limit),
        cost_estimate=cost,
    )(a, b, bias)
    return out[:M, :N]


# ---------------------------------------------------------------------------
# Recurrent LSTM kernel (time-major): only h @ W_hh^T + precomputed gates_x[t]
# per step; dense (b_blk, .) per-step loads/stores; h/c carried in VMEM.
# ---------------------------------------------------------------------------
def _lstm_recurrent_kernel(gx_ref, whh_ref, h_out_ref, h_scr, c_scr):
    H = h_scr.shape[1]
    TB = gx_ref.shape[0]

    @pl.when(pl.program_id(1) == 0)       # start of this batch block's sweep
    def _():
        h_scr[...] = jnp.zeros_like(h_scr)
        c_scr[...] = jnp.zeros_like(c_scr)

    h = h_scr[...]                        # (b_blk, H) f32
    c = c_scr[...]
    whh = whh_ref[...]                    # (H, 4H) bf16, hoisted out of the loop

    for t in range(TB):                   # static unroll over the time block
        # gx stored bf16; bias and h@W_hh contribution stay f32.
        gates = gx_ref[t].astype(jnp.float32) + jnp.dot(
            h.astype(whh.dtype), whh, preferred_element_type=jnp.float32)
        # Gate order i, f, g, o (PyTorch).  H is a multiple of 128 in the demo
        # so every gate slice is lane-aligned.  All gate math stays f32.
        i_g = jax.nn.sigmoid(gates[:, 0:H])
        f_g = jax.nn.sigmoid(gates[:, H:2 * H])
        g_g = jnp.tanh(gates[:, 2 * H:3 * H])
        o_g = jax.nn.sigmoid(gates[:, 3 * H:4 * H])
        c = f_g * c + i_g * g_g
        h = o_g * jnp.tanh(c)
        h_out_ref[t] = h.astype(h_out_ref.dtype)   # dense (b_blk, H) store

    h_scr[...] = h
    c_scr[...] = c


def _lstm_forward(gates_x_tm, w_hh_bf, *, b_blk, tb):
    """gates_x_tm: (T_pad, B_pad, 4H) bf16 -> h_seq (T_pad, B_pad, H) bf16."""
    T_pad, B_pad, G = gates_x_tm.shape
    H = w_hh_bf.shape[0]

    gx_it = gates_x_tm.dtype.itemsize
    need = (2 * (tb * b_blk * G * gx_it)        # gx block, double buffered
            + 2 * (tb * b_blk * H * 2)          # h_out block (bf16), x2
            + 2 * (H * G * 2)                   # W_hh (default 2-deep buffer)
            + 2 * (b_blk * H * 4))              # h/c scratch
    vmem_limit = int(min(max(need * 3 // 2 + (2 << 20), 32 << 20), 60 << 20))
    # TODO(synk): on v7x with large H, give the W_hh BlockSpec
    # pipeline_mode=pl.Buffered(1) to avoid double-buffering the constant
    # resident weight block (pure VMEM saving; left default here).

    return pl.pallas_call(
        _lstm_recurrent_kernel,
        out_shape=jax.ShapeDtypeStruct((T_pad, B_pad, H), _COMPUTE_DTYPE),
        grid_spec=pltpu.PrefetchScalarGridSpec(
            num_scalar_prefetch=0,
            grid=(B_pad // b_blk, T_pad // tb),
            in_specs=[
                pl.BlockSpec((tb, b_blk, G), lambda b, t: (t, b, 0)),
                pl.BlockSpec((H, G), lambda b, t: (0, 0)),   # W_hh^T resident
            ],
            out_specs=pl.BlockSpec((tb, b_blk, H), lambda b, t: (t, b, 0)),
            scratch_shapes=[
                pltpu.VMEM((b_blk, H), jnp.float32),   # h carry
                pltpu.VMEM((b_blk, H), jnp.float32),   # c carry
            ],
        ),
        compiler_params=pltpu.CompilerParams(
            # batch blocks independent -> parallel (shards across TCs on v7x);
            # time is a true recurrence -> arbitrary (sequential).
            dimension_semantics=("parallel", "arbitrary"),
            vmem_limit_bytes=vmem_limit),
    )(gates_x_tm, w_hh_bf)


# ---------------------------------------------------------------------------
# Full forward pass (batch-first in, batch-first out, like PyTorch).
# ---------------------------------------------------------------------------
@jax.jit
def decoder_rnn_forward(features, captions, params):
    """features: (B, E) f32, captions: (B, Tc) int32 -> logits (B, Tc, V)."""
    emb_table = params["embedding"]          # (V, E)
    w_ih_t = params["w_ih_t"]                # (E, 4H)  == W_ih^T
    w_hh_t = params["w_hh_t"]                # (H, 4H)  == W_hh^T
    b_gate = params["b_gate"]                # (1, 4H)  == b_ih + b_hh
    w_fc_t = params["w_fc_t"]                # (H, V)   == W_fc^T
    b_fc = params["b_fc"]                    # (1, V)

    B, E = features.shape
    H = w_hh_t.shape[0]
    V = w_fc_t.shape[1]

    # Glue: embedding gather + concat (features becomes timestep 0).
    # TODO(synk): embedding gather could be fused via scalar prefetch +
    # pl.Element row index_map; left as XLA since it is tiny vs. the FC.
    embeds = jnp.take(emb_table, captions[:, :-1], axis=0)        # (B, Tc-1, E)
    x = jnp.concatenate([features[:, None, :], embeds], axis=1)   # (B, T, E)
    T = x.shape[1]

    # Pad batch to the batch block and time to the time block.  Padded
    # rows/timesteps are independent/causal-trailing and sliced off at the end.
    b_blk, B_pad = _pick_batch_block(B)
    T_pad = _round_up(T, _TIME_BLOCK)
    if (B_pad, T_pad) != (B, T):
        x = jnp.pad(x, ((0, B_pad - B), (0, T_pad - T), (0, 0)))

    # bf16 operands for every matmul (f32 accumulation inside the kernels).
    x_bf = x.astype(_COMPUTE_DTYPE)
    w_ih_bf = w_ih_t.astype(_COMPUTE_DTYPE)
    w_hh_bf = w_hh_t.astype(_COMPUTE_DTYPE)
    w_fc_bf = w_fc_t.astype(_COMPUTE_DTYPE)

    # Time-major layout for the recurrence (dense per-step slabs).  The
    # transposes below only touch B*T*E / B*T*H elements (small vs. logits).
    x_tm = jnp.transpose(x_bf, (1, 0, 2))                         # (T_pad, B_pad, E)

    # 1) Input projection hoisted out of the recurrence; bf16 gates_x halves
    #    the HBM round trip that the recurrence re-reads.
    gates_x = _matmul_bias(x_tm.reshape(T_pad * B_pad, E), w_ih_bf, b_gate,
                           out_dtype=_COMPUTE_DTYPE)
    gates_x = gates_x.reshape(T_pad, B_pad, 4 * H)

    # 2) Sequential recurrence (only the (b_blk,H)@(H,4H) matmul is serial).
    h_seq_tm = _lstm_forward(gates_x, w_hh_bf,
                             b_blk=b_blk, tb=_TIME_BLOCK)         # (T_pad, B_pad, H) bf16

    # 3) FC over all B*T rows at once; V tiled inside the matmul kernel.
    h_seq = jnp.transpose(h_seq_tm, (1, 0, 2)).reshape(B_pad * T_pad, H)
    logits = _matmul_bias(h_seq, w_fc_bf, b_fc, out_dtype=jnp.float32,
                          tm_cap=512, tn_cap=1024)
    return logits.reshape(B_pad, T_pad, V)[:B, :T, :]


# ---------------------------------------------------------------------------
# Pure-JAX reference (mirrors the kernel's bf16-matmul / f32-accum policy,
# including the bf16 gates_x / bf16 h_seq intermediates).
# ---------------------------------------------------------------------------
def _reference_forward(features, captions, params):
    cdt = _COMPUTE_DTYPE
    emb_table = params["embedding"]
    w_ih_bf = params["w_ih_t"].astype(cdt)
    w_hh_bf = params["w_hh_t"].astype(cdt)
    b_gate = params["b_gate"]
    w_fc_bf = params["w_fc_t"].astype(cdt)
    b_fc = params["b_fc"]
    H = params["w_hh_t"].shape[0]

    embeds = jnp.take(emb_table, captions[:, :-1], axis=0)
    x = jnp.concatenate([features[:, None, :], embeds], axis=1)   # (B, T, E)
    B, T, E = x.shape

    gx = (jnp.dot(x.astype(cdt).reshape(B * T, E), w_ih_bf,
                  preferred_element_type=jnp.float32) + b_gate)
    gx = gx.astype(cdt).reshape(B, T, 4 * H)

    def step(carry, gxt):                     # gxt: (B, 4H) bf16
        h, c = carry
        gates = gxt.astype(jnp.float32) + jnp.dot(
            h.astype(cdt), w_hh_bf, preferred_element_type=jnp.float32)
        i = jax.nn.sigmoid(gates[:, 0:H])
        f = jax.nn.sigmoid(gates[:, H:2 * H])
        g = jnp.tanh(gates[:, 2 * H:3 * H])
        o = jax.nn.sigmoid(gates[:, 3 * H:4 * H])
        c = f * c + i * g
        h = o * jnp.tanh(c)
        return (h, c), h.astype(cdt)

    init = (jnp.zeros((B, H), jnp.float32), jnp.zeros((B, H), jnp.float32))
    _, hs = jax.lax.scan(step, init, jnp.transpose(gx, (1, 0, 2)))   # (T, B, H)
    hs = jnp.transpose(hs, (1, 0, 2))                                # (B, T, H)
    out = (jnp.dot(hs.reshape(B * T, H), w_fc_bf,
                   preferred_element_type=jnp.float32) + b_fc)
    return out.reshape(B, T, -1)


def init_params(key, embed_size, hidden_size, vocab_size):
    """Synthetic parameters matching nn.Embedding / nn.LSTM / nn.Linear."""
    ks = jax.random.split(key, 7)
    k = 1.0 / jnp.sqrt(hidden_size)
    emb = jax.random.normal(ks[0], (vocab_size, embed_size), jnp.float32)
    w_ih = jax.random.uniform(ks[1], (4 * hidden_size, embed_size),
                              jnp.float32, -k, k)
    w_hh = jax.random.uniform(ks[2], (4 * hidden_size, hidden_size),
                              jnp.float32, -k, k)
    b_ih = jax.random.uniform(ks[3], (4 * hidden_size,), jnp.float32, -k, k)
    b_hh = jax.random.uniform(ks[4], (4 * hidden_size,), jnp.float32, -k, k)
    w_fc = jax.random.uniform(ks[5], (vocab_size, hidden_size),
                              jnp.float32, -k, k)
    b_fc = jax.random.uniform(ks[6], (vocab_size,), jnp.float32, -k, k)
    return {
        "embedding": emb,
        "w_ih_t": w_ih.T,                       # (E, 4H)
        "w_hh_t": w_hh.T,                       # (H, 4H)
        "b_gate": (b_ih + b_hh)[None, :],       # (1, 4H)
        "w_fc_t": w_fc.T,                       # (H, V)
        "b_fc": b_fc[None, :],                  # (1, V)
    }


if __name__ == "__main__":
    # H multiple of 128 -> lane-aligned gate slices; V multiple of 128.
    EMBED, HIDDEN, VOCAB = 64, 128, 256
    B, T_CAP = 4, 13          # exercises batch padding (4->8) + time padding (13->16)

    key = jax.random.PRNGKey(0)
    k_p, k_f, k_c = jax.random.split(key, 3)

    params = init_params(k_p, EMBED, HIDDEN, VOCAB)
    features = jax.random.normal(k_f, (B, EMBED), jnp.float32)
    captions = jax.random.randint(k_c, (B, T_CAP), 0, VOCAB, jnp.int32)

    out = jax.block_until_ready(decoder_rnn_forward(features, captions, params))

    ref = _reference_forward(features, captions, params)
    assert out.shape == (B, T_CAP, VOCAB), out.shape
    max_err = float(jnp.max(jnp.abs(out - ref)))
    assert jnp.allclose(out, ref, atol=5e-3, rtol=5e-3), max_err

    print("KERNEL_OK")
</pallas_src>

<mosaic_0001>
module attributes {stable_mosaic.version = 11 : i64} {
  func.func @_matmul_bias_kernel(%arg0: i32, %arg1: i32, %arg2: memref<128x64xbf16, #tpu.memory_space<vmem>>, %arg3: memref<64x512xbf16, #tpu.memory_space<vmem>>, %arg4: memref<1x512xf32, #tpu.memory_space<vmem>>, %arg5: memref<128x512xbf16, #tpu.memory_space<vmem>>) attributes {dimension_semantics = [#tpu.dimension_semantics<parallel>, #tpu.dimension_semantics<parallel>], iteration_bounds = array<i64: 1, 1>, scalar_prefetch = 0 : i64, scratch_operands = 0 : i64, tpu.core_type = #tpu.core_type<tc>, window_params = [{transform_indices = @transform_0, window_bounds = array<i64: 128, 64>}, {transform_indices = @transform_1, window_bounds = array<i64: 64, 512>}, {transform_indices = @transform_2, window_bounds = array<i64: 1, 512>}, {transform_indices = @transform_3, window_bounds = array<i64: 128, 512>}]} {
    %c0 = arith.constant 0 : index
    %c0_0 = arith.constant 0 : index
    %0 = vector.load %arg2[%c0, %c0_0] : memref<128x64xbf16, #tpu.memory_space<vmem>>, vector<128x64xbf16>
    %c0_1 = arith.constant 0 : index
    %c0_2 = arith.constant 0 : index
    %1 = vector.load %arg3[%c0_1, %c0_2] : memref<64x512xbf16, #tpu.memory_space<vmem>>, vector<64x512xbf16>
    %cst = arith.constant dense<0.000000e+00> : vector<128x512xf32>
    %2 = tpu.matmul %0, %1, %cst {dimension_numbers = #tpu.dot_dimension_numbers<[1], [0], [0], [1], [0, 0, 1, 1], [], []>} : vector<128x64xbf16>, vector<64x512xbf16>, vector<128x512xf32> -> vector<128x512xf32>
    %c0_3 = arith.constant 0 : index
    %c0_4 = arith.constant 0 : index
    %3 = vector.load %arg4[%c0_3, %c0_4] : memref<1x512xf32, #tpu.memory_space<vmem>>, vector<1x512xf32>
    %4 = vector.broadcast %3 : vector<1x512xf32> to vector<128x512xf32>
    %5 = arith.addf %2, %4 : vector<128x512xf32>
    %6 = arith.truncf %5 : vector<128x512xf32> to vector<128x512xbf16>
    %c0_5 = arith.constant 0 : index
    %c0_6 = arith.constant 0 : index
    %7 = vector.load %arg5[%c0_5, %c0_6] : memref<128x512xbf16, #tpu.memory_space<vmem>>, vector<128x512xbf16>
    tpu.vector_store %arg5[%c0_5, %c0_6], %6 {strides = array<i32>} : memref<128x512xbf16, #tpu.memory_space<vmem>>, vector<128x512xbf16>,
    return
  }
  func.func @transform_0(%arg0: i32, %arg1: i32) -> (i32, i32) {
    %c0_i32 = arith.constant 0 : i32
    %c0_i32_0 = arith.constant 0 : i32
    return %arg0, %c0_i32 : i32, i32
  }
  func.func @transform_1(%arg0: i32, %arg1: i32) -> (i32, i32) {
    %c0_i32 = arith.constant 0 : i32
    %c0_i32_0 = arith.constant 0 : i32
    return %c0_i32, %arg1 : i32, i32
  }
  func.func @transform_2(%arg0: i32, %arg1: i32) -> (i32, i32) {
    %c0_i32 = arith.constant 0 : i32
    %c0_i32_0 = arith.constant 0 : i32
    return %c0_i32, %arg1 : i32, i32
  }
  func.func @transform_3(%arg0: i32, %arg1: i32) -> (i32, i32) {
    %c0_i32 = arith.constant 0 : i32
    return %arg0, %arg1 : i32, i32
  }
}

module attributes {stable_mosaic.version = 11 : i64} {
  func.func @_lstm_recurrent_kernel(%arg0: i32, %arg1: i32, %arg2: memref<16x8x512xbf16, #tpu.memory_space<vmem>>, %arg3: memref<128x512xbf16, #tpu.memory_space<vmem>>, %arg4: memref<16x8x128xbf16, #tpu.memory_space<vmem>>, %arg5: memref<8x128xf32, #tpu.memory_space<vmem>>, %arg6: memref<8x128xf32, #tpu.memory_space<vmem>>) attributes {dimension_semantics = [#tpu.dimension_semantics<parallel>, #tpu.dimension_semantics<arbitrary>], iteration_bounds = array<i64: 1, 1>, scalar_prefetch = 0 : i64, scratch_operands = 2 : i64, tpu.core_type = #tpu.core_type<tc>, window_params = [{transform_indices = @transform_0, window_bounds = array<i64: 16, 8, 512>}, {pipeline_mode = #tpu.pipeline_mode<synchronous>, transform_indices = @transform_1, window_bounds = array<i64: 128, 512>}, {transform_indices = @transform_2, window_bounds = array<i64: 16, 8, 128>}]} {
    %c0_i32 = arith.constant 0 : i32
    %0 = arith.cmpi eq, %arg1, %c0_i32 : i32
    %1 = arith.extui %0 : i1 to i32
    %c0_i32_0 = arith.constant 0 : i32
    %2 = arith.cmpi ne, %1, %c0_i32_0 : i32
    scf.if %2 {
      %cst_154 = arith.constant 0.000000e+00 : f32
      %568 = vector.broadcast %cst_154 : f32 to vector<8x128xf32>
      %c0_155 = arith.constant 0 : index
      %c0_156 = arith.constant 0 : index
      %569 = vector.load %arg5[%c0_155, %c0_156] : memref<8x128xf32, #tpu.memory_space<vmem>>, vector<8x128xf32>
      tpu.vector_store %arg5[%c0_155, %c0_156], %568 {strides = array<i32>} : memref<8x128xf32, #tpu.memory_space<vmem>>, vector<8x128xf32>,
      %cst_157 = arith.constant 0.000000e+00 : f32
      %570 = vector.broadcast %cst_157 : f32 to vector<8x128xf32>
      %c0_158 = arith.constant 0 : index
      %c0_159 = arith.constant 0 : index
      %571 = vector.load %arg6[%c0_158, %c0_159] : memref<8x128xf32, #tpu.memory_space<vmem>>, vector<8x128xf32>
      tpu.vector_store %arg6[%c0_158, %c0_159], %570 {strides = array<i32>} : memref<8x128xf32, #tpu.memory_space<vmem>>, vector<8x128xf32>,
    } else {
    }
    %c0 = arith.constant 0 : index
    %c0_1 = arith.constant 0 : index
    %3 = vector.load %arg5[%c0, %c0_1] : memref<8x128xf32, #tpu.memory_space<vmem>>, vector<8x128xf32>
    %c0_2 = arith.constant 0 : index
    %c0_3 = arith.constant 0 : index
    %4 = vector.load %arg6[%c0_2, %c0_3] : memref<8x128xf32, #tpu.memory_space<vmem>>, vector<8x128xf32>
    %c0_4 = arith.constant 0 : index
    %c0_5 = arith.constant 0 : index
    %5 = vector.load %arg3[%c0_4, %c0_5] : memref<128x512xbf16, #tpu.memory_space<vmem>>, vector<128x512xbf16>
    %c0_6 = arith.constant 0 : index
    %c0_7 = arith.constant 0 : index
    %c0_8 = arith.constant 0 : index
    %6 = vector.load %arg2[%c0_6, %c0_7, %c0_8] : memref<16x8x512xbf16, #tpu.memory_space<vmem>>, vector<1x8x512xbf16>
    %7 = vector.shape_cast %6 : vector<1x8x512xbf16> to vector<8x512xbf16>
    %8 = arith.extf %7 : vector<8x512xbf16> to vector<8x512xf32>
    %9 = arith.truncf %3 : vector<8x128xf32> to vector<8x128xbf16>
    %cst = arith.constant dense<0.000000e+00> : vector<8x512xf32>
    %10 = tpu.matmul %9, %5, %cst {dimension_numbers = #tpu.dot_dimension_numbers<[1], [0], [0], [1], [0, 0, 1, 1], [], []>} : vector<8x128xbf16>, vector<128x512xbf16>, vector<8x512xf32> -> vector<8x512xf32>
    %11 = arith.addf %8, %10 : vector<8x512xf32>
    %12 = vector.extract_strided_slice %11 {offsets = [0, 0], sizes = [8, 128], strides = [1, 1]} : vector<8x512xf32> to vector<8x128xf32>
    %13 = arith.negf %12 : vector<8x128xf32>
    %14 = math.exp %13 : vector<8x128xf32>
    %cst_9 = arith.constant 1.000000e+00 : f32
    %15 = vector.broadcast %cst_9 : f32 to vector<8x128xf32>
    %16 = arith.addf %15, %14 : vector<8x128xf32>
    %17 = arith.divf %15, %16 : vector<8x128xf32>
    %18 = vector.extract_strided_slice %11 {offsets = [0, 128], sizes = [8, 128], strides = [1, 1]} : vector<8x512xf32> to vector<8x128xf32>
    %19 = arith.negf %18 : vector<8x128xf32>
    %20 = math.exp %19 : vector<8x128xf32>
    %cst_10 = arith.constant 1.000000e+00 : f32
    %21 = vector.broadcast %cst_10 : f32 to vector<8x128xf32>
    %22 = arith.addf %21, %20 : vector<8x128xf32>
    %23 = arith.divf %21, %22 : vector<8x128xf32>
    %24 = vector.extract_strided_slice %11 {offsets = [0, 256], sizes = [8, 128], strides = [1, 1]} : vector<8x512xf32> to vector<8x128xf32>
    %25 = math.tanh %24 : vector<8x128xf32>
    %26 = vector.extract_strided_slice %11 {offsets = [0, 384], sizes = [8, 128], strides = [1, 1]} : vector<8x512xf32> to vector<8x128xf32>
    %27 = arith.negf %26 : vector<8x128xf32>
    %28 = math.exp %27 : vector<8x128xf32>
    %cst_11 = arith.constant 1.000000e+00 : f32
    %29 = vector.broadcast %cst_11 : f32 to vector<8x128xf32>
    %30 = arith.addf %29, %28 : vector<8x128xf32>
    %31 = arith.divf %29, %30 : vector<8x128xf32>
    %32 = arith.mulf %23, %4 : vector<8x128xf32>
    %33 = arith.mulf %17, %25 : vector<8x128xf32>
    %34 = arith.addf %32, %33 : vector<8x128xf32>
    %35 = math.tanh %34 : vector<8x128xf32>
    %36 = arith.mulf %31, %35 : vector<8x128xf32>
    %37 = arith.truncf %36 : vector<8x128xf32> to vector<8x128xbf16>
    %c0_12 = arith.constant 0 : index
    %c0_13 = arith.constant 0 : index
    %c0_14 = arith.constant 0 : index
    %38 = vector.load %arg4[%c0_12, %c0_13, %c0_14] : memref<16x8x128xbf16, #tpu.memory_space<vmem>>, vector<1x8x128xbf16>
    %39 = vector.shape_cast %38 : vector<1x8x128xbf16> to vector<8x128xbf16>
    %40 = vector.shape_cast %37 : vector<8x128xbf16> to vector<1x8x128xbf16>
    tpu.vector_store %arg4[%c0_12, %c0_13, %c0_14], %40 {strides = array<i32>} : memref<16x8x128xbf16, #tpu.memory_space<vmem>>, vector<1x8x128xbf16>,
    %c1 = arith.constant 1 : index
    %c0_15 = arith.constant 0 : index
    %c0_16 = arith.constant 0 : index
    %41 = vector.load %arg2[%c1, %c0_15, %c0_16] : memref<16x8x512xbf16, #tpu.memory_space<vmem>>, vector<1x8x512xbf16>
    %42 = vector.shape_cast %41 : vector<1x8x512xbf16> to vector<8x512xbf16>
    %43 = arith.extf %42 : vector<8x512xbf16> to vector<8x512xf32>
    %44 = arith.truncf %36 : vector<8x128xf32> to vector<8x128xbf16>
    %cst_17 = arith.constant dense<0.000000e+00> : vector<8x512xf32>
    %45 = tpu.matmul %44, %5, %cst_17 {dimension_numbers = #tpu.dot_dimension_numbers<[1], [0], [0], [1], [0, 0, 1, 1], [], []>} : vector<8x128xbf16>, vector<128x512xbf16>, vector<8x512xf32> -> vector<8x512xf32>
    %46 = arith.addf %43, %45 : vector<8x512xf32>
    %47 = vector.extract_strided_slice %46 {offsets = [0, 0], sizes = [8, 128], strides = [1, 1]} : vector<8x512xf32> to vector<8x128xf32>
    %48 = arith.negf %47 : vector<8x128xf32>
    %49 = math.exp %48 : vector<8x128xf32>
    %cst_18 = arith.constant 1.000000e+00 : f32
    %50 = vector.broadcast %cst_18 : f32 to vector<8x128xf32>
    %51 = arith.addf %50, %49 : vector<8x128xf32>
    %52 = arith.divf %50, %51 : vector<8x128xf32>
    %53 = vector.extract_strided_slice %46 {offsets = [0, 128], sizes = [8, 128], strides = [1, 1]} : vector<8x512xf32> to vector<8x128xf32>
    %54 = arith.negf %53 : vector<8x128xf32>
    %55 = math.exp %54 : vector<8x128xf32>
    %cst_19 = arith.constant 1.000000e+00 : f32
    %56 = vector.broadcast %cst_19 : f32 to vector<8x128xf32>
    %57 = arith.addf %56, %55 : vector<8x128xf32>
    %58 = arith.divf %56, %57 : vector<8x128xf32>
    %59 = vector.extract_strided_slice %46 {offsets = [0, 256], sizes = [8, 128], strides = [1, 1]} : vector<8x512xf32> to vector<8x128xf32>
    %60 = math.tanh %59 : vector<8x128xf32>
    %61 = vector.extract_strided_slice %46 {offsets = [0, 384], sizes = [8, 128], strides = [1, 1]} : vector<8x512xf32> to vector<8x128xf32>
    %62 = arith.negf %61 : vector<8x128xf32>
    %63 = math.exp %62 : vector<8x128xf32>
    %cst_20 = arith.constant 1.000000e+00 : f32
    %64 = vector.broadcast %cst_20 : f32 to vector<8x128xf32>
    %65 = arith.addf %64, %63 : vector<8x128xf32>
    %66 = arith.divf %64, %65 : vector<8x128xf32>
    %67 = arith.mulf %58, %34 : vector<8x128xf32>
    %68 = arith.mulf %52, %60 : vector<8x128xf32>
    %69 = arith.addf %67, %68 : vector<8x128xf32>
    %70 = math.tanh %69 : vector<8x128xf32>
    %71 = arith.mulf %66, %70 : vector<8x128xf32>
    %72 = arith.truncf %71 : vector<8x128xf32> to vector<8x128xbf16>
    %c1_21 = arith.constant 1 : index
    %c0_22 = arith.constant 0 : index
    %c0_23 = arith.constant 0 : index
    %73 = vector.load %arg4[%c1_21, %c0_22, %c0_23] : memref<16x8x128xbf16, #tpu.memory_space<vmem>>, vector<1x8x128xbf16>
    %74 = vector.shape_cast %73 : vector<1x8x128xbf16> to vector<8x128xbf16>
    %75 = vector.shape_cast %72 : vector<8x128xbf16> to vector<1x8x128xbf16>
    tpu.vector_store %arg4[%c1_21, %c0_22, %c0_23], %75 {strides = array<i32>} : memref<16x8x128xbf16, #tpu.memory_space<vmem>>, vector<1x8x128xbf16>,
    %c2 = arith.constant 2 : index
    %c0_24 = arith.constant 0 : index
    %c0_25 = arith.constant 0 : index
    %76 = vector.load %arg2[%c2, %c0_24, %c0_25] : memref<16x8x512xbf16, #tpu.memory_space<vmem>>, vector<1x8x512xbf16>
    %77 = vector.shape_cast %76 : vector<1x8x512xbf16> to vector<8x512xbf16>
    %78 = arith.extf %77 : vector<8x512xbf16> to vector<8x512xf32>
    %79 = arith.truncf %71 : vector<8x128xf32> to vector<8x128xbf16>
    %cst_26 = arith.constant dense<0.000000e+00> : vector<8x512xf32>
    %80 = tpu.matmul %79, %5, %cst_26 {dimension_numbers = #tpu.dot_dimension_numbers<[1], [0], [0], [1], [0, 0, 1, 1], [], []>} : vector<8x128xbf16>, vector<128x512xbf16>, vector<8x512xf32> -> vector<8x512xf32>
    %81 = arith.addf %78, %80 : vector<8x512xf32>
    %82 = vector.extract_strided_slice %81 {offsets = [0, 0], sizes = [8, 128], strides = [1, 1]} : vector<8x512xf32> to vector<8x128xf32>
    %83 = arith.negf %82 : vector<8x128xf32>
    %84 = math.exp %83 : vector<8x128xf32>
    %cst_27 = arith.constant 1.000000e+00 : f32
    %85 = vector.broadcast %cst_27 : f32 to vector<8x128xf32>
    %86 = arith.addf %85, %84 : vector<8x128xf32>
    %87 = arith.divf %85, %86 : vector<8x128xf32>
    %88 = vector.extract_strided_slice %81 {offsets = [0, 128], sizes = [8, 128], strides = [1, 1]} : vector<8x512xf32> to vector<8x128xf32>
    %89 = arith.negf %88 : vector<8x128xf32>
    %90 = math.exp %89 : vector<8x128xf32>
    %cst_28 = arith.constant 1.000000e+00 : f32
    %91 = vector.broadcast %cst_28 : f32 to vector<8x128xf32>
    %92 = arith.addf %91, %90 : vector<8x128xf32>
    %93 = arith.divf %91, %92 : vector<8x128xf32>
    %94 = vector.extract_strided_slice %81 {offsets = [0, 256], sizes = [8, 128], strides = [1, 1]} : vector<8x512xf32> to vector<8x128xf32>
    %95 = math.tanh %94 : vector<8x128xf32>
    %96 = vector.extract_strided_slice %81 {offsets = [0, 384], sizes = [8, 128], strides = [1, 1]} : vector<8x512xf32> to vector<8x128xf32>
    %97 = arith.negf %96 : vector<8x128xf32>
    %98 = math.exp %97 : vector<8x128xf32>
    %cst_29 = arith.constant 1.000000e+00 : f32
    %99 = vector.broadcast %cst_29 : f32 to vector<8x128xf32>
    %100 = arith.addf %99, %98 : vector<8x128xf32>
    %101 = arith.divf %99, %100 : vector<8x128xf32>
    %102 = arith.mulf %93, %69 : vector<8x128xf32>
    %103 = arith.mulf %87, %95 : vector<8x128xf32>
    %104 = arith.addf %102, %103 : vector<8x128xf32>
    %105 = math.tanh %104 : vector<8x128xf32>
    %106 = arith.mulf %101, %105 : vector<8x128xf32>
    %107 = arith.truncf %106 : vector<8x128xf32> to vector<8x128xbf16>
    %c2_30 = arith.constant 2 : index
    %c0_31 = arith.constant 0 : index
    %c0_32 = arith.constant 0 : index
    %108 = vector.load %arg4[%c2_30, %c0_31, %c0_32] : memref<16x8x128xbf16, #tpu.memory_space<vmem>>, vector<1x8x128xbf16>
    %109 = vector.shape_cast %108 : vector<1x8x128xbf16> to vector<8x128xbf16>
    %110 = vector.shape_cast %107 : vector<8x128xbf16> to vector<1x8x128xbf16>
    tpu.vector_store %arg4[%c2_30, %c0_31, %c0_32], %110 {strides = array<i32>} : memref<16x8x128xbf16, #tpu.memory_space<vmem>>, vector<1x8x128xbf16>,
    %c3 = arith.constant 3 : index
    %c0_33 = arith.constant 0 : index
    %c0_34 = arith.constant 0 : index
    %111 = vector.load %arg2[%c3, %c0_33, %c0_34] : memref<16x8x512xbf16, #tpu.memory_space<vmem>>, vector<1x8x512xbf16>
    %112 = vector.shape_cast %111 : vector<1x8x512xbf16> to vector<8x512xbf16>
    %113 = arith.extf %112 : vector<8x512xbf16> to vector<8x512xf32>
    %114 = arith.truncf %106 : vector<8x128xf32> to vector<8x128xbf16>
    %cst_35 = arith.constant dense<0.000000e+00> : vector<8x512xf32>
    %115 = tpu.matmul %114, %5, %cst_35 {dimension_numbers = #tpu.dot_dimension_numbers<[1], [0], [0], [1], [0, 0, 1, 1], [], []>} : vector<8x128xbf16>, vector<128x512xbf16>, vector<8x512xf32> -> vector<8x512xf32>
    %116 = arith.addf %113, %115 : vector<8x512xf32>
    %117 = vector.extract_strided_slice %116 {offsets = [0, 0], sizes = [8, 128], strides = [1, 1]} : vector<8x512xf32> to vector<8x128xf32>
    %118 = arith.negf %117 : vector<8x128xf32>
    %119 = math.exp %118 : vector<8x128xf32>
    %cst_36 = arith.constant 1.000000e+00 : f32
    %120 = vector.broadcast %cst_36 : f32 to vector<8x128xf32>
    %121 = arith.addf %120, %119 : vector<8x128xf32>
    %122 = arith.divf %120, %121 : vector<8x128xf32>
    %123 = vector.extract_strided_slice %116 {offsets = [0, 128], sizes = [8, 128], strides = [1, 1]} : vector<8x512xf32> to vector<8x128xf32>
    %124 = arith.negf %123 : vector<8x128xf32>
    %125 = math.exp %124 : vector<8x128xf32>
    %cst_37 = arith.constant 1.000000e+00 : f32
    %126 = vector.broadcast %cst_37 : f32 to vector<8x128xf32>
    %127 = arith.addf %126, %125 : vector<8x128xf32>
    %128 = arith.divf %126, %127 : vector<8x128xf32>
    %129 = vector.extract_strided_slice %116 {offsets = [0, 256], sizes = [8, 128], strides = [1, 1]} : vector<8x512xf32> to vector<8x128xf32>
    %130 = math.tanh %129 : vector<8x128xf32>
    %131 = vector.extract_strided_slice %116 {offsets = [0, 384], sizes = [8, 128], strides = [1, 1]} : vector<8x512xf32> to vector<8x128xf32>
    %132 = arith.negf %131 : vector<8x128xf32>
    %133 = math.exp %132 : vector<8x128xf32>
    %cst_38 = arith.constant 1.000000e+00 : f32
    %134 = vector.broadcast %cst_38 : f32 to vector<8x128xf32>
    %135 = arith.addf %134, %133 : vector<8x128xf32>
    %136 = arith.divf %134, %135 : vector<8x128xf32>
    %137 = arith.mulf %128, %104 : vector<8x128xf32>
    %138 = arith.mulf %122, %130 : vector<8x128xf32>
    %139 = arith.addf %137, %138 : vector<8x128xf32>
    %140 = math.tanh %139 : vector<8x128xf32>
    %141 = arith.mulf %136, %140 : vector<8x128xf32>
    %142 = arith.truncf %141 : vector<8x128xf32> to vector<8x128xbf16>
    %c3_39 = arith.constant 3 : index
    %c0_40 = arith.constant 0 : index
    %c0_41 = arith.constant 0 : index
    %143 = vector.load %arg4[%c3_39, %c0_40, %c0_41] : memref<16x8x128xbf16, #tpu.memory_space<vmem>>, vector<1x8x128xbf16>
    %144 = vector.shape_cast %143 : vector<1x8x128xbf16> to vector<8x128xbf16>
    %145 = vector.shape_cast %142 : vector<8x128xbf16> to vector<1x8x128xbf16>
    tpu.vector_store %arg4[%c3_39, %c0_40, %c0_41], %145 {strides = array<i32>} : memref<16x8x128xbf16, #tpu.memory_space<vmem>>, vector<1x8x128xbf16>,
    %c4 = arith.constant 4 : index
    %c0_42 = arith.constant 0 : index
    %c0_43 = arith.constant 0 : index
    %146 = vector.load %arg2[%c4, %c0_42, %c0_43] : memref<16x8x512xbf16, #tpu.memory_space<vmem>>, vector<1x8x512xbf16>
    %147 = vector.shape_cast %146 : vector<1x8x512xbf16> to vector<8x512xbf16>
    %148 = arith.extf %147 : vector<8x512xbf16> to vector<8x512xf32>
    %149 = arith.truncf %141 : vector<8x128xf32> to vector<8x128xbf16>
    %cst_44 = arith.constant dense<0.000000e+00> : vector<8x512xf32>
    %150 = tpu.matmul %149, %5, %cst_44 {dimension_numbers = #tpu.dot_dimension_numbers<[1], [0], [0], [1], [0, 0, 1, 1], [], []>} : vector<8x128xbf16>, vector<128x512xbf16>, vector<8x512xf32> -> vector<8x512xf32>
    %151 = arith.addf %148, %150 : vector<8x512xf32>
    %152 = vector.extract_strided_slice %151 {offsets = [0, 0], sizes = [8, 128], strides = [1, 1]} : vector<8x512xf32> to vector<8x128xf32>
    %153 = arith.negf %152 : vector<8x128xf32>
    %154 = math.exp %153 : vector<8x128xf32>
    %cst_45 = arith.constant 1.000000e+00 : f32
    %155 = vector.broadcast %cst_45 : f32 to vector<8x128xf32>
    %156 = arith.addf %155, %154 : vector<8x128xf32>
    %157 = arith.divf %155, %156 : vector<8x128xf32>
    %158 = vector.extract_strided_slice %151 {offsets = [0, 128], sizes = [8, 128], strides = [1, 1]} : vector<8x512xf32> to vector<8x128xf32>
    %159 = arith.negf %158 : vector<8x128xf32>
    %160 = math.exp %159 : vector<8x128xf32>
    %cst_46 = arith.constant 1.000000e+00 : f32
    %161 = vector.broadcast %cst_46 : f32 to vector<8x128xf32>
    %162 = arith.addf %161, %160 : vector<8x128xf32>
    %163 = arith.divf %161, %162 : vector<8x128xf32>
    %164 = vector.extract_strided_slice %151 {offsets = [0, 256], sizes = [8, 128], strides = [1, 1]} : vector<8x512xf32> to vector<8x128xf32>
    %165 = math.tanh %164 : vector<8x128xf32>
    %166 = vector.extract_strided_slice %151 {offsets = [0, 384], sizes = [8, 128], strides = [1, 1]} : vector<8x512xf32> to vector<8x128xf32>
    %167 = arith.negf %166 : vector<8x128xf32>
    %168 = math.exp %167 : vector<8x128xf32>
    %cst_47 = arith.constant 1.000000e+00 : f32
    %169 = vector.broadcast %cst_47 : f32 to vector<8x128xf32>
    %170 = arith.addf %169, %168 : vector<8x128xf32>
    %171 = arith.divf %169, %170 : vector<8x128xf32>
    %172 = arith.mulf %163, %139 : vector<8x128xf32>
    %173 = arith.mulf %157, %165 : vector<8x128xf32>
    %174 = arith.addf %172, %173 : vector<8x128xf32>
    %175 = math.tanh %174 : vector<8x128xf32>
    %176 = arith.mulf %171, %175 : vector<8x128xf32>
    %177 = arith.truncf %176 : vector<8x128xf32> to vector<8x128xbf16>
    %c4_48 = arith.constant 4 : index
    %c0_49 = arith.constant 0 : index
    %c0_50 = arith.constant 0 : index
    %178 = vector.load %arg4[%c4_48, %c0_49, %c0_50] : memref<16x8x128xbf16, #tpu.memory_space<vmem>>, vector<1x8x128xbf16>
    %179 = vector.shape_cast %178 : vector<1x8x128xbf16> to vector<8x128xbf16>
    %180 = vector.shape_cast %177 : vector<8x128xbf16> to vector<1x8x128xbf16>
    tpu.vector_store %arg4[%c4_48, %c0_49, %c0_50], %180 {strides = array<i32>} : memref<16x8x128xbf16, #tpu.memory_space<vmem>>, vector<1x8x128xbf16>,
    %c5 = arith.constant 5 : index
    %c0_51 = arith.constant 0 : index
    %c0_52 = arith.constant 0 : index
    %181 = vector.load %arg2[%c5, %c0_51, %c0_52] : memref<16x8x512xbf16, #tpu.memory_space<vmem>>, vector<1x8x512xbf16>
    %182 = vector.shape_cast %181 : vector<1x8x512xbf16> to vector<8x512xbf16>
    %183 = arith.extf %182 : vector<8x512xbf16> to vector<8x512xf32>
    %184 = arith.truncf %176 : vector<8x128xf32> to vector<8x128xbf16>
    %cst_53 = arith.constant dense<0.000000e+00> : vector<8x512xf32>
    %185 = tpu.matmul %184, %5, %cst_53 {dimension_numbers = #tpu.dot_dimension_numbers<[1], [0], [0], [1], [0, 0, 1, 1], [], []>} : vector<8x128xbf16>, vector<128x512xbf16>, vector<8x512xf32> -> vector<8x512xf32>
    %186 = arith.addf %183, %185 : vector<8x512xf32>
    %187 = vector.extract_strided_slice %186 {offsets = [0, 0], sizes = [8, 128], strides = [1, 1]} : vector<8x512xf32> to vector<8x128xf32>
    %188 = arith.negf %187 : vector<8x128xf32>
    %189 = math.exp %188 : vector<8x128xf32>
    %cst_54 = arith.constant 1.000000e+00 : f32
    %190 = vector.broadcast %cst_54 : f32 to vector<8x128xf32>
    %191 = arith.addf %190, %189 : vector<8x128xf32>
    %192 = arith.divf %190, %191 : vector<8x128xf32>
    %193 = vector.extract_strided_slice %186 {offsets = [0, 128], sizes = [8, 128], strides = [1, 1]} : vector<8x512xf32> to vector<8x128xf32>
    %194 = arith.negf %193 : vector<8x128xf32>
    %195 = math.exp %194 : vector<8x128xf32>
    %cst_55 = arith.constant 1.000000e+00 : f32
    %196 = vector.broadcast %cst_55 : f32 to vector<8x128xf32>
    %197 = arith.addf %196, %195 : vector<8x128xf32>
    %198 = arith.divf %196, %197 : vector<8x128xf32>
    %199 = vector.extract_strided_slice %186 {offsets = [0, 256], sizes = [8, 128], strides = [1, 1]} : vector<8x512xf32> to vector<8x128xf32>
    %200 = math.tanh %199 : vector<8x128xf32>
    %201 = vector.extract_strided_slice %186 {offsets = [0, 384], sizes = [8, 128], strides = [1, 1]} : vector<8x512xf32> to vector<8x128xf32>
    %202 = arith.negf %201 : vector<8x128xf32>
    %203 = math.exp %202 : vector<8x128xf32>
    %cst_56 = arith.constant 1.000000e+00 : f32
    %204 = vector.broadcast %cst_56 : f32 to vector<8x128xf32>
    %205 = arith.addf %204, %203 : vector<8x128xf32>
    %206 = arith.divf %204, %205 : vector<8x128xf32>
    %207 = arith.mulf %198, %174 : vector<8x128xf32>
    %208 = arith.mulf %192, %200 : vector<8x128xf32>
    %209 = arith.addf %207, %208 : vector<8x128xf32>
    %210 = math.tanh %209 : vector<8x128xf32>
    %211 = arith.mulf %206, %210 : vector<8x128xf32>
    %212 = arith.truncf %211 : vector<8x128xf32> to vector<8x128xbf16>
    %c5_57 = arith.constant 5 : index
    %c0_58 = arith.constant 0 : index
    %c0_59 = arith.constant 0 : index
    %213 = vector.load %arg4[%c5_57, %c0_58, %c0_59] : memref<16x8x128xbf16, #tpu.memory_space<vmem>>, vector<1x8x128xbf16>
    %214 = vector.shape_cast %213 : vector<1x8x128xbf16> to vector<8x128xbf16>
    %215 = vector.shape_cast %212 : vector<8x128xbf16> to vector<1x8x128xbf16>
    tpu.vector_store %arg4[%c5_57, %c0_58, %c0_59], %215 {strides = array<i32>} : memref<16x8x128xbf16, #tpu.memory_space<vmem>>, vector<1x8x128xbf16>,
    %c6 = arith.constant 6 : index
    %c0_60 = arith.constant 0 : index
    %c0_61 = arith.constant 0 : index
    %216 = vector.load %arg2[%c6, %c0_60, %c0_61] : memref<16x8x512xbf16, #tpu.memory_space<vmem>>, vector<1x8x512xbf16>
    %217 = vector.shape_cast %216 : vector<1x8x512xbf16> to vector<8x512xbf16>
    %218 = arith.extf %217 : vector<8x512xbf16> to vector<8x512xf32>
    %219 = arith.truncf %211 : vector<8x128xf32> to vector<8x128xbf16>
    %cst_62 = arith.constant dense<0.000000e+00> : vector<8x512xf32>
    %220 = tpu.matmul %219, %5, %cst_62 {dimension_numbers = #tpu.dot_dimension_numbers<[1], [0], [0], [1], [0, 0, 1, 1], [], []>} : vector<8x128xbf16>, vector<128x512xbf16>, vector<8x512xf32> -> vector<8x512xf32>
    %221 = arith.addf %218, %220 : vector<8x512xf32>
    %222 = vector.extract_strided_slice %221 {offsets = [0, 0], sizes = [8, 128], strides = [1, 1]} : vector<8x512xf32> to vector<8x128xf32>
    %223 = arith.negf %222 : vector<8x128xf32>
    %224 = math.exp %223 : vector<8x128xf32>
    %cst_63 = arith.constant 1.000000e+00 : f32
    %225 = vector.broadcast %cst_63 : f32 to vector<8x128xf32>
    %226 = arith.addf %225, %224 : vector<8x128xf32>
    %227 = arith.divf %225, %226 : vector<8x128xf32>
    %228 = vector.extract_strided_slice %221 {offsets = [0, 128], sizes = [8, 128], strides = [1, 1]} : vector<8x512xf32> to vector<8x128xf32>
    %229 = arith.negf %228 : vector<8x128xf32>
    %230 = math.exp %229 : vector<8x128xf32>
    %cst_64 = arith.constant 1.000000e+00 : f32
    %231 = vector.broadcast %cst_64 : f32 to vector<8x128xf32>
    %232 = arith.addf %231, %230 : vector<8x128xf32>
    %233 = arith.divf %231, %232 : vector<8x128xf32>
    %234 = vector.extract_strided_slice %221 {offsets = [0, 256], sizes = [8, 128], strides = [1, 1]} : vector<8x512xf32> to vector<8x128xf32>
    %235 = math.tanh %234 : vector<8x128xf32>
    %236 = vector.extract_strided_slice %221 {offsets = [0, 384], sizes = [8, 128], strides = [1, 1]} : vector<8x512xf32> to vector<8x128xf32>
    %237 = arith.negf %236 : vector<8x128xf32>
    %238 = math.exp %237 : vector<8x128xf32>
    %cst_65 = arith.constant 1.000000e+00 : f32
    %239 = vector.broadcast %cst_65 : f32 to vector<8x128xf32>
    %240 = arith.addf %239, %238 : vector<8x128xf32>
    %241 = arith.divf %239, %240 : vector<8x128xf32>
    %242 = arith.mulf %233, %209 : vector<8x128xf32>
    %243 = arith.mulf %227, %235 : vector<8x128xf32>
    %244 = arith.addf %242, %243 : vector<8x128xf32>
    %245 = math.tanh %244 : vector<8x128xf32>
    %246 = arith.mulf %241, %245 : vector<8x128xf32>
    %247 = arith.truncf %246 : vector<8x128xf32> to vector<8x128xbf16>
    %c6_66 = arith.constant 6 : index
    %c0_67 = arith.constant 0 : index
    %c0_68 = arith.constant 0 : index
    %248 = vector.load %arg4[%c6_66, %c0_67, %c0_68] : memref<16x8x128xbf16, #tpu.memory_space<vmem>>, vector<1x8x128xbf16>
    %249 = vector.shape_cast %248 : vector<1x8x128xbf16> to vector<8x128xbf16>
    %250 = vector.shape_cast %247 : vector<8x128xbf16> to vector<1x8x128xbf16>
    tpu.vector_store %arg4[%c6_66, %c0_67, %c0_68], %250 {strides = array<i32>} : memref<16x8x128xbf16, #tpu.memory_space<vmem>>, vector<1x8x128xbf16>,
    %c7 = arith.constant 7 : index
    %c0_69 = arith.constant 0 : index
    %c0_70 = arith.constant 0 : index
    %251 = vector.load %arg2[%c7, %c0_69, %c0_70] : memref<16x8x512xbf16, #tpu.memory_space<vmem>>, vector<1x8x512xbf16>
    %252 = vector.shape_cast %251 : vector<1x8x512xbf16> to vector<8x512xbf16>
    %253 = arith.extf %252 : vector<8x512xbf16> to vector<8x512xf32>
    %254 = arith.truncf %246 : vector<8x128xf32> to vector<8x128xbf16>
    %cst_71 = arith.constant dense<0.000000e+00> : vector<8x512xf32>
    %255 = tpu.matmul %254, %5, %cst_71 {dimension_numbers = #tpu.dot_dimension_numbers<[1], [0], [0], [1], [0, 0, 1, 1], [], []>} : vector<8x128xbf16>, vector<128x512xbf16>, vector<8x512xf32> -> vector<8x512xf32>
    %256 = arith.addf %253, %255 : vector<8x512xf32>
    %257 = vector.extract_strided_slice %256 {offsets = [0, 0], sizes = [8, 128], strides = [1, 1]} : vector<8x512xf32> to vector<8x128xf32>
    %258 = arith.negf %257 : vector<8x128xf32>
    %259 = math.exp %258 : vector<8x128xf32>
    %cst_72 = arith.constant 1.000000e+00 : f32
    %260 = vector.broadcast %cst_72 : f32 to vector<8x128xf32>
    %261 = arith.addf %260, %259 : vector<8x128xf32>
    %262 = arith.divf %260, %261 : vector<8x128xf32>
    %263 = vector.extract_strided_slice %256 {offsets = [0, 128], sizes = [8, 128], strides = [1, 1]} : vector<8x512xf32> to vector<8x128xf32>
    %264 = arith.negf %263 : vector<8x128xf32>
    %265 = math.exp %264 : vector<8x128xf32>
    %cst_73 = arith.constant 1.000000e+00 : f32
    %266 = vector.broadcast %cst_73 : f32 to vector<8x128xf32>
    %267 = arith.addf %266, %265 : vector<8x128xf32>
    %268 = arith.divf %266, %267 : vector<8x128xf32>
    %269 = vector.extract_strided_slice %256 {offsets = [0, 256], sizes = [8, 128], strides = [1, 1]} : vector<8x512xf32> to vector<8x128xf32>
    %270 = math.tanh %269 : vector<8x128xf32>
    %271 = vector.extract_strided_slice %256 {offsets = [0, 384], sizes = [8, 128], strides = [1, 1]} : vector<8x512xf32> to vector<8x128xf32>
    %272 = arith.negf %271 : vector<8x128xf32>
    %273 = math.exp %272 : vector<8x128xf32>
    %cst_74 = arith.constant 1.000000e+00 : f32
    %274 = vector.broadcast %cst_74 : f32 to vector<8x128xf32>
    %275 = arith.addf %274, %273 : vector<8x128xf32>
    %276 = arith.divf %274, %275 : vector<8x128xf32>
    %277 = arith.mulf %268, %244 : vector<8x128xf32>
    %278 = arith.mulf %262, %270 : vector<8x128xf32>
    %279 = arith.addf %277, %278 : vector<8x128xf32>
    %280 = math.tanh %279 : vector<8x128xf32>
    %281 = arith.mulf %276, %280 : vector<8x128xf32>
    %282 = arith.truncf %281 : vector<8x128xf32> to vector<8x128xbf16>
    %c7_75 = arith.constant 7 : index
    %c0_76 = arith.constant 0 : index
    %c0_77 = arith.constant 0 : index
    %283 = vector.load %arg4[%c7_75, %c0_76, %c0_77] : memref<16x8x128xbf16, #tpu.memory_space<vmem>>, vector<1x8x128xbf16>
    %284 = vector.shape_cast %283 : vector<1x8x128xbf16> to vector<8x128xbf16>
    %285 = vector.shape_cast %282 : vector<8x128xbf16> to vector<1x8x128xbf16>
    tpu.vector_store %arg4[%c7_75, %c0_76, %c0_77], %285 {strides = array<i32>} : memref<16x8x128xbf16, #tpu.memory_space<vmem>>, vector<1x8x128xbf16>,
    %c8 = arith.constant 8 : index
    %c0_78 = arith.constant 0 : index
    %c0_79 = arith.constant 0 : index
    %286 = vector.load %arg2[%c8, %c0_78, %c0_79] : memref<16x8x512xbf16, #tpu.memory_space<vmem>>, vector<1x8x512xbf16>
    %287 = vector.shape_cast %286 : vector<1x8x512xbf16> to vector<8x512xbf16>
    %288 = arith.extf %287 : vector<8x512xbf16> to vector<8x512xf32>
    %289 = arith.truncf %281 : vector<8x128xf32> to vector<8x128xbf16>
    %cst_80 = arith.constant dense<0.000000e+00> : vector<8x512xf32>
    %290 = tpu.matmul %289, %5, %cst_80 {dimension_numbers = #tpu.dot_dimension_numbers<[1], [0], [0], [1], [0, 0, 1, 1], [], []>} : vector<8x128xbf16>, vector<128x512xbf16>, vector<8x512xf32> -> vector<8x512xf32>
    %291 = arith.addf %288, %290 : vector<8x512xf32>
    %292 = vector.extract_strided_slice %291 {offsets = [0, 0], sizes = [8, 128], strides = [1, 1]} : vector<8x512xf32> to vector<8x128xf32>
    %293 = arith.negf %292 : vector<8x128xf32>
    %294 = math.exp %293 : vector<8x128xf32>
    %cst_81 = arith.constant 1.000000e+00 : f32
    %295 = vector.broadcast %cst_81 : f32 to vector<8x128xf32>
    %296 = arith.addf %295, %294 : vector<8x128xf32>
    %297 = arith.divf %295, %296 : vector<8x128xf32>
    %298 = vector.extract_strided_slice %291 {offsets = [0, 128], sizes = [8, 128], strides = [1, 1]} : vector<8x512xf32> to vector<8x128xf32>
    %299 = arith.negf %298 : vector<8x128xf32>
    %300 = math.exp %299 : vector<8x128xf32>
    %cst_82 = arith.constant 1.000000e+00 : f32
    %301 = vector.broadcast %cst_82 : f32 to vector<8x128xf32>
    %302 = arith.addf %301, %300 : vector<8x128xf32>
    %303 = arith.divf %301, %302 : vector<8x128xf32>
    %304 = vector.extract_strided_slice %291 {offsets = [0, 256], sizes = [8, 128], strides = [1, 1]} : vector<8x512xf32> to vector<8x128xf32>
    %305 = math.tanh %304 : vector<8x128xf32>
    %306 = vector.extract_strided_slice %291 {offsets = [0, 384], sizes = [8, 128], strides = [1, 1]} : vector<8x512xf32> to vector<8x128xf32>
    %307 = arith.negf %306 : vector<8x128xf32>
    %308 = math.exp %307 : vector<8x128xf32>
    %cst_83 = arith.constant 1.000000e+00 : f32
    %309 = vector.broadcast %cst_83 : f32 to vector<8x128xf32>
    %310 = arith.addf %309, %308 : vector<8x128xf32>
    %311 = arith.divf %309, %310 : vector<8x128xf32>
    %312 = arith.mulf %303, %279 : vector<8x128xf32>
    %313 = arith.mulf %297, %305 : vector<8x128xf32>
    %314 = arith.addf %312, %313 : vector<8x128xf32>
    %315 = math.tanh %314 : vector<8x128xf32>
    %316 = arith.mulf %311, %315 : vector<8x128xf32>
    %317 = arith.truncf %316 : vector<8x128xf32> to vector<8x128xbf16>
    %c8_84 = arith.constant 8 : index
    %c0_85 = arith.constant 0 : index
    %c0_86 = arith.constant 0 : index
    %318 = vector.load %arg4[%c8_84, %c0_85, %c0_86] : memref<16x8x128xbf16, #tpu.memory_space<vmem>>, vector<1x8x128xbf16>
    %319 = vector.shape_cast %318 : vector<1x8x128xbf16> to vector<8x128xbf16>
    %320 = vector.shape_cast %317 : vector<8x128xbf16> to vector<1x8x128xbf16>
    tpu.vector_store %arg4[%c8_84, %c0_85, %c0_86], %320 {strides = array<i32>} : memref<16x8x128xbf16, #tpu.memory_space<vmem>>, vector<1x8x128xbf16>,
    %c9 = arith.constant 9 : index
    %c0_87 = arith.constant 0 : index
    %c0_88 = arith.constant 0 : index
    %321 = vector.load %arg2[%c9, %c0_87, %c0_88] : memref<16x8x512xbf16, #tpu.memory_space<vmem>>, vector<1x8x512xbf16>
    %322 = vector.shape_cast %321 : vector<1x8x512xbf16> to vector<8x512xbf16>
    %323 = arith.extf %322 : vector<8x512xbf16> to vector<8x512xf32>
    %324 = arith.truncf %316 : vector<8x128xf32> to vector<8x128xbf16>
    %cst_89 = arith.constant dense<0.000000e+00> : vector<8x512xf32>
    %325 = tpu.matmul %324, %5, %cst_89 {dimension_numbers = #tpu.dot_dimension_numbers<[1], [0], [0], [1], [0, 0, 1, 1], [], []>} : vector<8x128xbf16>, vector<128x512xbf16>, vector<8x512xf32> -> vector<8x512xf32>
    %326 = arith.addf %323, %325 : vector<8x512xf32>
    %327 = vector.extract_strided_slice %326 {offsets = [0, 0], sizes = [8, 128], strides = [1, 1]} : vector<8x512xf32> to vector<8x128xf32>
    %328 = arith.negf %327 : vector<8x128xf32>
    %329 = math.exp %328 : vector<8x128xf32>
    %cst_90 = arith.constant 1.000000e+00 : f32
    %330 = vector.broadcast %cst_90 : f32 to vector<8x128xf32>
    %331 = arith.addf %330, %329 : vector<8x128xf32>
    %332 = arith.divf %330, %331 : vector<8x128xf32>
    %333 = vector.extract_strided_slice %326 {offsets = [0, 128], sizes = [8, 128], strides = [1, 1]} : vector<8x512xf32> to vector<8x128xf32>
    %334 = arith.negf %333 : vector<8x128xf32>
    %335 = math.exp %334 : vector<8x128xf32>
    %cst_91 = arith.constant 1.000000e+00 : f32
    %336 = vector.broadcast %cst_91 : f32 to vector<8x128xf32>
    %337 = arith.addf %336, %335 : vector<8x128xf32>
    %338 = arith.divf %336, %337 : vector<8x128xf32>
    %339 = vector.extract_strided_slice %326 {offsets = [0, 256], sizes = [8, 128], strides = [1, 1]} : vector<8x512xf32> to vector<8x128xf32>
    %340 = math.tanh %339 : vector<8x128xf32>
    %341 = vector.extract_strided_slice %326 {offsets = [0, 384], sizes = [8, 128], strides = [1, 1]} : vector<8x512xf32> to vector<8x128xf32>
    %342 = arith.negf %341 : vector<8x128xf32>
    %343 = math.exp %342 : vector<8x128xf32>
    %cst_92 = arith.constant 1.000000e+00 : f32
    %344 = vector.broadcast %cst_92 : f32 to vector<8x128xf32>
    %345 = arith.addf %344, %343 : vector<8x128xf32>
    %346 = arith.divf %344, %345 : vector<8x128xf32>
    %347 = arith.mulf %338, %314 : vector<8x128xf32>
    %348 = arith.mulf %332, %340 : vector<8x128xf32>
    %349 = arith.addf %347, %348 : vector<8x128xf32>
    %350 = math.tanh %349 : vector<8x128xf32>
    %351 = arith.mulf %346, %350 : vector<8x128xf32>
    %352 = arith.truncf %351 : vector<8x128xf32> to vector<8x128xbf16>
    %c9_93 = arith.constant 9 : index
    %c0_94 = arith.constant 0 : index
    %c0_95 = arith.constant 0 : index
    %353 = vector.load %arg4[%c9_93, %c0_94, %c0_95] : memref<16x8x128xbf16, #tpu.memory_space<vmem>>, vector<1x8x128xbf16>
    %354 = vector.shape_cast %353 : vector<1x8x128xbf16> to vector<8x128xbf16>
    %355 = vector.shape_cast %352 : vector<8x128xbf16> to vector<1x8x128xbf16>
    tpu.vector_store %arg4[%c9_93, %c0_94, %c0_95], %355 {strides = array<i32>} : memref<16x8x128xbf16, #tpu.memory_space<vmem>>, vector<1x8x128xbf16>,
    %c10 = arith.constant 10 : index
    %c0_96 = arith.constant 0 : index
    %c0_97 = arith.constant 0 : index
    %356 = vector.load %arg2[%c10, %c0_96, %c0_97] : memref<16x8x512xbf16, #tpu.memory_space<vmem>>, vector<1x8x512xbf16>
    %357 = vector.shape_cast %356 : vector<1x8x512xbf16> to vector<8x512xbf16>
    %358 = arith.extf %357 : vector<8x512xbf16> to vector<8x512xf32>
    %359 = arith.truncf %351 : vector<8x128xf32> to vector<8x128xbf16>
    %cst_98 = arith.constant dense<0.000000e+00> : vector<8x512xf32>
    %360 = tpu.matmul %359, %5, %cst_98 {dimension_numbers = #tpu.dot_dimension_numbers<[1], [0], [0], [1], [0, 0, 1, 1], [], []>} : vector<8x128xbf16>, vector<128x512xbf16>, vector<8x512xf32> -> vector<8x512xf32>
    %361 = arith.addf %358, %360 : vector<8x512xf32>
    %362 = vector.extract_strided_slice %361 {offsets = [0, 0], sizes = [8, 128], strides = [1, 1]} : vector<8x512xf32> to vector<8x128xf32>
    %363 = arith.negf %362 : vector<8x128xf32>
    %364 = math.exp %363 : vector<8x128xf32>
    %cst_99 = arith.constant 1.000000e+00 : f32
    %365 = vector.broadcast %cst_99 : f32 to vector<8x128xf32>
    %366 = arith.addf %365, %364 : vector<8x128xf32>
    %367 = arith.divf %365, %366 : vector<8x128xf32>
    %368 = vector.extract_strided_slice %361 {offsets = [0, 128], sizes = [8, 128], strides = [1, 1]} : vector<8x512xf32> to vector<8x128xf32>
    %369 = arith.negf %368 : vector<8x128xf32>
    %370 = math.exp %369 : vector<8x128xf32>
    %cst_100 = arith.constant 1.000000e+00 : f32
    %371 = vector.broadcast %cst_100 : f32 to vector<8x128xf32>
    %372 = arith.addf %371, %370 : vector<8x128xf32>
    %373 = arith.divf %371, %372 : vector<8x128xf32>
    %374 = vector.extract_strided_slice %361 {offsets = [0, 256], sizes = [8, 128], strides = [1, 1]} : vector<8x512xf32> to vector<8x128xf32>
    %375 = math.tanh %374 : vector<8x128xf32>
    %376 = vector.extract_strided_slice %361 {offsets = [0, 384], sizes = [8, 128], strides = [1, 1]} : vector<8x512xf32> to vector<8x128xf32>
    %377 = arith.negf %376 : vector<8x128xf32>
    %378 = math.exp %377 : vector<8x128xf32>
    %cst_101 = arith.constant 1.000000e+00 : f32
    %379 = vector.broadcast %cst_101 : f32 to vector<8x128xf32>
    %380 = arith.addf %379, %378 : vector<8x128xf32>
    %381 = arith.divf %379, %380 : vector<8x128xf32>
    %382 = arith.mulf %373, %349 : vector<8x128xf32>
    %383 = arith.mulf %367, %375 : vector<8x128xf32>
    %384 = arith.addf %382, %383 : vector<8x128xf32>
    %385 = math.tanh %384 : vector<8x128xf32>
    %386 = arith.mulf %381, %385 : vector<8x128xf32>
    %387 = arith.truncf %386 : vector<8x128xf32> to vector<8x128xbf16>
    %c10_102 = arith.constant 10 : index
    %c0_103 = arith.constant 0 : index
    %c0_104 = arith.constant 0 : index
    %388 = vector.load %arg4[%c10_102, %c0_103, %c0_104] : memref<16x8x128xbf16, #tpu.memory_space<vmem>>, vector<1x8x128xbf16>
    %389 = vector.shape_cast %388 : vector<1x8x128xbf16> to vector<8x128xbf16>
    %390 = vector.shape_cast %387 : vector<8x128xbf16> to vector<1x8x128xbf16>
    tpu.vector_store %arg4[%c10_102, %c0_103, %c0_104], %390 {strides = array<i32>} : memref<16x8x128xbf16, #tpu.memory_space<vmem>>, vector<1x8x128xbf16>,
    %c11 = arith.constant 11 : index
    %c0_105 = arith.constant 0 : index
    %c0_106 = arith.constant 0 : index
    %391 = vector.load %arg2[%c11, %c0_105, %c0_106] : memref<16x8x512xbf16, #tpu.memory_space<vmem>>, vector<1x8x512xbf16>
    %392 = vector.shape_cast %391 : vector<1x8x512xbf16> to vector<8x512xbf16>
    %393 = arith.extf %392 : vector<8x512xbf16> to vector<8x512xf32>
    %394 = arith.truncf %386 : vector<8x128xf32> to vector<8x128xbf16>
    %cst_107 = arith.constant dense<0.000000e+00> : vector<8x512xf32>
    %395 = tpu.matmul %394, %5, %cst_107 {dimension_numbers = #tpu.dot_dimension_numbers<[1], [0], [0], [1], [0, 0, 1, 1], [], []>} : vector<8x128xbf16>, vector<128x512xbf16>, vector<8x512xf32> -> vector<8x512xf32>
    %396 = arith.addf %393, %395 : vector<8x512xf32>
    %397 = vector.extract_strided_slice %396 {offsets = [0, 0], sizes = [8, 128], strides = [1, 1]} : vector<8x512xf32> to vector<8x128xf32>
    %398 = arith.negf %397 : vector<8x128xf32>
    %399 = math.exp %398 : vector<8x128xf32>
    %cst_108 = arith.constant 1.000000e+00 : f32
    %400 = vector.broadcast %cst_108 : f32 to vector<8x128xf32>
    %401 = arith.addf %400, %399 : vector<8x128xf32>
    %402 = arith.divf %400, %401 : vector<8x128xf32>
    %403 = vector.extract_strided_slice %396 {offsets = [0, 128], sizes = [8, 128], strides = [1, 1]} : vector<8x512xf32> to vector<8x128xf32>
    %404 = arith.negf %403 : vector<8x128xf32>
    %405 = math.exp %404 : vector<8x128xf32>
    %cst_109 = arith.constant 1.000000e+00 : f32
    %406 = vector.broadcast %cst_109 : f32 to vector<8x128xf32>
    %407 = arith.addf %406, %405 : vector<8x128xf32>
    %408 = arith.divf %406, %407 : vector<8x128xf32>
    %409 = vector.extract_strided_slice %396 {offsets = [0, 256], sizes = [8, 128], strides = [1, 1]} : vector<8x512xf32> to vector<8x128xf32>
    %410 = math.tanh %409 : vector<8x128xf32>
    %411 = vector.extract_strided_slice %396 {offsets = [0, 384], sizes = [8, 128], strides = [1, 1]} : vector<8x512xf32> to vector<8x128xf32>
    %412 = arith.negf %411 : vector<8x128xf32>
    %413 = math.exp %412 : vector<8x128xf32>
    %cst_110 = arith.constant 1.000000e+00 : f32
    %414 = vector.broadcast %cst_110 : f32 to vector<8x128xf32>
    %415 = arith.addf %414, %413 : vector<8x128xf32>
    %416 = arith.divf %414, %415 : vector<8x128xf32>
    %417 = arith.mulf %408, %384 : vector<8x128xf32>
    %418 = arith.mulf %402, %410 : vector<8x128xf32>
    %419 = arith.addf %417, %418 : vector<8x128xf32>
    %420 = math.tanh %419 : vector<8x128xf32>
    %421 = arith.mulf %416, %420 : vector<8x128xf32>
    %422 = arith.truncf %421 : vector<8x128xf32> to vector<8x128xbf16>
    %c11_111 = arith.constant 11 : index
    %c0_112 = arith.constant 0 : index
    %c0_113 = arith.constant 0 : index
    %423 = vector.load %arg4[%c11_111, %c0_112, %c0_113] : memref<16x8x128xbf16, #tpu.memory_space<vmem>>, vector<1x8x128xbf16>
    %424 = vector.shape_cast %423 : vector<1x8x128xbf16> to vector<8x128xbf16>
    %425 = vector.shape_cast %422 : vector<8x128xbf16> to vector<1x8x128xbf16>
    tpu.vector_store %arg4[%c11_111, %c0_112, %c0_113], %425 {strides = array<i32>} : memref<16x8x128xbf16, #tpu.memory_space<vmem>>, vector<1x8x128xbf16>,
    %c12 = arith.constant 12 : index
    %c0_114 = arith.constant 0 : index
    %c0_115 = arith.constant 0 : index
    %426 = vector.load %arg2[%c12, %c0_114, %c0_115] : memref<16x8x512xbf16, #tpu.memory_space<vmem>>, vector<1x8x512xbf16>
    %427 = vector.shape_cast %426 : vector<1x8x512xbf16> to vector<8x512xbf16>
    %428 = arith.extf %427 : vector<8x512xbf16> to vector<8x512xf32>
    %429 = arith.truncf %421 : vector<8x128xf32> to vector<8x128xbf16>
    %cst_116 = arith.constant dense<0.000000e+00> : vector<8x512xf32>
    %430 = tpu.matmul %429, %5, %cst_116 {dimension_numbers = #tpu.dot_dimension_numbers<[1], [0], [0], [1], [0, 0, 1, 1], [], []>} : vector<8x128xbf16>, vector<128x512xbf16>, vector<8x512xf32> -> vector<8x512xf32>
    %431 = arith.addf %428, %430 : vector<8x512xf32>
    %432 = vector.extract_strided_slice %431 {offsets = [0, 0], sizes = [8, 128], strides = [1, 1]} : vector<8x512xf32> to vector<8x128xf32>
    %433 = arith.negf %432 : vector<8x128xf32>
    %434 = math.exp %433 : vector<8x128xf32>
    %cst_117 = arith.constant 1.000000e+00 : f32
    %435 = vector.broadcast %cst_117 : f32 to vector<8x128xf32>
    %436 = arith.addf %435, %434 : vector<8x128xf32>
    %437 = arith.divf %435, %436 : vector<8x128xf32>
    %438 = vector.extract_strided_slice %431 {offsets = [0, 128], sizes = [8, 128], strides = [1, 1]} : vector<8x512xf32> to vector<8x128xf32>
    %439 = arith.negf %438 : vector<8x128xf32>
    %440 = math.exp %439 : vector<8x128xf32>
    %cst_118 = arith.constant 1.000000e+00 : f32
    %441 = vector.broadcast %cst_118 : f32 to vector<8x128xf32>
    %442 = arith.addf %441, %440 : vector<8x128xf32>
    %443 = arith.divf %441, %442 : vector<8x128xf32>
    %444 = vector.extract_strided_slice %431 {offsets = [0, 256], sizes = [8, 128], strides = [1, 1]} : vector<8x512xf32> to vector<8x128xf32>
    %445 = math.tanh %444 : vector<8x128xf32>
    %446 = vector.extract_strided_slice %431 {offsets = [0, 384], sizes = [8, 128], strides = [1, 1]} : vector<8x512xf32> to vector<8x128xf32>
    %447 = arith.negf %446 : vector<8x128xf32>
    %448 = math.exp %447 : vector<8x128xf32>
    %cst_119 = arith.constant 1.000000e+00 : f32
    %449 = vector.broadcast %cst_119 : f32 to vector<8x128xf32>
    %450 = arith.addf %449, %448 : vector<8x128xf32>
    %451 = arith.divf %449, %450 : vector<8x128xf32>
    %452 = arith.mulf %443, %419 : vector<8x128xf32>
    %453 = arith.mulf %437, %445 : vector<8x128xf32>
    %454 = arith.addf %452, %453 : vector<8x128xf32>
    %455 = math.tanh %454 : vector<8x128xf32>
    %456 = arith.mulf %451, %455 : vector<8x128xf32>
    %457 = arith.truncf %456 : vector<8x128xf32> to vector<8x128xbf16>
    %c12_120 = arith.constant 12 : index
    %c0_121 = arith.constant 0 : index
    %c0_122 = arith.constant 0 : index
    %458 = vector.load %arg4[%c12_120, %c0_121, %c0_122] : memref<16x8x128xbf16, #tpu.memory_space<vmem>>, vector<1x8x128xbf16>
    %459 = vector.shape_cast %458 : vector<1x8x128xbf16> to vector<8x128xbf16>
    %460 = vector.shape_cast %457 : vector<8x128xbf16> to vector<1x8x128xbf16>
    tpu.vector_store %arg4[%c12_120, %c0_121, %c0_122], %460 {strides = array<i32>} : memref<16x8x128xbf16, #tpu.memory_space<vmem>>, vector<1x8x128xbf16>,
    %c13 = arith.constant 13 : index
    %c0_123 = arith.constant 0 : index
    %c0_124 = arith.constant 0 : index
    %461 = vector.load %arg2[%c13, %c0_123, %c0_124] : memref<16x8x512xbf16, #tpu.memory_space<vmem>>, vector<1x8x512xbf16>
    %462 = vector.shape_cast %461 : vector<1x8x512xbf16> to vector<8x512xbf16>
    %463 = arith.extf %462 : vector<8x512xbf16> to vector<8x512xf32>
    %464 = arith.truncf %456 : vector<8x128xf32> to vector<8x128xbf16>
    %cst_125 = arith.constant dense<0.000000e+00> : vector<8x512xf32>
    %465 = tpu.matmul %464, %5, %cst_125 {dimension_numbers = #tpu.dot_dimension_numbers<[1], [0], [0], [1], [0, 0, 1, 1], [], []>} : vector<8x128xbf16>, vector<128x512xbf16>, vector<8x512xf32> -> vector<8x512xf32>
    %466 = arith.addf %463, %465 : vector<8x512xf32>
    %467 = vector.extract_strided_slice %466 {offsets = [0, 0], sizes = [8, 128], strides = [1, 1]} : vector<8x512xf32> to vector<8x128xf32>
    %468 = arith.negf %467 : vector<8x128xf32>
    %469 = math.exp %468 : vector<8x128xf32>
    %cst_126 = arith.constant 1.000000e+00 : f32
    %470 = vector.broadcast %cst_126 : f32 to vector<8x128xf32>
    %471 = arith.addf %470, %469 : vector<8x128xf32>
    %472 = arith.divf %470, %471 : vector<8x128xf32>
    %473 = vector.extract_strided_slice %466 {offsets = [0, 128], sizes = [8, 128], strides = [1, 1]} : vector<8x512xf32> to vector<8x128xf32>
    %474 = arith.negf %473 : vector<8x128xf32>
    %475 = math.exp %474 : vector<8x128xf32>
    %cst_127 = arith.constant 1.000000e+00 : f32
    %476 = vector.broadcast %cst_127 : f32 to vector<8x128xf32>
    %477 = arith.addf %476, %475 : vector<8x128xf32>
    %478 = arith.divf %476, %477 : vector<8x128xf32>
    %479 = vector.extract_strided_slice %466 {offsets = [0, 256], sizes = [8, 128], strides = [1, 1]} : vector<8x512xf32> to vector<8x128xf32>
    %480 = math.tanh %479 : vector<8x128xf32>
    %481 = vector.extract_strided_slice %466 {offsets = [0, 384], sizes = [8, 128], strides = [1, 1]} : vector<8x512xf32> to vector<8x128xf32>
    %482 = arith.negf %481 : vector<8x128xf32>
    %483 = math.exp %482 : vector<8x128xf32>
    %cst_128 = arith.constant 1.000000e+00 : f32
    %484 = vector.broadcast %cst_128 : f32 to vector<8x128xf32>
    %485 = arith.addf %484, %483 : vector<8x128xf32>
    %486 = arith.divf %484, %485 : vector<8x128xf32>
    %487 = arith.mulf %478, %454 : vector<8x128xf32>
    %488 = arith.mulf %472, %480 : vector<8x128xf32>
    %489 = arith.addf %487, %488 : vector<8x128xf32>
    %490 = math.tanh %489 : vector<8x128xf32>
    %491 = arith.mulf %486, %490 : vector<8x128xf32>
    %492 = arith.truncf %491 : vector<8x128xf32> to vector<8x128xbf16>
    %c13_129 = arith.constant 13 : index
    %c0_130 = arith.constant 0 : index
    %c0_131 = arith.constant 0 : index
    %493 = vector.load %arg4[%c13_129, %c0_130, %c0_131] : memref<16x8x128xbf16, #tpu.memory_space<vmem>>, vector<1x8x128xbf16>
    %494 = vector.shape_cast %493 : vector<1x8x128xbf16> to vector<8x128xbf16>
    %495 = vector.shape_cast %492 : vector<8x128xbf16> to vector<1x8x128xbf16>
    tpu.vector_store %arg4[%c13_129, %c0_130, %c0_131], %495 {strides = array<i32>} : memref<16x8x128xbf16, #tpu.memory_space<vmem>>, vector<1x8x128xbf16>,
    %c14 = arith.constant 14 : index
    %c0_132 = arith.constant 0 : index
    %c0_133 = arith.constant 0 : index
    %496 = vector.load %arg2[%c14, %c0_132, %c0_133] : memref<16x8x512xbf16, #tpu.memory_space<vmem>>, vector<1x8x512xbf16>
    %497 = vector.shape_cast %496 : vector<1x8x512xbf16> to vector<8x512xbf16>
    %498 = arith.extf %497 : vector<8x512xbf16> to vector<8x512xf32>
    %499 = arith.truncf %491 : vector<8x128xf32> to vector<8x128xbf16>
    %cst_134 = arith.constant dense<0.000000e+00> : vector<8x512xf32>
    %500 = tpu.matmul %499, %5, %cst_134 {dimension_numbers = #tpu.dot_dimension_numbers<[1], [0], [0], [1], [0, 0, 1, 1], [], []>} : vector<8x128xbf16>, vector<128x512xbf16>, vector<8x512xf32> -> vector<8x512xf32>
    %501 = arith.addf %498, %500 : vector<8x512xf32>
    %502 = vector.extract_strided_slice %501 {offsets = [0, 0], sizes = [8, 128], strides = [1, 1]} : vector<8x512xf32> to vector<8x128xf32>
    %503 = arith.negf %502 : vector<8x128xf32>
    %504 = math.exp %503 : vector<8x128xf32>
    %cst_135 = arith.constant 1.000000e+00 : f32
    %505 = vector.broadcast %cst_135 : f32 to vector<8x128xf32>
    %506 = arith.addf %505, %504 : vector<8x128xf32>
    %507 = arith.divf %505, %506 : vector<8x128xf32>
    %508 = vector.extract_strided_slice %501 {offsets = [0, 128], sizes = [8, 128], strides = [1, 1]} : vector<8x512xf32> to vector<8x128xf32>
    %509 = arith.negf %508 : vector<8x128xf32>
    %510 = math.exp %509 : vector<8x128xf32>
    %cst_136 = arith.constant 1.000000e+00 : f32
    %511 = vector.broadcast %cst_136 : f32 to vector<8x128xf32>
    %512 = arith.addf %511, %510 : vector<8x128xf32>
    %513 = arith.divf %511, %512 : vector<8x128xf32>
    %514 = vector.extract_strided_slice %501 {offsets = [0, 256], sizes = [8, 128], strides = [1, 1]} : vector<8x512xf32> to vector<8x128xf32>
    %515 = math.tanh %514 : vector<8x128xf32>
    %516 = vector.extract_strided_slice %501 {offsets = [0, 384], sizes = [8, 128], strides = [1, 1]} : vector<8x512xf32> to vector<8x128xf32>
    %517 = arith.negf %516 : vector<8x128xf32>
    %518 = math.exp %517 : vector<8x128xf32>
    %cst_137 = arith.constant 1.000000e+00 : f32
    %519 = vector.broadcast %cst_137 : f32 to vector<8x128xf32>
    %520 = arith.addf %519, %518 : vector<8x128xf32>
    %521 = arith.divf %519, %520 : vector<8x128xf32>
    %522 = arith.mulf %513, %489 : vector<8x128xf32>
    %523 = arith.mulf %507, %515 : vector<8x128xf32>
    %524 = arith.addf %522, %523 : vector<8x128xf32>
    %525 = math.tanh %524 : vector<8x128xf32>
    %526 = arith.mulf %521, %525 : vector<8x128xf32>
    %527 = arith.truncf %526 : vector<8x128xf32> to vector<8x128xbf16>
    %c14_138 = arith.constant 14 : index
    %c0_139 = arith.constant 0 : index
    %c0_140 = arith.constant 0 : index
    %528 = vector.load %arg4[%c14_138, %c0_139, %c0_140] : memref<16x8x128xbf16, #tpu.memory_space<vmem>>, vector<1x8x128xbf16>
    %529 = vector.shape_cast %528 : vector<1x8x128xbf16> to vector<8x128xbf16>
    %530 = vector.shape_cast %527 : vector<8x128xbf16> to vector<1x8x128xbf16>
    tpu.vector_store %arg4[%c14_138, %c0_139, %c0_140], %530 {strides = array<i32>} : memref<16x8x128xbf16, #tpu.memory_space<vmem>>, vector<1x8x128xbf16>,
    %c15 = arith.constant 15 : index
    %c0_141 = arith.constant 0 : index
    %c0_142 = arith.constant 0 : index
    %531 = vector.load %arg2[%c15, %c0_141, %c0_142] : memref<16x8x512xbf16, #tpu.memory_space<vmem>>, vector<1x8x512xbf16>
    %532 = vector.shape_cast %531 : vector<1x8x512xbf16> to vector<8x512xbf16>
    %533 = arith.extf %532 : vector<8x512xbf16> to vector<8x512xf32>
    %534 = arith.truncf %526 : vector<8x128xf32> to vector<8x128xbf16>
    %cst_143 = arith.constant dense<0.000000e+00> : vector<8x512xf32>
    %535 = tpu.matmul %534, %5, %cst_143 {dimension_numbers = #tpu.dot_dimension_numbers<[1], [0], [0], [1], [0, 0, 1, 1], [], []>} : vector<8x128xbf16>, vector<128x512xbf16>, vector<8x512xf32> -> vector<8x512xf32>
    %536 = arith.addf %533, %535 : vector<8x512xf32>
    %537 = vector.extract_strided_slice %536 {offsets = [0, 0], sizes = [8, 128], strides = [1, 1]} : vector<8x512xf32> to vector<8x128xf32>
    %538 = arith.negf %537 : vector<8x128xf32>
    %539 = math.exp %538 : vector<8x128xf32>
    %cst_144 = arith.constant 1.000000e+00 : f32
    %540 = vector.broadcast %cst_144 : f32 to vector<8x128xf32>
    %541 = arith.addf %540, %539 : vector<8x128xf32>
    %542 = arith.divf %540, %541 : vector<8x128xf32>
    %543 = vector.extract_strided_slice %536 {offsets = [0, 128], sizes = [8, 128], strides = [1, 1]} : vector<8x512xf32> to vector<8x128xf32>
    %544 = arith.negf %543 : vector<8x128xf32>
    %545 = math.exp %544 : vector<8x128xf32>
    %cst_145 = arith.constant 1.000000e+00 : f32
    %546 = vector.broadcast %cst_145 : f32 to vector<8x128xf32>
    %547 = arith.addf %546, %545 : vector<8x128xf32>
    %548 = arith.divf %546, %547 : vector<8x128xf32>
    %549 = vector.extract_strided_slice %536 {offsets = [0, 256], sizes = [8, 128], strides = [1, 1]} : vector<8x512xf32> to vector<8x128xf32>
    %550 = math.tanh %549 : vector<8x128xf32>
    %551 = vector.extract_strided_slice %536 {offsets = [0, 384], sizes = [8, 128], strides = [1, 1]} : vector<8x512xf32> to vector<8x128xf32>
    %552 = arith.negf %551 : vector<8x128xf32>
    %553 = math.exp %552 : vector<8x128xf32>
    %cst_146 = arith.constant 1.000000e+00 : f32
    %554 = vector.broadcast %cst_146 : f32 to vector<8x128xf32>
    %555 = arith.addf %554, %553 : vector<8x128xf32>
    %556 = arith.divf %554, %555 : vector<8x128xf32>
    %557 = arith.mulf %548, %524 : vector<8x128xf32>
    %558 = arith.mulf %542, %550 : vector<8x128xf32>
    %559 = arith.addf %557, %558 : vector<8x128xf32>
    %560 = math.tanh %559 : vector<8x128xf32>
    %561 = arith.mulf %556, %560 : vector<8x128xf32>
    %562 = arith.truncf %561 : vector<8x128xf32> to vector<8x128xbf16>
    %c15_147 = arith.constant 15 : index
    %c0_148 = arith.constant 0 : index
    %c0_149 = arith.constant 0 : index
    %563 = vector.load %arg4[%c15_147, %c0_148, %c0_149] : memref<16x8x128xbf16, #tpu.memory_space<vmem>>, vector<1x8x128xbf16>
    %564 = vector.shape_cast %563 : vector<1x8x128xbf16> to vector<8x128xbf16>
    %565 = vector.shape_cast %562 : vector<8x128xbf16> to vector<1x8x128xbf16>
    tpu.vector_store %arg4[%c15_147, %c0_148, %c0_149], %565 {strides = array<i32>} : memref<16x8x128xbf16, #tpu.memory_space<vmem>>, vector<1x8x128xbf16>,
    %c0_150 = arith.constant 0 : index
    %c0_151 = arith.constant 0 : index
    %566 = vector.load %arg5[%c0_150, %c0_151] : memref<8x128xf32, #tpu.memory_space<vmem>>, vector<8x128xf32>
    tpu.vector_store %arg5[%c0_150, %c0_151], %561 {strides = array<i32>} : memref<8x128xf32, #tpu.memory_space<vmem>>, vector<8x128xf32>,
    %c0_152 = arith.constant 0 : index
    %c0_153 = arith.constant 0 : index
    %567 = vector.load %arg6[%c0_152, %c0_153] : memref<8x128xf32, #tpu.memory_space<vmem>>, vector<8x128xf32>
    tpu.vector_store %arg6[%c0_152, %c0_153], %559 {strides = array<i32>} : memref<8x128xf32, #tpu.memory_space<vmem>>, vector<8x128xf32>,
    return
  }
  func.func @transform_0(%arg0: i32, %arg1: i32) -> (i32, i32, i32) {
    %c0_i32 = arith.constant 0 : i32
    %c0_i32_0 = arith.constant 0 : i32
    return %arg1, %arg0, %c0_i32 : i32, i32, i32
  }
  func.func @transform_1(%arg0: i32, %arg1: i32) -> (i32, i32) {
    %c0_i32 = arith.constant 0 : i32
    %c0_i32_0 = arith.constant 0 : i32
    %c0_i32_1 = arith.constant 0 : i32
    return %c0_i32, %c0_i32_0 : i32, i32
  }
  func.func @transform_2(%arg0: i32, %arg1: i32) -> (i32, i32, i32) {
    %c0_i32 = arith.constant 0 : i32
    %c0_i32_0 = arith.constant 0 : i32
    return %arg1, %arg0, %c0_i32 : i32, i32, i32
  }
}

module attributes {stable_mosaic.version = 11 : i64} {
  func.func @_matmul_bias_kernel(%arg0: i32, %arg1: i32, %arg2: memref<128x128xbf16, #tpu.memory_space<vmem>>, %arg3: memref<128x256xbf16, #tpu.memory_space<vmem>>, %arg4: memref<1x256xf32, #tpu.memory_space<vmem>>, %arg5: memref<128x256xf32, #tpu.memory_space<vmem>>) attributes {dimension_semantics = [#tpu.dimension_semantics<parallel>, #tpu.dimension_semantics<parallel>], iteration_bounds = array<i64: 1, 1>, scalar_prefetch = 0 : i64, scratch_operands = 0 : i64, tpu.core_type = #tpu.core_type<tc>, window_params = [{transform_indices = @transform_0, window_bounds = array<i64: 128, 128>}, {transform_indices = @transform_1, window_bounds = array<i64: 128, 256>}, {transform_indices = @transform_2, window_bounds = array<i64: 1, 256>}, {transform_indices = @transform_3, window_bounds = array<i64: 128, 256>}]} {
    %c0 = arith.constant 0 : index
    %c0_0 = arith.constant 0 : index
    %0 = vector.load %arg2[%c0, %c0_0] : memref<128x128xbf16, #tpu.memory_space<vmem>>, vector<128x128xbf16>
    %c0_1 = arith.constant 0 : index
    %c0_2 = arith.constant 0 : index
    %1 = vector.load %arg3[%c0_1, %c0_2] : memref<128x256xbf16, #tpu.memory_space<vmem>>, vector<128x256xbf16>
    %cst = arith.constant dense<0.000000e+00> : vector<128x256xf32>
    %2 = tpu.matmul %0, %1, %cst {dimension_numbers = #tpu.dot_dimension_numbers<[1], [0], [0], [1], [0, 0, 1, 1], [], []>} : vector<128x128xbf16>, vector<128x256xbf16>, vector<128x256xf32> -> vector<128x256xf32>
    %c0_3 = arith.constant 0 : index
    %c0_4 = arith.constant 0 : index
    %3 = vector.load %arg4[%c0_3, %c0_4] : memref<1x256xf32, #tpu.memory_space<vmem>>, vector<1x256xf32>
    %4 = vector.broadcast %3 : vector<1x256xf32> to vector<128x256xf32>
    %5 = arith.addf %2, %4 : vector<128x256xf32>
    %c0_5 = arith.constant 0 : index
    %c0_6 = arith.constant 0 : index
    %6 = vector.load %arg5[%c0_5, %c0_6] : memref<128x256xf32, #tpu.memory_space<vmem>>, vector<128x256xf32>
    tpu.vector_store %arg5[%c0_5, %c0_6], %5 {strides = array<i32>} : memref<128x256xf32, #tpu.memory_space<vmem>>, vector<128x256xf32>,
    return
  }
  func.func @transform_0(%arg0: i32, %arg1: i32) -> (i32, i32) {
    %c0_i32 = arith.constant 0 : i32
    %c0_i32_0 = arith.constant 0 : i32
    return %arg0, %c0_i32 : i32, i32
  }
  func.func @transform_1(%arg0: i32, %arg1: i32) -> (i32, i32) {
    %c0_i32 = arith.constant 0 : i32
    %c0_i32_0 = arith.constant 0 : i32
    return %c0_i32, %arg1 : i32, i32
  }
  func.func @transform_2(%arg0: i32, %arg1: i32) -> (i32, i32) {
    %c0_i32 = arith.constant 0 : i32
    %c0_i32_0 = arith.constant 0 : i32
    return %c0_i32, %arg1 : i32, i32
  }
  func.func @transform_3(%arg0: i32, %arg1: i32) -> (i32, i32) {
    %c0_i32 = arith.constant 0 : i32
    return %arg0, %arg1 : i32, i32
  }
}

</mosaic_0001>

<llo_original>
// kernel: decoder_rnn_forward.5
$region0: #{decoder_rnn_forward.5}
  #allocation0 [shape = 'u32[]', space=smem, size = 0x4, offset = 0x4, fixed_abs, tag = 'smem constant byte address 0x4 - core index']
  #allocation1 [shape = 'u32[72,128]{1,0:T(1,128)}', space=vmem, size = 0x9000, scoped, tag = 'internal scratch']
  %s0 = inlined_call_operand.vmem [shape: bf16[128,128], index: 0, kind: input, shape index: {}]
  %s1 = inlined_call_operand.vmem [shape: bf16[128,256], index: 1, kind: input, shape index: {}]
  %s2 = inlined_call_operand.vmem [shape: f32[1,256], index: 2, kind: input, shape index: {}]
  %s3 = inlined_call_operand.vmem [shape: f32[128,256], index: 3, kind: output, shape index: {}]
  %s4 = sld [smem:[#allocation0]]
  $region22: #{decoder_rnn_forward.5} parent=0
    _
  %s6 = ssub.s32 1, %s4
  %s7 = scalar_select 0, %s6, %s4
  // Predicated region
  $region2: #{decoder_rnn_forward.5} parent=0 // pred_check
    _
  $region3: #{decoder_rnn_forward.5} parent=0 // pred_check_branch
    %9 = sbr.rel (0) target = $region5
  $region4: #{decoder_rnn_forward.5} parent=0 // pred_region
    _
  $region5: #{decoder_rnn_forward.5} parent=0 // pred_fallthru
    _
  // Predicated region
  $region6: #{decoder_rnn_forward.5} parent=0 // pred_check
    _
  $region7: #{decoder_rnn_forward.5} parent=0 // pred_check_branch
    %11 = sbr.rel (0) target = $region9
  $region8: #{decoder_rnn_forward.5} parent=0 // pred_region
    _
  $region9: #{decoder_rnn_forward.5} parent=0 // pred_fallthru
    _
  // Predicated region
  $region10: #{decoder_rnn_forward.5} parent=0 // pred_check
    _
  $region11: #{decoder_rnn_forward.5} parent=0 // pred_check_branch
    %13 = sbr.rel (0) target = $region13
  $region12: #{decoder_rnn_forward.5} parent=0 // pred_region
    _
  $region13: #{decoder_rnn_forward.5} parent=0 // pred_fallthru
    _
  %v14 = vld [vmem:[%s0] sm:$0xf]
  %v15 = vld [vmem:[%s0 + $0x4] sm:$0xf]
  %v16 = vld [vmem:[%s0 + $0x8] sm:$0xf]
  %v17 = vld [vmem:[%s0 + $0xc] sm:$0xf]
  %v18 = vld [vmem:[%s0 + $0x10] sm:$0xf]
  %v19 = vld [vmem:[%s0 + $0x14] sm:$0xf]
  %v20 = vld [vmem:[%s0 + $0x18] sm:$0xf]
  %v21 = vld [vmem:[%s0 + $0x1c] sm:$0xf]
  %v22 = vld [vmem:[%s0 + $0x20] sm:$0xf]
  %v23 = vld [vmem:[%s0 + $0x24] sm:$0xf]
  %v24 = vld [vmem:[%s0 + $0x28] sm:$0xf]
  %v25 = vld [vmem:[%s0 + $0x2c] sm:$0xf]
  %v26 = vld [vmem:[%s0 + $0x30] sm:$0xf]
  %v27 = vld [vmem:[%s0 + $0x34] sm:$0xf]
  %v28 = vld [vmem:[%s0 + $0x38] sm:$0xf]
  %v29 = vld [vmem:[%s0 + $0x3c] sm:$0xf]
  %v30 = vld [vmem:[%s1] sm:$0xff]
  %v31 = vld [vmem:[%s1 + $0x8] sm:$0xff]
  %v32 = vld [vmem:[%s1 + $0x10] sm:$0xff]
  %v33 = vld [vmem:[%s1 + $0x18] sm:$0xff]
  %v34 = vld [vmem:[%s1 + $0x20] sm:$0xff]
  %v35 = vld [vmem:[%s1 + $0x28] sm:$0xff]
  %v36 = vld [vmem:[%s1 + $0x30] sm:$0xff]
  %v37 = vld [vmem:[%s1 + $0x38] sm:$0xff]
  %v38 = vld [vmem:[%s1 + $0x40] sm:$0xff]
  %v39 = vld [vmem:[%s1 + $0x48] sm:$0xff]
  %v40 = vld [vmem:[%s1 + $0x50] sm:$0xff]
  %v41 = vld [vmem:[%s1 + $0x58] sm:$0xff]
  %v42 = vld [vmem:[%s1 + $0x60] sm:$0xff]
  %v43 = vld [vmem:[%s1 + $0x68] sm:$0xff]
  %v44 = vld [vmem:[%s1 + $0x70] sm:$0xff]
  %v45 = vld [vmem:[%s1 + $0x78] sm:$0xff]
  %v46 = vld [vmem:[%s2] sm:$0x3]
  %v48 = vperm.slane %v46, 0
  %v49 = vperm.slane %v46, 1
  %v68 = vunpack.c.l.b16 %v14
  %v69 = vunpack.c.l.b16 %v15
  %v70 = vunpack.c.l.b16 %v16
  %v71 = vunpack.c.l.b16 %v17
  %v72 = vunpack.c.l.b16 %v18
  %v73 = vunpack.c.l.b16 %v19
  %v74 = vunpack.c.l.b16 %v20
  %v75 = vunpack.c.l.b16 %v21
  %v76 = vunpack.c.l.b16 %v22
  %v77 = vunpack.c.l.b16 %v23
  %v78 = vunpack.c.l.b16 %v24
  %v79 = vunpack.c.l.b16 %v25
  %v80 = vunpack.c.l.b16 %v26
  %v81 = vunpack.c.l.b16 %v27
  %v82 = vunpack.c.l.b16 %v28
  %v83 = vunpack.c.l.b16 %v29
  %v84 = vpack.c.b16 %v69, %v68
  %v85 = vpack.c.b16 %v71, %v70
  %v86 = vpack.c.b16 %v73, %v72
  %v87 = vpack.c.b16 %v75, %v74
  %v88 = vpack.c.b16 %v77, %v76
  %v89 = vpack.c.b16 %v79, %v78
  %v90 = vpack.c.b16 %v81, %v80
  %v91 = vpack.c.b16 %v83, %v82
  %v116 = vunpack.c.l.b16 %v30
  %v117 = vunpack.c.h.b16 %v30
  %v118 = vunpack.c.l.b16 %v31
  %v119 = vunpack.c.h.b16 %v31
  %v120 = vunpack.c.l.b16 %v32
  %v121 = vunpack.c.h.b16 %v32
  %v122 = vunpack.c.l.b16 %v33
  %v123 = vunpack.c.h.b16 %v33
  %v124 = vunpack.c.l.b16 %v34
  %v125 = vunpack.c.h.b16 %v34
  %v126 = vunpack.c.l.b16 %v35
  %v127 = vunpack.c.h.b16 %v35
  %v128 = vunpack.c.l.b16 %v36
  %v129 = vunpack.c.h.b16 %v36
  %v130 = vunpack.c.l.b16 %v37
  %v131 = vunpack.c.h.b16 %v37
  %v132 = vunpack.c.l.b16 %v38
  %v133 = vunpack.c.h.b16 %v38
  %v134 = vunpack.c.l.b16 %v39
  %v135 = vunpack.c.h.b16 %v39
  %v136 = vunpack.c.l.b16 %v40
  %v137 = vunpack.c.h.b16 %v40
  %v138 = vunpack.c.l.b16 %v41
  %v139 = vunpack.c.h.b16 %v41
  %v140 = vunpack.c.l.b16 %v42
  %v141 = vunpack.c.h.b16 %v42
  %v142 = vunpack.c.l.b16 %v43
  %v143 = vunpack.c.h.b16 %v43
  %v144 = vunpack.c.l.b16 %v44
  %v145 = vunpack.c.h.b16 %v44
  %v146 = vunpack.c.l.b16 %v45
  %v147 = vunpack.c.h.b16 %v45
  %v148 = vpack.c.b16 %v118, %v116
  %v149 = vpack.c.b16 %v119, %v117
  %v150 = vpack.c.b16 %v122, %v120
  %v151 = vpack.c.b16 %v123, %v121
  %v152 = vpack.c.b16 %v126, %v124
  %v153 = vpack.c.b16 %v127, %v125
  %v154 = vpack.c.b16 %v130, %v128
  %v155 = vpack.c.b16 %v131, %v129
  %v156 = vpack.c.b16 %v134, %v132
  %v157 = vpack.c.b16 %v135, %v133
  %v158 = vpack.c.b16 %v138, %v136
  %v159 = vpack.c.b16 %v139, %v137
  %v160 = vpack.c.b16 %v142, %v140
  %v161 = vpack.c.b16 %v143, %v141
  %v162 = vpack.c.b16 %v146, %v144
  %v163 = vpack.c.b16 %v147, %v145
  %180 = vmatpush.bf16.msra.mxu0 %v162
  %181 = vmatpush.bf16.msra.mxu0 %v160
  %182 = vmatpush.bf16.msra.mxu0 %v158
  %183 = vmatpush.bf16.msra.mxu0 %v156
  %184 = vmatpush.bf16.msra.mxu0 %v154
  %185 = vmatpush.bf16.msra.mxu0 %v152
  %186 = vmatpush.bf16.msra.mxu0 %v150
  %187 = vmatpush.bf16.msra.mxu0 %v148
  %188 = vmatmul.bf16.gmra.mxu0 %v84
  %v189 = vpop.f32.mrf.mxu0
  %v190 = vadd.f32 %v48, %v189
  %v191 = vpop.f32.mrf.mxu0
  %v192 = vadd.f32 %v48, %v191
  %193 = vmatmul.bf16.gmra.mxu0 %v85
  %v194 = vpop.f32.mrf.mxu0
  %v195 = vadd.f32 %v48, %v194
  %v196 = vpop.f32.mrf.mxu0
  %v197 = vadd.f32 %v48, %v196
  %198 = vmatmul.bf16.gmra.mxu0 %v86
  %v199 = vpop.f32.mrf.mxu0
  %v200 = vadd.f32 %v48, %v199
  %v201 = vpop.f32.mrf.mxu0
  %v202 = vadd.f32 %v48, %v201
  %203 = vmatmul.bf16.gmra.mxu0 %v87
  %v204 = vpop.f32.mrf.mxu0
  %v205 = vadd.f32 %v48, %v204
  %v206 = vpop.f32.mrf.mxu0
  %v207 = vadd.f32 %v48, %v206
  %208 = vmatmul.bf16.gmra.mxu0 %v88
  %v209 = vpop.f32.mrf.mxu0
  %v210 = vadd.f32 %v48, %v209
  %v211 = vpop.f32.mrf.mxu0
  %v212 = vadd.f32 %v48, %v211
  %213 = vmatmul.bf16.gmra.mxu0 %v89
  %v214 = vpop.f32.mrf.mxu0
  %v215 = vadd.f32 %v48, %v214
  %v216 = vpop.f32.mrf.mxu0
  %v217 = vadd.f32 %v48, %v216
  %218 = vmatmul.bf16.gmra.mxu0 %v90
  %v219 = vpop.f32.mrf.mxu0
  %v220 = vadd.f32 %v48, %v219
  %v221 = vpop.f32.mrf.mxu0
  %v222 = vadd.f32 %v48, %v221
  %223 = vmatmul.bf16.gmra.mxu0 %v91
  %v224 = vpop.f32.mrf.mxu0
  %v225 = vadd.f32 %v48, %v224
  %v226 = vpop.f32.mrf.mxu0
  %v227 = vadd.f32 %v48, %v226
  %228 = vdwg.mxu0
  %229 = vmatpush.bf16.msra.mxu0 %v163
  %230 = vmatpush.bf16.msra.mxu0 %v161
  %231 = vmatpush.bf16.msra.mxu0 %v159
  %232 = vmatpush.bf16.msra.mxu0 %v157
  %233 = vmatpush.bf16.msra.mxu0 %v155
  %234 = vmatpush.bf16.msra.mxu0 %v153
  %235 = vmatpush.bf16.msra.mxu0 %v151
  %236 = vmatpush.bf16.msra.mxu0 %v149
  %237 = vmatmul.bf16.gmra.mxu0 %v84
  %v238 = vpop.f32.mrf.mxu0
  %v239 = vadd.f32 %v49, %v238
  %v240 = vpop.f32.mrf.mxu0
  %v241 = vadd.f32 %v49, %v240
  %242 = vmatmul.bf16.gmra.mxu0 %v85
  %v243 = vpop.f32.mrf.mxu0
  %v244 = vadd.f32 %v49, %v243
  %v245 = vpop.f32.mrf.mxu0
  %v246 = vadd.f32 %v49, %v245
  %247 = vmatmul.bf16.gmra.mxu0 %v86
  %v248 = vpop.f32.mrf.mxu0
  %v249 = vadd.f32 %v49, %v248
  %v250 = vpop.f32.mrf.mxu0
  %v251 = vadd.f32 %v49, %v250
  %252 = vmatmul.bf16.gmra.mxu0 %v87
  %v253 = vpop.f32.mrf.mxu0
  %v254 = vadd.f32 %v49, %v253
  %v255 = vpop.f32.mrf.mxu0
  %v256 = vadd.f32 %v49, %v255
  %257 = vmatmul.bf16.gmra.mxu0 %v88
  %v258 = vpop.f32.mrf.mxu0
  %v259 = vadd.f32 %v49, %v258
  %v260 = vpop.f32.mrf.mxu0
  %v261 = vadd.f32 %v49, %v260
  %262 = vmatmul.bf16.gmra.mxu0 %v89
  %v263 = vpop.f32.mrf.mxu0
  %v264 = vadd.f32 %v49, %v263
  %v265 = vpop.f32.mrf.mxu0
  %v266 = vadd.f32 %v49, %v265
  %267 = vmatmul.bf16.gmra.mxu0 %v90
  %v268 = vpop.f32.mrf.mxu0
  %v269 = vadd.f32 %v49, %v268
  %v270 = vpop.f32.mrf.mxu0
  %v271 = vadd.f32 %v49, %v270
  %272 = vmatmul.bf16.gmra.mxu0 %v91
  %v273 = vpop.f32.mrf.mxu0
  %v274 = vadd.f32 %v49, %v273
  %v275 = vpop.f32.mrf.mxu0
  %v276 = vadd.f32 %v49, %v275
  %277 = vdwg.mxu0
  %278 = vst [vmem:[%s3] sm:$0xff] %v190
  %279 = vst [vmem:[%s3 + $0x8] sm:$0xff] %v239
  %280 = vst [vmem:[%s3 + $0x10] sm:$0xff] %v192
  %281 = vst [vmem:[%s3 + $0x18] sm:$0xff] %v241
  %282 = vst [vmem:[%s3 + $0x20] sm:$0xff] %v195
  %283 = vst [vmem:[%s3 + $0x28] sm:$0xff] %v244
  %284 = vst [vmem:[%s3 + $0x30] sm:$0xff] %v197
  %285 = vst [vmem:[%s3 + $0x38] sm:$0xff] %v246
  %286 = vst [vmem:[%s3 + $0x40] sm:$0xff] %v200
  %287 = vst [vmem:[%s3 + $0x48] sm:$0xff] %v249
  %288 = vst [vmem:[%s3 + $0x50] sm:$0xff] %v202
  %289 = vst [vmem:[%s3 + $0x58] sm:$0xff] %v251
  %290 = vst [vmem:[%s3 + $0x60] sm:$0xff] %v205
  %291 = vst [vmem:[%s3 + $0x68] sm:$0xff] %v254
  %292 = vst [vmem:[%s3 + $0x70] sm:$0xff] %v207
  %293 = vst [vmem:[%s3 + $0x78] sm:$0xff] %v256
  %294 = vst [vmem:[%s3 + $0x80] sm:$0xff] %v210
  %295 = vst [vmem:[%s3 + $0x88] sm:$0xff] %v259
  %296 = vst [vmem:[%s3 + $0x90] sm:$0xff] %v212
  %297 = vst [vmem:[%s3 + $0x98] sm:$0xff] %v261
  %298 = vst [vmem:[%s3 + $0xa0] sm:$0xff] %v215
  %299 = vst [vmem:[%s3 + $0xa8] sm:$0xff] %v264
  %300 = vst [vmem:[%s3 + $0xb0] sm:$0xff] %v217
  %301 = vst [vmem:[%s3 + $0xb8] sm:$0xff] %v266
  %302 = vst [vmem:[%s3 + $0xc0] sm:$0xff] %v220
  %303 = vst [vmem:[%s3 + $0xc8] sm:$0xff] %v269
  %304 = vst [vmem:[%s3 + $0xd0] sm:$0xff] %v222
  %305 = vst [vmem:[%s3 + $0xd8] sm:$0xff] %v271
  %306 = vst [vmem:[%s3 + $0xe0] sm:$0xff] %v225
  %307 = vst [vmem:[%s3 + $0xe8] sm:$0xff] %v274
  %308 = vst [vmem:[%s3 + $0xf0] sm:$0xff] %v227
  %309 = vst [vmem:[%s3 + $0xf8] sm:$0xff] %v276
  // Predicated region
  $region14: #{decoder_rnn_forward.5} parent=0 // pred_check
    _
  $region15: #{decoder_rnn_forward.5} parent=0 // pred_check_branch
    %311 = sbr.rel (0) target = $region17
  $region16: #{decoder_rnn_forward.5} parent=0 // pred_region
    _
  $region17: #{decoder_rnn_forward.5} parent=0 // pred_fallthru
    _
  // Predicated region
  $region18: #{decoder_rnn_forward.5} parent=0 // pred_check
    _
  $region19: #{decoder_rnn_forward.5} parent=0 // pred_check_branch
    %313 = sbr.rel (0) target = $region21
  $region20: #{decoder_rnn_forward.5} parent=0 // pred_region
    _
  $region21: #{decoder_rnn_forward.5} parent=0 // pred_fallthru
    _

// kernel: decoder_rnn_forward.3
$region0: #{decoder_rnn_forward.3}
  #allocation0 [shape = 'u32[]', space=smem, size = 0x4, offset = 0x4, fixed_abs, tag = 'smem constant byte address 0x4 - core index']
  #allocation1 [shape = 'u32[72,128]{1,0:T(1,128)}', space=vmem, size = 0x9000, scoped, tag = 'internal scratch']
  %s0 = inlined_call_operand.vmem [shape: bf16[128,64], index: 0, kind: input, shape index: {}]
  %s1 = inlined_call_operand.vmem [shape: bf16[64,512], index: 1, kind: input, shape index: {}]
  %s2 = inlined_call_operand.vmem [shape: f32[1,512], index: 2, kind: input, shape index: {}]
  %s3 = inlined_call_operand.vmem [shape: bf16[128,512], index: 3, kind: output, shape index: {}]
  %s4 = sld [smem:[#allocation0]]
  $region22: #{decoder_rnn_forward.3} parent=0
    _
  %s6 = ssub.s32 1, %s4
  %s7 = scalar_select 0, %s6, %s4
  // Predicated region
  $region2: #{decoder_rnn_forward.3} parent=0 // pred_check
    _
  $region3: #{decoder_rnn_forward.3} parent=0 // pred_check_branch
    %9 = sbr.rel (0) target = $region5
  $region4: #{decoder_rnn_forward.3} parent=0 // pred_region
    _
  $region5: #{decoder_rnn_forward.3} parent=0 // pred_fallthru
    _
  // Predicated region
  $region6: #{decoder_rnn_forward.3} parent=0 // pred_check
    _
  $region7: #{decoder_rnn_forward.3} parent=0 // pred_check_branch
    %11 = sbr.rel (0) target = $region9
  $region8: #{decoder_rnn_forward.3} parent=0 // pred_region
    _
  $region9: #{decoder_rnn_forward.3} parent=0 // pred_fallthru
    _
  // Predicated region
  $region10: #{decoder_rnn_forward.3} parent=0 // pred_check
    _
  $region11: #{decoder_rnn_forward.3} parent=0 // pred_check_branch
    %13 = sbr.rel (0) target = $region13
  $region12: #{decoder_rnn_forward.3} parent=0 // pred_region
    _
  $region13: #{decoder_rnn_forward.3} parent=0 // pred_fallthru
    _
  %v15 = vld [vmem:[%s0] sm:$0xf]
  %v16 = vld [vmem:[%s0 + $0x4] sm:$0xf]
  %v17 = vld [vmem:[%s0 + $0x8] sm:$0xf]
  %v18 = vld [vmem:[%s0 + $0xc] sm:$0xf]
  %v19 = vld [vmem:[%s0 + $0x10] sm:$0xf]
  %v20 = vld [vmem:[%s0 + $0x14] sm:$0xf]
  %v21 = vld [vmem:[%s0 + $0x18] sm:$0xf]
  %v22 = vld [vmem:[%s0 + $0x1c] sm:$0xf]
  %v23 = vld [vmem:[%s0 + $0x20] sm:$0xf]
  %v24 = vld [vmem:[%s0 + $0x24] sm:$0xf]
  %v25 = vld [vmem:[%s0 + $0x28] sm:$0xf]
  %v26 = vld [vmem:[%s0 + $0x2c] sm:$0xf]
  %v27 = vld [vmem:[%s0 + $0x30] sm:$0xf]
  %v28 = vld [vmem:[%s0 + $0x34] sm:$0xf]
  %v29 = vld [vmem:[%s0 + $0x38] sm:$0xf]
  %v30 = vld [vmem:[%s0 + $0x3c] sm:$0xf]
  %v31 = vld [vmem:[%s1] sm:$0xff]
  %v32 = vld [vmem:[%s1 + $0x8] sm:$0xff]
  %v33 = vld [vmem:[%s1 + $0x10] sm:$0xff]
  %v34 = vld [vmem:[%s1 + $0x18] sm:$0xff]
  %v35 = vld [vmem:[%s1 + $0x20] sm:$0xff]
  %v36 = vld [vmem:[%s1 + $0x28] sm:$0xff]
  %v37 = vld [vmem:[%s1 + $0x30] sm:$0xff]
  %v38 = vld [vmem:[%s1 + $0x38] sm:$0xff]
  %v39 = vld [vmem:[%s1 + $0x40] sm:$0xff]
  %v40 = vld [vmem:[%s1 + $0x48] sm:$0xff]
  %v41 = vld [vmem:[%s1 + $0x50] sm:$0xff]
  %v42 = vld [vmem:[%s1 + $0x58] sm:$0xff]
  %v43 = vld [vmem:[%s1 + $0x60] sm:$0xff]
  %v44 = vld [vmem:[%s1 + $0x68] sm:$0xff]
  %v45 = vld [vmem:[%s1 + $0x70] sm:$0xff]
  %v46 = vld [vmem:[%s1 + $0x78] sm:$0xff]
  %v47 = vld [vmem:[%s2] sm:$0xf]
  %v49 = vperm.slane %v47, 0
  %v50 = vperm.slane %v47, 1
  %v51 = vperm.slane %v47, 2
  %v52 = vperm.slane %v47, 3
  %v73 = vunpack.c.l.b16 %v15
  %v74 = vunpack.c.l.b16 %v16
  %v75 = vunpack.c.l.b16 %v17
  %v76 = vunpack.c.l.b16 %v18
  %v77 = vunpack.c.l.b16 %v19
  %v78 = vunpack.c.l.b16 %v20
  %v79 = vunpack.c.l.b16 %v21
  %v80 = vunpack.c.l.b16 %v22
  %v81 = vunpack.c.l.b16 %v23
  %v82 = vunpack.c.l.b16 %v24
  %v83 = vunpack.c.l.b16 %v25
  %v84 = vunpack.c.l.b16 %v26
  %v85 = vunpack.c.l.b16 %v27
  %v86 = vunpack.c.l.b16 %v28
  %v87 = vunpack.c.l.b16 %v29
  %v88 = vunpack.c.l.b16 %v30
  %v89 = vpack.c.b16 %v74, %v73
  %v90 = vpack.c.b16 %v76, %v75
  %v91 = vpack.c.b16 %v78, %v77
  %v92 = vpack.c.b16 %v80, %v79
  %v93 = vpack.c.b16 %v82, %v81
  %v94 = vpack.c.b16 %v84, %v83
  %v95 = vpack.c.b16 %v86, %v85
  %v96 = vpack.c.b16 %v88, %v87
  %v113 = vunpack.c.l.b16 %v31
  %v114 = vunpack.c.h.b16 %v31
  %v115 = vunpack.c.l.b16 %v32
  %v116 = vunpack.c.h.b16 %v32
  %v117 = vunpack.c.l.b16 %v33
  %v118 = vunpack.c.h.b16 %v33
  %v119 = vunpack.c.l.b16 %v34
  %v120 = vunpack.c.h.b16 %v34
  %v121 = vunpack.c.l.b16 %v35
  %v122 = vunpack.c.h.b16 %v35
  %v123 = vunpack.c.l.b16 %v36
  %v124 = vunpack.c.h.b16 %v36
  %v125 = vunpack.c.l.b16 %v37
  %v126 = vunpack.c.h.b16 %v37
  %v127 = vunpack.c.l.b16 %v38
  %v128 = vunpack.c.h.b16 %v38
  %v129 = vunpack.c.l.b16 %v39
  %v130 = vunpack.c.h.b16 %v39
  %v131 = vunpack.c.l.b16 %v40
  %v132 = vunpack.c.h.b16 %v40
  %v133 = vunpack.c.l.b16 %v41
  %v134 = vunpack.c.h.b16 %v41
  %v135 = vunpack.c.l.b16 %v42
  %v136 = vunpack.c.h.b16 %v42
  %v137 = vunpack.c.l.b16 %v43
  %v138 = vunpack.c.h.b16 %v43
  %v139 = vunpack.c.l.b16 %v44
  %v140 = vunpack.c.h.b16 %v44
  %v141 = vunpack.c.l.b16 %v45
  %v142 = vunpack.c.h.b16 %v45
  %v143 = vunpack.c.l.b16 %v46
  %v144 = vunpack.c.h.b16 %v46
  %v145 = vpack.c.b16 %v117, %v113
  %v146 = vpack.c.b16 %v118, %v114
  %v147 = vpack.c.b16 %v119, %v115
  %v148 = vpack.c.b16 %v120, %v116
  %v149 = vpack.c.b16 %v125, %v121
  %v150 = vpack.c.b16 %v126, %v122
  %v151 = vpack.c.b16 %v127, %v123
  %v152 = vpack.c.b16 %v128, %v124
  %v153 = vpack.c.b16 %v133, %v129
  %v154 = vpack.c.b16 %v134, %v130
  %v155 = vpack.c.b16 %v135, %v131
  %v156 = vpack.c.b16 %v136, %v132
  %v157 = vpack.c.b16 %v141, %v137
  %v158 = vpack.c.b16 %v142, %v138
  %v159 = vpack.c.b16 %v143, %v139
  %v160 = vpack.c.b16 %v144, %v140
  %vm177 = vcmask 523264
  %v179 = vsel %vm177, %v89, 0
  %v182 = vsel %vm177, %v90, 0
  %v185 = vsel %vm177, %v91, 0
  %v188 = vsel %vm177, %v92, 0
  %v191 = vsel %vm177, %v93, 0
  %v194 = vsel %vm177, %v94, 0
  %v197 = vsel %vm177, %v95, 0
  %v200 = vsel %vm177, %v96, 0
  %202 = vmatpush.bf16.msra.mxu0 0
  %203 = vmatpush.bf16.msra.mxu0 0
  %204 = vmatpush.bf16.msra.mxu0 0
  %205 = vmatpush.bf16.msra.mxu0 0
  %206 = vmatpush.bf16.msra.mxu0 %v157
  %207 = vmatpush.bf16.msra.mxu0 %v153
  %208 = vmatpush.bf16.msra.mxu0 %v149
  %209 = vmatpush.bf16.msra.mxu0 %v145
  %210 = vmatmul.bf16.gmra.mxu0 %v179
  %v211 = vpop.f32.mrf.mxu0
  %v212 = vadd.f32 %v49, %v211
  %v213 = vpop.f32.mrf.mxu0
  %v214 = vadd.f32 %v49, %v213
  %215 = vmatmul.bf16.gmra.mxu0 %v182
  %v216 = vpop.f32.mrf.mxu0
  %v217 = vadd.f32 %v49, %v216
  %v218 = vpop.f32.mrf.mxu0
  %v219 = vadd.f32 %v49, %v218
  %220 = vmatmul.bf16.gmra.mxu0 %v185
  %v221 = vpop.f32.mrf.mxu0
  %v222 = vadd.f32 %v49, %v221
  %v223 = vpop.f32.mrf.mxu0
  %v224 = vadd.f32 %v49, %v223
  %225 = vmatmul.bf16.gmra.mxu0 %v188
  %v226 = vpop.f32.mrf.mxu0
  %v227 = vadd.f32 %v49, %v226
  %v228 = vpop.f32.mrf.mxu0
  %v229 = vadd.f32 %v49, %v228
  %230 = vmatmul.bf16.gmra.mxu0 %v191
  %v231 = vpop.f32.mrf.mxu0
  %v232 = vadd.f32 %v49, %v231
  %v233 = vpop.f32.mrf.mxu0
  %v234 = vadd.f32 %v49, %v233
  %235 = vmatmul.bf16.gmra.mxu0 %v194
  %v236 = vpop.f32.mrf.mxu0
  %v237 = vadd.f32 %v49, %v236
  %v238 = vpop.f32.mrf.mxu0
  %v239 = vadd.f32 %v49, %v238
  %240 = vmatmul.bf16.gmra.mxu0 %v197
  %v241 = vpop.f32.mrf.mxu0
  %v242 = vadd.f32 %v49, %v241
  %v243 = vpop.f32.mrf.mxu0
  %v244 = vadd.f32 %v49, %v243
  %245 = vmatmul.bf16.gmra.mxu0 %v200
  %v246 = vpop.f32.mrf.mxu0
  %v247 = vadd.f32 %v49, %v246
  %v248 = vpop.f32.mrf.mxu0
  %v249 = vadd.f32 %v49, %v248
  %250 = vdwg.mxu0
  %251 = vmatpush.bf16.msra.mxu0 0
  %252 = vmatpush.bf16.msra.mxu0 0
  %253 = vmatpush.bf16.msra.mxu0 0
  %254 = vmatpush.bf16.msra.mxu0 0
  %255 = vmatpush.bf16.msra.mxu0 %v158
  %256 = vmatpush.bf16.msra.mxu0 %v154
  %257 = vmatpush.bf16.msra.mxu0 %v150
  %258 = vmatpush.bf16.msra.mxu0 %v146
  %259 = vmatmul.bf16.gmra.mxu0 %v179
  %v260 = vpop.f32.mrf.mxu0
  %v261 = vadd.f32 %v50, %v260
  %v262 = vpop.f32.mrf.mxu0
  %v263 = vadd.f32 %v50, %v262
  %264 = vmatmul.bf16.gmra.mxu0 %v182
  %v265 = vpop.f32.mrf.mxu0
  %v266 = vadd.f32 %v50, %v265
  %v267 = vpop.f32.mrf.mxu0
  %v268 = vadd.f32 %v50, %v267
  %269 = vmatmul.bf16.gmra.mxu0 %v185
  %v270 = vpop.f32.mrf.mxu0
  %v271 = vadd.f32 %v50, %v270
  %v272 = vpop.f32.mrf.mxu0
  %v273 = vadd.f32 %v50, %v272
  %274 = vmatmul.bf16.gmra.mxu0 %v188
  %v275 = vpop.f32.mrf.mxu0
  %v276 = vadd.f32 %v50, %v275
  %v277 = vpop.f32.mrf.mxu0
  %v278 = vadd.f32 %v50, %v277
  %279 = vmatmul.bf16.gmra.mxu0 %v191
  %v280 = vpop.f32.mrf.mxu0
  %v281 = vadd.f32 %v50, %v280
  %v282 = vpop.f32.mrf.mxu0
  %v283 = vadd.f32 %v50, %v282
  %284 = vmatmul.bf16.gmra.mxu0 %v194
  %v285 = vpop.f32.mrf.mxu0
  %v286 = vadd.f32 %v50, %v285
  %v287 = vpop.f32.mrf.mxu0
  %v288 = vadd.f32 %v50, %v287
  %289 = vmatmul.bf16.gmra.mxu0 %v197
  %v290 = vpop.f32.mrf.mxu0
  %v291 = vadd.f32 %v50, %v290
  %v292 = vpop.f32.mrf.mxu0
  %v293 = vadd.f32 %v50, %v292
  %294 = vmatmul.bf16.gmra.mxu0 %v200
  %v295 = vpop.f32.mrf.mxu0
  %v296 = vadd.f32 %v50, %v295
  %v297 = vpop.f32.mrf.mxu0
  %v298 = vadd.f32 %v50, %v297
  %299 = vdwg.mxu0
  %300 = vmatpush.bf16.msra.mxu0 0
  %301 = vmatpush.bf16.msra.mxu0 0
  %302 = vmatpush.bf16.msra.mxu0 0
  %303 = vmatpush.bf16.msra.mxu0 0
  %304 = vmatpush.bf16.msra.mxu0 %v159
  %305 = vmatpush.bf16.msra.mxu0 %v155
  %306 = vmatpush.bf16.msra.mxu0 %v151
  %307 = vmatpush.bf16.msra.mxu0 %v147
  %308 = vmatmul.bf16.gmra.mxu0 %v179
  %v309 = vpop.f32.mrf.mxu0
  %v310 = vadd.f32 %v51, %v309
  %v311 = vpop.f32.mrf.mxu0
  %v312 = vadd.f32 %v51, %v311
  %313 = vmatmul.bf16.gmra.mxu0 %v182
  %v314 = vpop.f32.mrf.mxu0
  %v315 = vadd.f32 %v51, %v314
  %v316 = vpop.f32.mrf.mxu0
  %v317 = vadd.f32 %v51, %v316
  %318 = vmatmul.bf16.gmra.mxu0 %v185
  %v319 = vpop.f32.mrf.mxu0
  %v320 = vadd.f32 %v51, %v319
  %v321 = vpop.f32.mrf.mxu0
  %v322 = vadd.f32 %v51, %v321
  %323 = vmatmul.bf16.gmra.mxu0 %v188
  %v324 = vpop.f32.mrf.mxu0
  %v325 = vadd.f32 %v51, %v324
  %v326 = vpop.f32.mrf.mxu0
  %v327 = vadd.f32 %v51, %v326
  %328 = vmatmul.bf16.gmra.mxu0 %v191
  %v329 = vpop.f32.mrf.mxu0
  %v330 = vadd.f32 %v51, %v329
  %v331 = vpop.f32.mrf.mxu0
  %v332 = vadd.f32 %v51, %v331
  %333 = vmatmul.bf16.gmra.mxu0 %v194
  %v334 = vpop.f32.mrf.mxu0
  %v335 = vadd.f32 %v51, %v334
  %v336 = vpop.f32.mrf.mxu0
  %v337 = vadd.f32 %v51, %v336
  %338 = vmatmul.bf16.gmra.mxu0 %v197
  %v339 = vpop.f32.mrf.mxu0
  %v340 = vadd.f32 %v51, %v339
  %v341 = vpop.f32.mrf.mxu0
  %v342 = vadd.f32 %v51, %v341
  %343 = vmatmul.bf16.gmra.mxu0 %v200
  %v344 = vpop.f32.mrf.mxu0
  %v345 = vadd.f32 %v51, %v344
  %v346 = vpop.f32.mrf.mxu0
  %v347 = vadd.f32 %v51, %v346
  %348 = vdwg.mxu0
  %349 = vmatpush.bf16.msra.mxu0 0
  %350 = vmatpush.bf16.msra.mxu0 0
  %351 = vmatpush.bf16.msra.mxu0 0
  %352 = vmatpush.bf16.msra.mxu0 0
  %353 = vmatpush.bf16.msra.mxu0 %v160
  %354 = vmatpush.bf16.msra.mxu0 %v156
  %355 = vmatpush.bf16.msra.mxu0 %v152
  %356 = vmatpush.bf16.msra.mxu0 %v148
  %357 = vmatmul.bf16.gmra.mxu0 %v179
  %v358 = vpop.f32.mrf.mxu0
  %v359 = vadd.f32 %v52, %v358
  %v360 = vpop.f32.mrf.mxu0
  %v361 = vadd.f32 %v52, %v360
  %362 = vmatmul.bf16.gmra.mxu0 %v182
  %v363 = vpop.f32.mrf.mxu0
  %v364 = vadd.f32 %v52, %v363
  %v365 = vpop.f32.mrf.mxu0
  %v366 = vadd.f32 %v52, %v365
  %367 = vmatmul.bf16.gmra.mxu0 %v185
  %v368 = vpop.f32.mrf.mxu0
  %v369 = vadd.f32 %v52, %v368
  %v370 = vpop.f32.mrf.mxu0
  %v371 = vadd.f32 %v52, %v370
  %372 = vmatmul.bf16.gmra.mxu0 %v188
  %v373 = vpop.f32.mrf.mxu0
  %v374 = vadd.f32 %v52, %v373
  %v375 = vpop.f32.mrf.mxu0
  %v376 = vadd.f32 %v52, %v375
  %377 = vmatmul.bf16.gmra.mxu0 %v191
  %v378 = vpop.f32.mrf.mxu0
  %v379 = vadd.f32 %v52, %v378
  %v380 = vpop.f32.mrf.mxu0
  %v381 = vadd.f32 %v52, %v380
  %382 = vmatmul.bf16.gmra.mxu0 %v194
  %v383 = vpop.f32.mrf.mxu0
  %v384 = vadd.f32 %v52, %v383
  %v385 = vpop.f32.mrf.mxu0
  %v386 = vadd.f32 %v52, %v385
  %387 = vmatmul.bf16.gmra.mxu0 %v197
  %v388 = vpop.f32.mrf.mxu0
  %v389 = vadd.f32 %v52, %v388
  %v390 = vpop.f32.mrf.mxu0
  %v391 = vadd.f32 %v52, %v390
  %392 = vmatmul.bf16.gmra.mxu0 %v200
  %v393 = vpop.f32.mrf.mxu0
  %v394 = vadd.f32 %v52, %v393
  %v395 = vpop.f32.mrf.mxu0
  %v396 = vadd.f32 %v52, %v395
  %397 = vdwg.mxu0
  %v398 = vpack.c.bf16 %v261, %v212
  %v399 = vpack.c.bf16 %v359, %v310
  %v400 = vpack.c.bf16 %v263, %v214
  %v401 = vpack.c.bf16 %v361, %v312
  %v402 = vpack.c.bf16 %v266, %v217
  %v403 = vpack.c.bf16 %v364, %v315
  %v404 = vpack.c.bf16 %v268, %v219
  %v405 = vpack.c.bf16 %v366, %v317
  %v406 = vpack.c.bf16 %v271, %v222
  %v407 = vpack.c.bf16 %v369, %v320
  %v408 = vpack.c.bf16 %v273, %v224
  %v409 = vpack.c.bf16 %v371, %v322
  %v410 = vpack.c.bf16 %v276, %v227
  %v411 = vpack.c.bf16 %v374, %v325
  %v412 = vpack.c.bf16 %v278, %v229
  %v413 = vpack.c.bf16 %v376, %v327
  %v414 = vpack.c.bf16 %v281, %v232
  %v415 = vpack.c.bf16 %v379, %v330
  %v416 = vpack.c.bf16 %v283, %v234
  %v417 = vpack.c.bf16 %v381, %v332
  %v418 = vpack.c.bf16 %v286, %v237
  %v419 = vpack.c.bf16 %v384, %v335
  %v420 = vpack.c.bf16 %v288, %v239
  %v421 = vpack.c.bf16 %v386, %v337
  %v422 = vpack.c.bf16 %v291, %v242
  %v423 = vpack.c.bf16 %v389, %v340
  %v424 = vpack.c.bf16 %v293, %v244
  %v425 = vpack.c.bf16 %v391, %v342
  %v426 = vpack.c.bf16 %v296, %v247
  %v427 = vpack.c.bf16 %v394, %v345
  %v428 = vpack.c.bf16 %v298, %v249
  %v429 = vpack.c.bf16 %v396, %v347
  %430 = vst [vmem:[%s3] sm:$0xff] %v398
  %431 = vst [vmem:[%s3 + $0x8] sm:$0xff] %v399
  %432 = vst [vmem:[%s3 + $0x10] sm:$0xff] %v400
  %433 = vst [vmem:[%s3 + $0x18] sm:$0xff] %v401
  %434 = vst [vmem:[%s3 + $0x20] sm:$0xff] %v402
  %435 = vst [vmem:[%s3 + $0x28] sm:$0xff] %v403
  %436 = vst [vmem:[%s3 + $0x30] sm:$0xff] %v404
  %437 = vst [vmem:[%s3 + $0x38] sm:$0xff] %v405
  %438 = vst [vmem:[%s3 + $0x40] sm:$0xff] %v406
  %439 = vst [vmem:[%s3 + $0x48] sm:$0xff] %v407
  %440 = vst [vmem:[%s3 + $0x50] sm:$0xff] %v408
  %441 = vst [vmem:[%s3 + $0x58] sm:$0xff] %v409
  %442 = vst [vmem:[%s3 + $0x60] sm:$0xff] %v410
  %443 = vst [vmem:[%s3 + $0x68] sm:$0xff] %v411
  %444 = vst [vmem:[%s3 + $0x70] sm:$0xff] %v412
  %445 = vst [vmem:[%s3 + $0x78] sm:$0xff] %v413
  %446 = vst [vmem:[%s3 + $0x80] sm:$0xff] %v414
  %447 = vst [vmem:[%s3 + $0x88] sm:$0xff] %v415
  %448 = vst [vmem:[%s3 + $0x90] sm:$0xff] %v416
  %449 = vst [vmem:[%s3 + $0x98] sm:$0xff] %v417
  %450 = vst [vmem:[%s3 + $0xa0] sm:$0xff] %v418
  %451 = vst [vmem:[%s3 + $0xa8] sm:$0xff] %v419
  %452 = vst [vmem:[%s3 + $0xb0] sm:$0xff] %v420
  %453 = vst [vmem:[%s3 + $0xb8] sm:$0xff] %v421
  %454 = vst [vmem:[%s3 + $0xc0] sm:$0xff] %v422
  %455 = vst [vmem:[%s3 + $0xc8] sm:$0xff] %v423
  %456 = vst [vmem:[%s3 + $0xd0] sm:$0xff] %v424
  %457 = vst [vmem:[%s3 + $0xd8] sm:$0xff] %v425
  %458 = vst [vmem:[%s3 + $0xe0] sm:$0xff] %v426
  %459 = vst [vmem:[%s3 + $0xe8] sm:$0xff] %v427
  %460 = vst [vmem:[%s3 + $0xf0] sm:$0xff] %v428
  %461 = vst [vmem:[%s3 + $0xf8] sm:$0xff] %v429
  // Predicated region
  $region14: #{decoder_rnn_forward.3} parent=0 // pred_check
    _
  $region15: #{decoder_rnn_forward.3} parent=0 // pred_check_branch
    %463 = sbr.rel (0) target = $region17
  $region16: #{decoder_rnn_forward.3} parent=0 // pred_region
    _
  $region17: #{decoder_rnn_forward.3} parent=0 // pred_fallthru
    _
  // Predicated region
  $region18: #{decoder_rnn_forward.3} parent=0 // pred_check
    _
  $region19: #{decoder_rnn_forward.3} parent=0 // pred_check_branch
    %465 = sbr.rel (0) target = $region21
  $region20: #{decoder_rnn_forward.3} parent=0 // pred_region
    _
  $region21: #{decoder_rnn_forward.3} parent=0 // pred_fallthru
    _

// kernel: decoder_rnn_forward.4
$region0: #{decoder_rnn_forward.4}
  #allocation0 [shape = 'u32[]', space=smem, size = 0x4, offset = 0x4, fixed_abs, tag = 'smem constant byte address 0x4 - core index']
  #allocation1 [shape = 'u32[72,128]{1,0:T(1,128)}', space=vmem, size = 0x9000, scoped, tag = 'internal scratch']
  #allocation2 [shape = 'f32[8,128]{1,0:T(8,128)}', space=vmem, size = 0x1000, scoped, tag = 'scratch operand']
  #allocation3 [shape = 'f32[8,128]{1,0:T(8,128)}', space=vmem, size = 0x1000, scoped, tag = 'scratch operand']
  %s0 = inlined_call_operand.vmem [shape: bf16[16,8,512], index: 0, kind: input, shape index: {}]
  %s1 = inlined_call_operand.vmem [shape: bf16[128,512], index: 1, kind: input, shape index: {}]
  %s2 = inlined_call_operand.vmem [shape: bf16[16,8,128], index: 2, kind: output, shape index: {}]
  %s3 = sld [smem:[#allocation0]]
  $region22: #{decoder_rnn_forward.4} parent=0
    _
  %s5 = ssub.s32 1, %s3
  %s6 = scalar_select 0, %s5, %s3
  // Predicated region
  $region2: #{decoder_rnn_forward.4} parent=0 // pred_check
    _
  $region3: #{decoder_rnn_forward.4} parent=0 // pred_check_branch
    %8 = sbr.rel (0) target = $region5
  $region4: #{decoder_rnn_forward.4} parent=0 // pred_region
    _
  $region5: #{decoder_rnn_forward.4} parent=0 // pred_fallthru
    _
  // Predicated region
  $region6: #{decoder_rnn_forward.4} parent=0 // pred_check
    _
  $region7: #{decoder_rnn_forward.4} parent=0 // pred_check_branch
    %10 = sbr.rel (0) target = $region9
  $region8: #{decoder_rnn_forward.4} parent=0 // pred_region
    _
  $region9: #{decoder_rnn_forward.4} parent=0 // pred_fallthru
    _
  %p11 = scmp.eq.s32.totalorder 0, 0
  // Predicated region
  $region10: #{decoder_rnn_forward.4} parent=0 // pred_check
    %p12 = pneg %p11
  $region11: #{decoder_rnn_forward.4} parent=0 // pred_check_branch
    %14 = sbr.rel (%p12) target = $region13
  $region12: #{decoder_rnn_forward.4} parent=0 // pred_region
    %15 = vst [vmem:[#allocation2] sm:$0xff] 0.0
    %16 = vst [vmem:[#allocation3] sm:$0xff] 0.0
  $region13: #{decoder_rnn_forward.4} parent=0 // pred_fallthru
    _
  %v17 = vld [vmem:[#allocation2] sm:$0xff]
  %v18 = vld [vmem:[#allocation3] sm:$0xff]
  %v19 = vld [vmem:[%s1] sm:$0xff]
  %v20 = vld [vmem:[%s1 + $0x8] sm:$0xff]
  %v21 = vld [vmem:[%s1 + $0x10] sm:$0xff]
  %v22 = vld [vmem:[%s1 + $0x18] sm:$0xff]
  %v23 = vld [vmem:[%s1 + $0x20] sm:$0xff]
  %v24 = vld [vmem:[%s1 + $0x28] sm:$0xff]
  %v25 = vld [vmem:[%s1 + $0x30] sm:$0xff]
  %v26 = vld [vmem:[%s1 + $0x38] sm:$0xff]
  %v27 = vld [vmem:[%s1 + $0x40] sm:$0xff]
  %v28 = vld [vmem:[%s1 + $0x48] sm:$0xff]
  %v29 = vld [vmem:[%s1 + $0x50] sm:$0xff]
  %v30 = vld [vmem:[%s1 + $0x58] sm:$0xff]
  %v31 = vld [vmem:[%s1 + $0x60] sm:$0xff]
  %v32 = vld [vmem:[%s1 + $0x68] sm:$0xff]
  %v33 = vld [vmem:[%s1 + $0x70] sm:$0xff]
  %v34 = vld [vmem:[%s1 + $0x78] sm:$0xff]
  %v35 = vld [vmem:[%s1 + $0x80] sm:$0xff]
  %v36 = vld [vmem:[%s1 + $0x88] sm:$0xff]
  %v37 = vld [vmem:[%s1 + $0x90] sm:$0xff]
  %v38 = vld [vmem:[%s1 + $0x98] sm:$0xff]
  %v39 = vld [vmem:[%s1 + $0xa0] sm:$0xff]
  %v40 = vld [vmem:[%s1 + $0xa8] sm:$0xff]
  %v41 = vld [vmem:[%s1 + $0xb0] sm:$0xff]
  %v42 = vld [vmem:[%s1 + $0xb8] sm:$0xff]
  %v43 = vld [vmem:[%s1 + $0xc0] sm:$0xff]
  %v44 = vld [vmem:[%s1 + $0xc8] sm:$0xff]
  %v45 = vld [vmem:[%s1 + $0xd0] sm:$0xff]
  %v46 = vld [vmem:[%s1 + $0xd8] sm:$0xff]
  %v47 = vld [vmem:[%s1 + $0xe0] sm:$0xff]
  %v48 = vld [vmem:[%s1 + $0xe8] sm:$0xff]
  %v49 = vld [vmem:[%s1 + $0xf0] sm:$0xff]
  %v50 = vld [vmem:[%s1 + $0xf8] sm:$0xff]
  %v51 = vld [vmem:[%s0] sm:$0xff]
  %v52 = vld [vmem:[%s0 + $0x8] sm:$0xff]
  %v53 = vunpack.c.l.bf16 %v51
  %v54 = vunpack.c.h.bf16 %v51
  %v55 = vunpack.c.l.bf16 %v52
  %v56 = vunpack.c.h.bf16 %v52
  %v57 = vpack.c.bf16 %v17, %v17
  %v90 = vunpack.c.l.b16 %v19
  %v91 = vunpack.c.h.b16 %v19
  %v92 = vunpack.c.l.b16 %v20
  %v93 = vunpack.c.h.b16 %v20
  %v94 = vunpack.c.l.b16 %v21
  %v95 = vunpack.c.h.b16 %v21
  %v96 = vunpack.c.l.b16 %v22
  %v97 = vunpack.c.h.b16 %v22
  %v98 = vunpack.c.l.b16 %v23
  %v99 = vunpack.c.h.b16 %v23
  %v100 = vunpack.c.l.b16 %v24
  %v101 = vunpack.c.h.b16 %v24
  %v102 = vunpack.c.l.b16 %v25
  %v103 = vunpack.c.h.b16 %v25
  %v104 = vunpack.c.l.b16 %v26
  %v105 = vunpack.c.h.b16 %v26
  %v106 = vunpack.c.l.b16 %v27
  %v107 = vunpack.c.h.b16 %v27
  %v108 = vunpack.c.l.b16 %v28
  %v109 = vunpack.c.h.b16 %v28
  %v110 = vunpack.c.l.b16 %v29
  %v111 = vunpack.c.h.b16 %v29
  %v112 = vunpack.c.l.b16 %v30
  %v113 = vunpack.c.h.b16 %v30
  %v114 = vunpack.c.l.b16 %v31
  %v115 = vunpack.c.h.b16 %v31
  %v116 = vunpack.c.l.b16 %v32
  %v117 = vunpack.c.h.b16 %v32
  %v118 = vunpack.c.l.b16 %v33
  %v119 = vunpack.c.h.b16 %v33
  %v120 = vunpack.c.l.b16 %v34
  %v121 = vunpack.c.h.b16 %v34
  %v122 = vunpack.c.l.b16 %v35
  %v123 = vunpack.c.h.b16 %v35
  %v124 = vunpack.c.l.b16 %v36
  %v125 = vunpack.c.h.b16 %v36
  %v126 = vunpack.c.l.b16 %v37
  %v127 = vunpack.c.h.b16 %v37
  %v128 = vunpack.c.l.b16 %v38
  %v129 = vunpack.c.h.b16 %v38
  %v130 = vunpack.c.l.b16 %v39
  %v131 = vunpack.c.h.b16 %v39
  %v132 = vunpack.c.l.b16 %v40
  %v133 = vunpack.c.h.b16 %v40
  %v134 = vunpack.c.l.b16 %v41
  %v135 = vunpack.c.h.b16 %v41
  %v136 = vunpack.c.l.b16 %v42
  %v137 = vunpack.c.h.b16 %v42
  %v138 = vunpack.c.l.b16 %v43
  %v139 = vunpack.c.h.b16 %v43
  %v140 = vunpack.c.l.b16 %v44
  %v141 = vunpack.c.h.b16 %v44
  %v142 = vunpack.c.l.b16 %v45
  %v143 = vunpack.c.h.b16 %v45
  %v144 = vunpack.c.l.b16 %v46
  %v145 = vunpack.c.h.b16 %v46
  %v146 = vunpack.c.l.b16 %v47
  %v147 = vunpack.c.h.b16 %v47
  %v148 = vunpack.c.l.b16 %v48
  %v149 = vunpack.c.h.b16 %v48
  %v150 = vunpack.c.l.b16 %v49
  %v151 = vunpack.c.h.b16 %v49
  %v152 = vunpack.c.l.b16 %v50
  %v153 = vunpack.c.h.b16 %v50
  %v154 = vpack.c.b16 %v94, %v90
  %v155 = vpack.c.b16 %v95, %v91
  %v156 = vpack.c.b16 %v96, %v92
  %v157 = vpack.c.b16 %v97, %v93
  %v158 = vpack.c.b16 %v102, %v98
  %v159 = vpack.c.b16 %v103, %v99
  %v160 = vpack.c.b16 %v104, %v100
  %v161 = vpack.c.b16 %v105, %v101
  %v162 = vpack.c.b16 %v110, %v106
  %v163 = vpack.c.b16 %v111, %v107
  %v164 = vpack.c.b16 %v112, %v108
  %v165 = vpack.c.b16 %v113, %v109
  %v166 = vpack.c.b16 %v118, %v114
  %v167 = vpack.c.b16 %v119, %v115
  %v168 = vpack.c.b16 %v120, %v116
  %v169 = vpack.c.b16 %v121, %v117
  %v170 = vpack.c.b16 %v126, %v122
  %v171 = vpack.c.b16 %v127, %v123
  %v172 = vpack.c.b16 %v128, %v124
  %v173 = vpack.c.b16 %v129, %v125
  %v174 = vpack.c.b16 %v134, %v130
  %v175 = vpack.c.b16 %v135, %v131
  %v176 = vpack.c.b16 %v136, %v132
  %v177 = vpack.c.b16 %v137, %v133
  %v178 = vpack.c.b16 %v142, %v138
  %v179 = vpack.c.b16 %v143, %v139
  %v180 = vpack.c.b16 %v144, %v140
  %v181 = vpack.c.b16 %v145, %v141
  %v182 = vpack.c.b16 %v150, %v146
  %v183 = vpack.c.b16 %v151, %v147
  %v184 = vpack.c.b16 %v152, %v148
  %v185 = vpack.c.b16 %v153, %v149
  %218 = vmatpush.bf16.msra.mxu0 %v182
  %219 = vmatpush.bf16.msra.mxu0 %v178
  %220 = vmatpush.bf16.msra.mxu0 %v174
  %221 = vmatpush.bf16.msra.mxu0 %v170
  %222 = vmatpush.bf16.msra.mxu0 %v166
  %223 = vmatpush.bf16.msra.mxu0 %v162
  %224 = vmatpush.bf16.msra.mxu0 %v158
  %225 = vmatpush.bf16.msra.mxu0 %v154
  %226 = vmatmul.bf16.gmra.mxu0 %v57
  %v227 = vpop.f32.mrf.mxu0
  %v228 = vadd.f32 0.0, %v227
  %v229 = vpop.f32.mrf.mxu0
  %230 = vdwg.mxu0
  %231 = vmatpush.bf16.msra.mxu0 %v183
  %232 = vmatpush.bf16.msra.mxu0 %v179
  %233 = vmatpush.bf16.msra.mxu0 %v175
  %234 = vmatpush.bf16.msra.mxu0 %v171
  %235 = vmatpush.bf16.msra.mxu0 %v167
  %236 = vmatpush.bf16.msra.mxu0 %v163
  %237 = vmatpush.bf16.msra.mxu0 %v159
  %238 = vmatpush.bf16.msra.mxu0 %v155
  %239 = vmatmul.bf16.gmra.mxu0 %v57
  %v240 = vpop.f32.mrf.mxu0
  %v241 = vadd.f32 0.0, %v240
  %v242 = vpop.f32.mrf.mxu0
  %243 = vdwg.mxu0
  %244 = vmatpush.bf16.msra.mxu0 %v184
  %245 = vmatpush.bf16.msra.mxu0 %v180
  %246 = vmatpush.bf16.msra.mxu0 %v176
  %247 = vmatpush.bf16.msra.mxu0 %v172
  %248 = vmatpush.bf16.msra.mxu0 %v168
  %249 = vmatpush.bf16.msra.mxu0 %v164
  %250 = vmatpush.bf16.msra.mxu0 %v160
  %251 = vmatpush.bf16.msra.mxu0 %v156
  %252 = vmatmul.bf16.gmra.mxu0 %v57
  %v253 = vpop.f32.mrf.mxu0
  %v254 = vadd.f32 0.0, %v253
  %v255 = vpop.f32.mrf.mxu0
  %256 = vdwg.mxu0
  %257 = vmatpush.bf16.msra.mxu0 %v185
  %258 = vmatpush.bf16.msra.mxu0 %v181
  %259 = vmatpush.bf16.msra.mxu0 %v177
  %260 = vmatpush.bf16.msra.mxu0 %v173
  %261 = vmatpush.bf16.msra.mxu0 %v169
  %262 = vmatpush.bf16.msra.mxu0 %v165
  %263 = vmatpush.bf16.msra.mxu0 %v161
  %264 = vmatpush.bf16.msra.mxu0 %v157
  %265 = vmatmul.bf16.gmra.mxu0 %v57
  %v266 = vpop.f32.mrf.mxu0
  %v267 = vadd.f32 0.0, %v266
  %v268 = vpop.f32.mrf.mxu0
  %269 = vdwg.mxu0
  %v270 = vadd.f32 %v53, %v228
  %v271 = vadd.f32 %v54, %v241
  %v272 = vadd.f32 %v55, %v254
  %v273 = vadd.f32 %v56, %v267
  %v274 = vxor.u32 %v270, 2147483648
  %v275 = vmul.f32 %v274, 1.442695
  %v276 = vpow.pop %v275
  %v277 = vadd.f32 %v276, 1.0
  %v278 = vrcp.pop %v277
  %v279 = vmul.f32 %v277, %v278
  %v280 = vsub.f32 1.0, %v279
  %v281 = vmul.f32 %v278, %v280
  %v282 = vadd.f32 %v278, %v281
  %vm283 = vweird.f32 %v277
  %vm284 = vweird.f32 %v278
  %vm285 = vmor %vm283, %vm284
  %v286 = vsel %vm285, %v278, %v282
  %v287 = vand.u32 2147483647, %v277
  %vm288 = vcmp.eq.f32.partialorder %v287, 8.507059e+37
  %v289 = vand.u32 %v277, 2147483648
  %v290 = vor.u32 1.1754944e-38, %v289
  %v291 = vsel %vm288, %v290, %v286
  %v292 = vmul.f32 1.0, %v291
  %v293 = vxor.u32 %v271, 2147483648
  %v294 = vmul.f32 %v293, 1.442695
  %v295 = vpow.pop %v294
  %v296 = vadd.f32 %v295, 1.0
  %v297 = vrcp.pop %v296
  %v298 = vmul.f32 %v296, %v297
  %v299 = vsub.f32 1.0, %v298
  %v300 = vmul.f32 %v297, %v299
  %v301 = vadd.f32 %v297, %v300
  %vm302 = vweird.f32 %v296
  %vm303 = vweird.f32 %v297
  %vm304 = vmor %vm302, %vm303
  %v305 = vsel %vm304, %v297, %v301
  %v306 = vand.u32 2147483647, %v296
  %vm307 = vcmp.eq.f32.partialorder %v306, 8.507059e+37
  %v308 = vand.u32 %v296, 2147483648
  %v309 = vor.u32 1.1754944e-38, %v308
  %v310 = vsel %vm307, %v309, %v305
  %v311 = vmul.f32 1.0, %v310
  %v312 = vtanh.pop %v272
  %v313 = vxor.u32 %v273, 2147483648
  %v314 = vmul.f32 %v313, 1.442695
  %v315 = vpow.pop %v314
  %v316 = vadd.f32 %v315, 1.0
  %v317 = vrcp.pop %v316
  %v318 = vmul.f32 %v316, %v317
  %v319 = vsub.f32 1.0, %v318
  %v320 = vmul.f32 %v317, %v319
  %v321 = vadd.f32 %v317, %v320
  %vm322 = vweird.f32 %v316
  %vm323 = vweird.f32 %v317
  %vm324 = vmor %vm322, %vm323
  %v325 = vsel %vm324, %v317, %v321
  %v326 = vand.u32 2147483647, %v316
  %vm327 = vcmp.eq.f32.partialorder %v326, 8.507059e+37
  %v328 = vand.u32 %v316, 2147483648
  %v329 = vor.u32 1.1754944e-38, %v328
  %v330 = vsel %vm327, %v329, %v325
  %v331 = vmul.f32 1.0, %v330
  %v332 = vmul.f32 %v311, %v18
  %v333 = vmul.f32 %v292, %v312
  %v334 = vadd.f32 %v332, %v333
  %v335 = vtanh.pop %v334
  %v336 = vmul.f32 %v331, %v335
  %v337 = vpack.c.bf16 %v336, %v336
  %338 = vst [vmem:[%s2] sm:$0xf] %v337
  %s339 = scalar_lea.vmem %s0, 16
  %v340 = vld [vmem:[%s339] sm:$0xff]
  %v341 = vld [vmem:[%s339 + $0x8] sm:$0xff]
  %v342 = vunpack.c.l.bf16 %v340
  %v343 = vunpack.c.h.bf16 %v340
  %v344 = vunpack.c.l.bf16 %v341
  %v345 = vunpack.c.h.bf16 %v341
  %346 = vmatpush.bf16.msra.mxu0 %v182
  %347 = vmatpush.bf16.msra.mxu0 %v178
  %348 = vmatpush.bf16.msra.mxu0 %v174
  %349 = vmatpush.bf16.msra.mxu0 %v170
  %350 = vmatpush.bf16.msra.mxu0 %v166
  %351 = vmatpush.bf16.msra.mxu0 %v162
  %352 = vmatpush.bf16.msra.mxu0 %v158
  %353 = vmatpush.bf16.msra.mxu0 %v154
  %354 = vmatmul.bf16.gmra.mxu0 %v337
  %v355 = vpop.f32.mrf.mxu0
  %v356 = vadd.f32 0.0, %v355
  %v357 = vpop.f32.mrf.mxu0
  %358 = vdwg.mxu0
  %359 = vmatpush.bf16.msra.mxu0 %v183
  %360 = vmatpush.bf16.msra.mxu0 %v179
  %361 = vmatpush.bf16.msra.mxu0 %v175
  %362 = vmatpush.bf16.msra.mxu0 %v171
  %363 = vmatpush.bf16.msra.mxu0 %v167
  %364 = vmatpush.bf16.msra.mxu0 %v163
  %365 = vmatpush.bf16.msra.mxu0 %v159
  %366 = vmatpush.bf16.msra.mxu0 %v155
  %367 = vmatmul.bf16.gmra.mxu0 %v337
  %v368 = vpop.f32.mrf.mxu0
  %v369 = vadd.f32 0.0, %v368
  %v370 = vpop.f32.mrf.mxu0
  %371 = vdwg.mxu0
  %372 = vmatpush.bf16.msra.mxu0 %v184
  %373 = vmatpush.bf16.msra.mxu0 %v180
  %374 = vmatpush.bf16.msra.mxu0 %v176
  %375 = vmatpush.bf16.msra.mxu0 %v172
  %376 = vmatpush.bf16.msra.mxu0 %v168
  %377 = vmatpush.bf16.msra.mxu0 %v164
  %378 = vmatpush.bf16.msra.mxu0 %v160
  %379 = vmatpush.bf16.msra.mxu0 %v156
  %380 = vmatmul.bf16.gmra.mxu0 %v337
  %v381 = vpop.f32.mrf.mxu0
  %v382 = vadd.f32 0.0, %v381
  %v383 = vpop.f32.mrf.mxu0
  %384 = vdwg.mxu0
  %385 = vmatpush.bf16.msra.mxu0 %v185
  %386 = vmatpush.bf16.msra.mxu0 %v181
  %387 = vmatpush.bf16.msra.mxu0 %v177
  %388 = vmatpush.bf16.msra.mxu0 %v173
  %389 = vmatpush.bf16.msra.mxu0 %v169
  %390 = vmatpush.bf16.msra.mxu0 %v165
  %391 = vmatpush.bf16.msra.mxu0 %v161
  %392 = vmatpush.bf16.msra.mxu0 %v157
  %393 = vmatmul.bf16.gmra.mxu0 %v337
  %v394 = vpop.f32.mrf.mxu0
  %v395 = vadd.f32 0.0, %v394
  %v396 = vpop.f32.mrf.mxu0
  %397 = vdwg.mxu0
  %v398 = vadd.f32 %v342, %v356
  %v399 = vadd.f32 %v343, %v369
  %v400 = vadd.f32 %v344, %v382
  %v401 = vadd.f32 %v345, %v395
  %v402 = vxor.u32 %v398, 2147483648
  %v403 = vmul.f32 %v402, 1.442695
  %v404 = vpow.pop %v403
  %v405 = vadd.f32 %v404, 1.0
  %v406 = vrcp.pop %v405
  %v407 = vmul.f32 %v405, %v406
  %v408 = vsub.f32 1.0, %v407
  %v409 = vmul.f32 %v406, %v408
  %v410 = vadd.f32 %v406, %v409
  %vm411 = vweird.f32 %v405
  %vm412 = vweird.f32 %v406
  %vm413 = vmor %vm411, %vm412
  %v414 = vsel %vm413, %v406, %v410
  %v415 = vand.u32 2147483647, %v405
  %vm416 = vcmp.eq.f32.partialorder %v415, 8.507059e+37
  %v417 = vand.u32 %v405, 2147483648
  %v418 = vor.u32 1.1754944e-38, %v417
  %v419 = vsel %vm416, %v418, %v414
  %v420 = vmul.f32 1.0, %v419
  %v421 = vxor.u32 %v399, 2147483648
  %v422 = vmul.f32 %v421, 1.442695
  %v423 = vpow.pop %v422
  %v424 = vadd.f32 %v423, 1.0
  %v425 = vrcp.pop %v424
  %v426 = vmul.f32 %v424, %v425
  %v427 = vsub.f32 1.0, %v426
  %v428 = vmul.f32 %v425, %v427
  %v429 = vadd.f32 %v425, %v428
  %vm430 = vweird.f32 %v424
  %vm431 = vweird.f32 %v425
  %vm432 = vmor %vm430, %vm431
  %v433 = vsel %vm432, %v425, %v429
  %v434 = vand.u32 2147483647, %v424
  %vm435 = vcmp.eq.f32.partialorder %v434, 8.507059e+37
  %v436 = vand.u32 %v424, 2147483648
  %v437 = vor.u32 1.1754944e-38, %v436
  %v438 = vsel %vm435, %v437, %v433
  %v439 = vmul.f32 1.0, %v438
  %v440 = vtanh.pop %v400
  %v441 = vxor.u32 %v401, 2147483648
  %v442 = vmul.f32 %v441, 1.442695
  %v443 = vpow.pop %v442
  %v444 = vadd.f32 %v443, 1.0
  %v445 = vrcp.pop %v444
  %v446 = vmul.f32 %v444, %v445
  %v447 = vsub.f32 1.0, %v446
  %v448 = vmul.f32 %v445, %v447
  %v449 = vadd.f32 %v445, %v448
  %vm450 = vweird.f32 %v444
  %vm451 = vweird.f32 %v445
  %vm452 = vmor %vm450, %vm451
  %v453 = vsel %vm452, %v445, %v449
  %v454 = vand.u32 2147483647, %v444
  %vm455 = vcmp.eq.f32.partialorder %v454, 8.507059e+37
  %v456 = vand.u32 %v444, 2147483648
  %v457 = vor.u32 1.1754944e-38, %v456
  %v458 = vsel %vm455, %v457, %v453
  %v459 = vmul.f32 1.0, %v458
  %v460 = vmul.f32 %v439, %v334
  %v461 = vmul.f32 %v420, %v440
  %v462 = vadd.f32 %v460, %v461
  %v463 = vtanh.pop %v462
  %v464 = vmul.f32 %v459, %v463
  %v465 = vpack.c.bf16 %v464, %v464
  %s466 = scalar_lea.vmem %s2, 4
  %467 = vst [vmem:[%s466] sm:$0xf] %v465
  %s468 = scalar_lea.vmem %s0, 32
  %v469 = vld [vmem:[%s468] sm:$0xff]
  %v470 = vld [vmem:[%s468 + $0x8] sm:$0xff]
  %v471 = vunpack.c.l.bf16 %v469
  %v472 = vunpack.c.h.bf16 %v469
  %v473 = vunpack.c.l.bf16 %v470
  %v474 = vunpack.c.h.bf16 %v470
  %475 = vmatpush.bf16.msra.mxu0 %v182
  %476 = vmatpush.bf16.msra.mxu0 %v178
  %477 = vmatpush.bf16.msra.mxu0 %v174
  %478 = vmatpush.bf16.msra.mxu0 %v170
  %479 = vmatpush.bf16.msra.mxu0 %v166
  %480 = vmatpush.bf16.msra.mxu0 %v162
  %481 = vmatpush.bf16.msra.mxu0 %v158
  %482 = vmatpush.bf16.msra.mxu0 %v154
  %483 = vmatmul.bf16.gmra.mxu0 %v465
  %v484 = vpop.f32.mrf.mxu0
  %v485 = vadd.f32 0.0, %v484
  %v486 = vpop.f32.mrf.mxu0
  %487 = vdwg.mxu0
  %488 = vmatpush.bf16.msra.mxu0 %v183
  %489 = vmatpush.bf16.msra.mxu0 %v179
  %490 = vmatpush.bf16.msra.mxu0 %v175
  %491 = vmatpush.bf16.msra.mxu0 %v171
  %492 = vmatpush.bf16.msra.mxu0 %v167
  %493 = vmatpush.bf16.msra.mxu0 %v163
  %494 = vmatpush.bf16.msra.mxu0 %v159
  %495 = vmatpush.bf16.msra.mxu0 %v155
  %496 = vmatmul.bf16.gmra.mxu0 %v465
  %v497 = vpop.f32.mrf.mxu0
  %v498 = vadd.f32 0.0, %v497
  %v499 = vpop.f32.mrf.mxu0
  %500 = vdwg.mxu0
  %501 = vmatpush.bf16.msra.mxu0 %v184
  %502 = vmatpush.bf16.msra.mxu0 %v180
  %503 = vmatpush.bf16.msra.mxu0 %v176
  %504 = vmatpush.bf16.msra.mxu0 %v172
  %505 = vmatpush.bf16.msra.mxu0 %v168
  %506 = vmatpush.bf16.msra.mxu0 %v164
  %507 = vmatpush.bf16.msra.mxu0 %v160
  %508 = vmatpush.bf16.msra.mxu0 %v156
  %509 = vmatmul.bf16.gmra.mxu0 %v465
  %v510 = vpop.f32.mrf.mxu0
  %v511 = vadd.f32 0.0, %v510
  %v512 = vpop.f32.mrf.mxu0
  %513 = vdwg.mxu0
  %514 = vmatpush.bf16.msra.mxu0 %v185
  %515 = vmatpush.bf16.msra.mxu0 %v181
  %516 = vmatpush.bf16.msra.mxu0 %v177
  %517 = vmatpush.bf16.msra.mxu0 %v173
  %518 = vmatpush.bf16.msra.mxu0 %v169
  %519 = vmatpush.bf16.msra.mxu0 %v165
  %520 = vmatpush.bf16.msra.mxu0 %v161
  %521 = vmatpush.bf16.msra.mxu0 %v157
  %522 = vmatmul.bf16.gmra.mxu0 %v465
  %v523 = vpop.f32.mrf.mxu0
  %v524 = vadd.f32 0.0, %v523
  %v525 = vpop.f32.mrf.mxu0
  %526 = vdwg.mxu0
  %v527 = vadd.f32 %v471, %v485
  %v528 = vadd.f32 %v472, %v498
  %v529 = vadd.f32 %v473, %v511
  %v530 = vadd.f32 %v474, %v524
  %v531 = vxor.u32 %v527, 2147483648
  %v532 = vmul.f32 %v531, 1.442695
  %v533 = vpow.pop %v532
  %v534 = vadd.f32 %v533, 1.0
  %v535 = vrcp.pop %v534
  %v536 = vmul.f32 %v534, %v535
  %v537 = vsub.f32 1.0, %v536
  %v538 = vmul.f32 %v535, %v537
  %v539 = vadd.f32 %v535, %v538
  %vm540 = vweird.f32 %v534
  %vm541 = vweird.f32 %v535
  %vm542 = vmor %vm540, %vm541
  %v543 = vsel %vm542, %v535, %v539
  %v544 = vand.u32 2147483647, %v534
  %vm545 = vcmp.eq.f32.partialorder %v544, 8.507059e+37
  %v546 = vand.u32 %v534, 2147483648
  %v547 = vor.u32 1.1754944e-38, %v546
  %v548 = vsel %vm545, %v547, %v543
  %v549 = vmul.f32 1.0, %v548
  %v550 = vxor.u32 %v528, 2147483648
  %v551 = vmul.f32 %v550, 1.442695
  %v552 = vpow.pop %v551
  %v553 = vadd.f32 %v552, 1.0
  %v554 = vrcp.pop %v553
  %v555 = vmul.f32 %v553, %v554
  %v556 = vsub.f32 1.0, %v555
  %v557 = vmul.f32 %v554, %v556
  %v558 = vadd.f32 %v554, %v557
  %vm559 = vweird.f32 %v553
  %vm560 = vweird.f32 %v554
  %vm561 = vmor %vm559, %vm560
  %v562 = vsel %vm561, %v554, %v558
  %v563 = vand.u32 2147483647, %v553
  %vm564 = vcmp.eq.f32.partialorder %v563, 8.507059e+37
  %v565 = vand.u32 %v553, 2147483648
  %v566 = vor.u32 1.1754944e-38, %v565
  %v567 = vsel %vm564, %v566, %v562
  %v568 = vmul.f32 1.0, %v567
  %v569 = vtanh.pop %v529
  %v570 = vxor.u32 %v530, 2147483648
  %v571 = vmul.f32 %v570, 1.442695
  %v572 = vpow.pop %v571
  %v573 = vadd.f32 %v572, 1.0
  %v574 = vrcp.pop %v573
  %v575 = vmul.f32 %v573, %v574
  %v576 = vsub.f32 1.0, %v575
  %v577 = vmul.f32 %v574, %v576
  %v578 = vadd.f32 %v574, %v577
  %vm579 = vweird.f32 %v573
  %vm580 = vweird.f32 %v574
  %vm581 = vmor %vm579, %vm580
  %v582 = vsel %vm581, %v574, %v578
  %v583 = vand.u32 2147483647, %v573
  %vm584 = vcmp.eq.f32.partialorder %v583, 8.507059e+37
  %v585 = vand.u32 %v573, 2147483648
  %v586 = vor.u32 1.1754944e-38, %v585
  %v587 = vsel %vm584, %v586, %v582
  %v588 = vmul.f32 1.0, %v587
  %v589 = vmul.f32 %v568, %v462
  %v590 = vmul.f32 %v549, %v569
  %v591 = vadd.f32 %v589, %v590
  %v592 = vtanh.pop %v591
  %v593 = vmul.f32 %v588, %v592
  %v594 = vpack.c.bf16 %v593, %v593
  %s595 = scalar_lea.vmem %s2, 8
  %596 = vst [vmem:[%s595] sm:$0xf] %v594
  %s597 = scalar_lea.vmem %s0, 48
  %v598 = vld [vmem:[%s597] sm:$0xff]
  %v599 = vld [vmem:[%s597 + $0x8] sm:$0xff]
  %v600 = vunpack.c.l.bf16 %v598
  %v601 = vunpack.c.h.bf16 %v598
  %v602 = vunpack.c.l.bf16 %v599
  %v603 = vunpack.c.h.bf16 %v599
  %604 = vmatpush.bf16.msra.mxu0 %v182
  %605 = vmatpush.bf16.msra.mxu0 %v178
  %606 = vmatpush.bf16.msra.mxu0 %v174
  %607 = vmatpush.bf16.msra.mxu0 %v170
  %608 = vmatpush.bf16.msra.mxu0 %v166
  %609 = vmatpush.bf16.msra.mxu0 %v162
  %610 = vmatpush.bf16.msra.mxu0 %v158
  %611 = vmatpush.bf16.msra.mxu0 %v154
  %612 = vmatmul.bf16.gmra.mxu0 %v594
  %v613 = vpop.f32.mrf.mxu0
  %v614 = vadd.f32 0.0, %v613
  %v615 = vpop.f32.mrf.mxu0
  %616 = vdwg.mxu0
  %617 = vmatpush.bf16.msra.mxu0 %v183
  %618 = vmatpush.bf16.msra.mxu0 %v179
  %619 = vmatpush.bf16.msra.mxu0 %v175
  %620 = vmatpush.bf16.msra.mxu0 %v171
  %621 = vmatpush.bf16.msra.mxu0 %v167
  %622 = vmatpush.bf16.msra.mxu0 %v163
  %623 = vmatpush.bf16.msra.mxu0 %v159
  %624 = vmatpush.bf16.msra.mxu0 %v155
  %625 = vmatmul.bf16.gmra.mxu0 %v594
  %v626 = vpop.f32.mrf.mxu0
  %v627 = vadd.f32 0.0, %v626
  %v628 = vpop.f32.mrf.mxu0
  %629 = vdwg.mxu0
  %630 = vmatpush.bf16.msra.mxu0 %v184
  %631 = vmatpush.bf16.msra.mxu0 %v180
  %632 = vmatpush.bf16.msra.mxu0 %v176
  %633 = vmatpush.bf16.msra.mxu0 %v172
  %634 = vmatpush.bf16.msra.mxu0 %v168
  %635 = vmatpush.bf16.msra.mxu0 %v164
  %636 = vmatpush.bf16.msra.mxu0 %v160
  %637 = vmatpush.bf16.msra.mxu0 %v156
  %638 = vmatmul.bf16.gmra.mxu0 %v594
  %v639 = vpop.f32.mrf.mxu0
  %v640 = vadd.f32 0.0, %v639
  %v641 = vpop.f32.mrf.mxu0
  %642 = vdwg.mxu0
  %643 = vmatpush.bf16.msra.mxu0 %v185
  %644 = vmatpush.bf16.msra.mxu0 %v181
  %645 = vmatpush.bf16.msra.mxu0 %v177
  %646 = vmatpush.bf16.msra.mxu0 %v173
  %647 = vmatpush.bf16.msra.mxu0 %v169
  %648 = vmatpush.bf16.msra.mxu0 %v165
  %649 = vmatpush.bf16.msra.mxu0 %v161
  %650 = vmatpush.bf16.msra.mxu0 %v157
  %651 = vmatmul.bf16.gmra.mxu0 %v594
  %v652 = vpop.f32.mrf.mxu0
  %v653 = vadd.f32 0.0, %v652
  %v654 = vpop.f32.mrf.mxu0
  %655 = vdwg.mxu0
  %v656 = vadd.f32 %v600, %v614
  %v657 = vadd.f32 %v601, %v627
  %v658 = vadd.f32 %v602, %v640
  %v659 = vadd.f32 %v603, %v653
  %v660 = vxor.u32 %v656, 2147483648
  %v661 = vmul.f32 %v660, 1.442695
  %v662 = vpow.pop %v661
  %v663 = vadd.f32 %v662, 1.0
  %v664 = vrcp.pop %v663
  %v665 = vmul.f32 %v663, %v664
  %v666 = vsub.f32 1.0, %v665
  %v667 = vmul.f32 %v664, %v666
  %v668 = vadd.f32 %v664, %v667
  %vm669 = vweird.f32 %v663
  %vm670 = vweird.f32 %v664
  %vm671 = vmor %vm669, %vm670
  %v672 = vsel %vm671, %v664, %v668
  %v673 = vand.u32 2147483647, %v663
  %vm674 = vcmp.eq.f32.partialorder %v673, 8.507059e+37
  %v675 = vand.u32 %v663, 2147483648
  %v676 = vor.u32 1.1754944e-38, %v675
  %v677 = vsel %vm674, %v676, %v672
  %v678 = vmul.f32 1.0, %v677
  %v679 = vxor.u32 %v657, 2147483648
  %v680 = vmul.f32 %v679, 1.442695
  %v681 = vpow.pop %v680
  %v682 = vadd.f32 %v681, 1.0
  %v683 = vrcp.pop %v682
  %v684 = vmul.f32 %v682, %v683
  %v685 = vsub.f32 1.0, %v684
  %v686 = vmul.f32 %v683, %v685
  %v687 = vadd.f32 %v683, %v686
  %vm688 = vweird.f32 %v682
  %vm689 = vweird.f32 %v683
  %vm690 = vmor %vm688, %vm689
  %v691 = vsel %vm690, %v683, %v687
  %v692 = vand.u32 2147483647, %v682
  %vm693 = vcmp.eq.f32.partialorder %v692, 8.507059e+37
  %v694 = vand.u32 %v682, 2147483648
  %v695 = vor.u32 1.1754944e-38, %v694
  %v696 = vsel %vm693, %v695, %v691
  %v697 = vmul.f32 1.0, %v696
  %v698 = vtanh.pop %v658
  %v699 = vxor.u32 %v659, 2147483648
  %v700 = vmul.f32 %v699, 1.442695
  %v701 = vpow.pop %v700
  %v702 = vadd.f32 %v701, 1.0
  %v703 = vrcp.pop %v702
  %v704 = vmul.f32 %v702, %v703
  %v705 = vsub.f32 1.0, %v704
  %v706 = vmul.f32 %v703, %v705
  %v707 = vadd.f32 %v703, %v706
  %vm708 = vweird.f32 %v702
  %vm709 = vweird.f32 %v703
  %vm710 = vmor %vm708, %vm709
  %v711 = vsel %vm710, %v703, %v707
  %v712 = vand.u32 2147483647, %v702
  %vm713 = vcmp.eq.f32.partialorder %v712, 8.507059e+37
  %v714 = vand.u32 %v702, 2147483648
  %v715 = vor.u32 1.1754944e-38, %v714
  %v716 = vsel %vm713, %v715, %v711
  %v717 = vmul.f32 1.0, %v716
  %v718 = vmul.f32 %v697, %v591
  %v719 = vmul.f32 %v678, %v698
  %v720 = vadd.f32 %v718, %v719
  %v721 = vtanh.pop %v720
  %v722 = vmul.f32 %v717, %v721
  %v723 = vpack.c.bf16 %v722, %v722
  %s724 = scalar_lea.vmem %s2, 12
  %725 = vst [vmem:[%s724] sm:$0xf] %v723
  %s726 = scalar_lea.vmem %s0, 64
  %v727 = vld [vmem:[%s726] sm:$0xff]
  %v728 = vld [vmem:[%s726 + $0x8] sm:$0xff]
  %v729 = vunpack.c.l.bf16 %v727
  %v730 = vunpack.c.h.bf16 %v727
  %v731 = vunpack.c.l.bf16 %v728
  %v732 = vunpack.c.h.bf16 %v728
  %733 = vmatpush.bf16.msra.mxu0 %v182
  %734 = vmatpush.bf16.msra.mxu0 %v178
  %735 = vmatpush.bf16.msra.mxu0 %v174
  %736 = vmatpush.bf16.msra.mxu0 %v170
  %737 = vmatpush.bf16.msra.mxu0 %v166
  %738 = vmatpush.bf16.msra.mxu0 %v162
  %739 = vmatpush.bf16.msra.mxu0 %v158
  %740 = vmatpush.bf16.msra.mxu0 %v154
  %741 = vmatmul.bf16.gmra.mxu0 %v723
  %v742 = vpop.f32.mrf.mxu0
  %v743 = vadd.f32 0.0, %v742
  %v744 = vpop.f32.mrf.mxu0
  %745 = vdwg.mxu0
  %746 = vmatpush.bf16.msra.mxu0 %v183
  %747 = vmatpush.bf16.msra.mxu0 %v179
  %748 = vmatpush.bf16.msra.mxu0 %v175
  %749 = vmatpush.bf16.msra.mxu0 %v171
  %750 = vmatpush.bf16.msra.mxu0 %v167
  %751 = vmatpush.bf16.msra.mxu0 %v163
  %752 = vmatpush.bf16.msra.mxu0 %v159
  %753 = vmatpush.bf16.msra.mxu0 %v155
  %754 = vmatmul.bf16.gmra.mxu0 %v723
  %v755 = vpop.f32.mrf.mxu0
  %v756 = vadd.f32 0.0, %v755
  %v757 = vpop.f32.mrf.mxu0
  %758 = vdwg.mxu0
  %759 = vmatpush.bf16.msra.mxu0 %v184
  %760 = vmatpush.bf16.msra.mxu0 %v180
  %761 = vmatpush.bf16.msra.mxu0 %v176
  %762 = vmatpush.bf16.msra.mxu0 %v172
  %763 = vmatpush.bf16.msra.mxu0 %v168
  %764 = vmatpush.bf16.msra.mxu0 %v164
  %765 = vmatpush.bf16.msra.mxu0 %v160
  %766 = vmatpush.bf16.msra.mxu0 %v156
  %767 = vmatmul.bf16.gmra.mxu0 %v723
  %v768 = vpop.f32.mrf.mxu0
  %v769 = vadd.f32 0.0, %v768
  %v770 = vpop.f32.mrf.mxu0
  %771 = vdwg.mxu0
  %772 = vmatpush.bf16.msra.mxu0 %v185
  %773 = vmatpush.bf16.msra.mxu0 %v181
  %774 = vmatpush.bf16.msra.mxu0 %v177
  %775 = vmatpush.bf16.msra.mxu0 %v173
  %776 = vmatpush.bf16.msra.mxu0 %v169
  %777 = vmatpush.bf16.msra.mxu0 %v165
  %778 = vmatpush.bf16.msra.mxu0 %v161
  %779 = vmatpush.bf16.msra.mxu0 %v157
  %780 = vmatmul.bf16.gmra.mxu0 %v723
  %v781 = vpop.f32.mrf.mxu0
  %v782 = vadd.f32 0.0, %v781
  %v783 = vpop.f32.mrf.mxu0
  %784 = vdwg.mxu0
  %v785 = vadd.f32 %v729, %v743
  %v786 = vadd.f32 %v730, %v756
  %v787 = vadd.f32 %v731, %v769
  %v788 = vadd.f32 %v732, %v782
  %v789 = vxor.u32 %v785, 2147483648
  %v790 = vmul.f32 %v789, 1.442695
  %v791 = vpow.pop %v790
  %v792 = vadd.f32 %v791, 1.0
  %v793 = vrcp.pop %v792
  %v794 = vmul.f32 %v792, %v793
  %v795 = vsub.f32 1.0, %v794
  %v796 = vmul.f32 %v793, %v795
  %v797 = vadd.f32 %v793, %v796
  %vm798 = vweird.f32 %v792
  %vm799 = vweird.f32 %v793
  %vm800 = vmor %vm798, %vm799
  %v801 = vsel %vm800, %v793, %v797
  %v802 = vand.u32 2147483647, %v792
  %vm803 = vcmp.eq.f32.partialorder %v802, 8.507059e+37
  %v804 = vand.u32 %v792, 2147483648
  %v805 = vor.u32 1.1754944e-38, %v804
  %v806 = vsel %vm803, %v805, %v801
  %v807 = vmul.f32 1.0, %v806
  %v808 = vxor.u32 %v786, 2147483648
  %v809 = vmul.f32 %v808, 1.442695
  %v810 = vpow.pop %v809
  %v811 = vadd.f32 %v810, 1.0
  %v812 = vrcp.pop %v811
  %v813 = vmul.f32 %v811, %v812
  %v814 = vsub.f32 1.0, %v813
  %v815 = vmul.f32 %v812, %v814
  %v816 = vadd.f32 %v812, %v815
  %vm817 = vweird.f32 %v811
  %vm818 = vweird.f32 %v812
  %vm819 = vmor %vm817, %vm818
  %v820 = vsel %vm819, %v812, %v816
  %v821 = vand.u32 2147483647, %v811
  %vm822 = vcmp.eq.f32.partialorder %v821, 8.507059e+37
  %v823 = vand.u32 %v811, 2147483648
  %v824 = vor.u32 1.1754944e-38, %v823
  %v825 = vsel %vm822, %v824, %v820
  %v826 = vmul.f32 1.0, %v825
  %v827 = vtanh.pop %v787
  %v828 = vxor.u32 %v788, 2147483648
  %v829 = vmul.f32 %v828, 1.442695
  %v830 = vpow.pop %v829
  %v831 = vadd.f32 %v830, 1.0
  %v832 = vrcp.pop %v831
  %v833 = vmul.f32 %v831, %v832
  %v834 = vsub.f32 1.0, %v833
  %v835 = vmul.f32 %v832, %v834
  %v836 = vadd.f32 %v832, %v835
  %vm837 = vweird.f32 %v831
  %vm838 = vweird.f32 %v832
  %vm839 = vmor %vm837, %vm838
  %v840 = vsel %vm839, %v832, %v836
  %v841 = vand.u32 2147483647, %v831
  %vm842 = vcmp.eq.f32.partialorder %v841, 8.507059e+37
  %v843 = vand.u32 %v831, 2147483648
  %v844 = vor.u32 1.1754944e-38, %v843
  %v845 = vsel %vm842, %v844, %v840
  %v846 = vmul.f32 1.0, %v845
  %v847 = vmul.f32 %v826, %v720
  %v848 = vmul.f32 %v807, %v827
  %v849 = vadd.f32 %v847, %v848
  %v850 = vtanh.pop %v849
  %v851 = vmul.f32 %v846, %v850
  %v852 = vpack.c.bf16 %v851, %v851
  %s853 = scalar_lea.vmem %s2, 16
  %854 = vst [vmem:[%s853] sm:$0xf] %v852
  %s855 = scalar_lea.vmem %s0, 80
  %v856 = vld [vmem:[%s855] sm:$0xff]
  %v857 = vld [vmem:[%s855 + $0x8] sm:$0xff]
  %v858 = vunpack.c.l.bf16 %v856
  %v859 = vunpack.c.h.bf16 %v856
  %v860 = vunpack.c.l.bf16 %v857
  %v861 = vunpack.c.h.bf16 %v857
  %862 = vmatpush.bf16.msra.mxu0 %v182
  %863 = vmatpush.bf16.msra.mxu0 %v178
  %864 = vmatpush.bf16.msra.mxu0 %v174
  %865 = vmatpush.bf16.msra.mxu0 %v170
  %866 = vmatpush.bf16.msra.mxu0 %v166
  %867 = vmatpush.bf16.msra.mxu0 %v162
  %868 = vmatpush.bf16.msra.mxu0 %v158
  %869 = vmatpush.bf16.msra.mxu0 %v154
  %870 = vmatmul.bf16.gmra.mxu0 %v852
  %v871 = vpop.f32.mrf.mxu0
  %v872 = vadd.f32 0.0, %v871
  %v873 = vpop.f32.mrf.mxu0
  %874 = vdwg.mxu0
  %875 = vmatpush.bf16.msra.mxu0 %v183
  %876 = vmatpush.bf16.msra.mxu0 %v179
  %877 = vmatpush.bf16.msra.mxu0 %v175
  %878 = vmatpush.bf16.msra.mxu0 %v171
  %879 = vmatpush.bf16.msra.mxu0 %v167
  %880 = vmatpush.bf16.msra.mxu0 %v163
  %881 = vmatpush.bf16.msra.mxu0 %v159
  %882 = vmatpush.bf16.msra.mxu0 %v155
  %883 = vmatmul.bf16.gmra.mxu0 %v852
  %v884 = vpop.f32.mrf.mxu0
  %v885 = vadd.f32 0.0, %v884
  %v886 = vpop.f32.mrf.mxu0
  %887 = vdwg.mxu0
  %888 = vmatpush.bf16.msra.mxu0 %v184
  %889 = vmatpush.bf16.msra.mxu0 %v180
  %890 = vmatpush.bf16.msra.mxu0 %v176
  %891 = vmatpush.bf16.msra.mxu0 %v172
  %892 = vmatpush.bf16.msra.mxu0 %v168
  %893 = vmatpush.bf16.msra.mxu0 %v164
  %894 = vmatpush.bf16.msra.mxu0 %v160
  %895 = vmatpush.bf16.msra.mxu0 %v156
  %896 = vmatmul.bf16.gmra.mxu0 %v852
  %v897 = vpop.f32.mrf.mxu0
  %v898 = vadd.f32 0.0, %v897
  %v899 = vpop.f32.mrf.mxu0
  %900 = vdwg.mxu0
  %901 = vmatpush.bf16.msra.mxu0 %v185
  %902 = vmatpush.bf16.msra.mxu0 %v181
  %903 = vmatpush.bf16.msra.mxu0 %v177
  %904 = vmatpush.bf16.msra.mxu0 %v173
  %905 = vmatpush.bf16.msra.mxu0 %v169
  %906 = vmatpush.bf16.msra.mxu0 %v165
  %907 = vmatpush.bf16.msra.mxu0 %v161
  %908 = vmatpush.bf16.msra.mxu0 %v157
  %909 = vmatmul.bf16.gmra.mxu0 %v852
  %v910 = vpop.f32.mrf.mxu0
  %v911 = vadd.f32 0.0, %v910
  %v912 = vpop.f32.mrf.mxu0
  %913 = vdwg.mxu0
  %v914 = vadd.f32 %v858, %v872
  %v915 = vadd.f32 %v859, %v885
  %v916 = vadd.f32 %v860, %v898
  %v917 = vadd.f32 %v861, %v911
  %v918 = vxor.u32 %v914, 2147483648
  %v919 = vmul.f32 %v918, 1.442695
  %v920 = vpow.pop %v919
  %v921 = vadd.f32 %v920, 1.0
  %v922 = vrcp.pop %v921
  %v923 = vmul.f32 %v921, %v922
  %v924 = vsub.f32 1.0, %v923
  %v925 = vmul.f32 %v922, %v924
  %v926 = vadd.f32 %v922, %v925
  %vm927 = vweird.f32 %v921
  %vm928 = vweird.f32 %v922
  %vm929 = vmor %vm927, %vm928
  %v930 = vsel %vm929, %v922, %v926
  %v931 = vand.u32 2147483647, %v921
  %vm932 = vcmp.eq.f32.partialorder %v931, 8.507059e+37
  %v933 = vand.u32 %v921, 2147483648
  %v934 = vor.u32 1.1754944e-38, %v933
  %v935 = vsel %vm932, %v934, %v930
  %v936 = vmul.f32 1.0, %v935
  %v937 = vxor.u32 %v915, 2147483648
  %v938 = vmul.f32 %v937, 1.442695
  %v939 = vpow.pop %v938
  %v940 = vadd.f32 %v939, 1.0
  %v941 = vrcp.pop %v940
  %v942 = vmul.f32 %v940, %v941
  %v943 = vsub.f32 1.0, %v942
  %v944 = vmul.f32 %v941, %v943
  %v945 = vadd.f32 %v941, %v944
  %vm946 = vweird.f32 %v940
  %vm947 = vweird.f32 %v941
  %vm948 = vmor %vm946, %vm947
  %v949 = vsel %vm948, %v941, %v945
  %v950 = vand.u32 2147483647, %v940
  %vm951 = vcmp.eq.f32.partialorder %v950, 8.507059e+37
  %v952 = vand.u32 %v940, 2147483648
  %v953 = vor.u32 1.1754944e-38, %v952
  %v954 = vsel %vm951, %v953, %v949
  %v955 = vmul.f32 1.0, %v954
  %v956 = vtanh.pop %v916
  %v957 = vxor.u32 %v917, 2147483648
  %v958 = vmul.f32 %v957, 1.442695
  %v959 = vpow.pop %v958
  %v960 = vadd.f32 %v959, 1.0
  %v961 = vrcp.pop %v960
  %v962 = vmul.f32 %v960, %v961
  %v963 = vsub.f32 1.0, %v962
  %v964 = vmul.f32 %v961, %v963
  %v965 = vadd.f32 %v961, %v964
  %vm966 = vweird.f32 %v960
  %vm967 = vweird.f32 %v961
  %vm968 = vmor %vm966, %vm967
  %v969 = vsel %vm968, %v961, %v965
  %v970 = vand.u32 2147483647, %v960
  %vm971 = vcmp.eq.f32.partialorder %v970, 8.507059e+37
  %v972 = vand.u32 %v960, 2147483648
  %v973 = vor.u32 1.1754944e-38, %v972
  %v974 = vsel %vm971, %v973, %v969
  %v975 = vmul.f32 1.0, %v974
  %v976 = vmul.f32 %v955, %v849
  %v977 = vmul.f32 %v936, %v956
  %v978 = vadd.f32 %v976, %v977
  %v979 = vtanh.pop %v978
  %v980 = vmul.f32 %v975, %v979
  %v981 = vpack.c.bf16 %v980, %v980
  %s982 = scalar_lea.vmem %s2, 20
  %983 = vst [vmem:[%s982] sm:$0xf] %v981
  %s984 = scalar_lea.vmem %s0, 96
  %v985 = vld [vmem:[%s984] sm:$0xff]
  %v986 = vld [vmem:[%s984 + $0x8] sm:$0xff]
  %v987 = vunpack.c.l.bf16 %v985
  %v988 = vunpack.c.h.bf16 %v985
  %v989 = vunpack.c.l.bf16 %v986
  %v990 = vunpack.c.h.bf16 %v986
  %991 = vmatpush.bf16.msra.mxu0 %v182
  %992 = vmatpush.bf16.msra.mxu0 %v178
  %993 = vmatpush.bf16.msra.mxu0 %v174
  %994 = vmatpush.bf16.msra.mxu0 %v170
  %995 = vmatpush.bf16.msra.mxu0 %v166
  %996 = vmatpush.bf16.msra.mxu0 %v162
  %997 = vmatpush.bf16.msra.mxu0 %v158
  %998 = vmatpush.bf16.msra.mxu0 %v154
  %999 = vmatmul.bf16.gmra.mxu0 %v981
  %v1000 = vpop.f32.mrf.mxu0
  %v1001 = vadd.f32 0.0, %v1000
  %v1002 = vpop.f32.mrf.mxu0
  %1003 = vdwg.mxu0
  %1004 = vmatpush.bf16.msra.mxu0 %v183
  %1005 = vmatpush.bf16.msra.mxu0 %v179
  %1006 = vmatpush.bf16.msra.mxu0 %v175
  %1007 = vmatpush.bf16.msra.mxu0 %v171
  %1008 = vmatpush.bf16.msra.mxu0 %v167
  %1009 = vmatpush.bf16.msra.mxu0 %v163
  %1010 = vmatpush.bf16.msra.mxu0 %v159
  %1011 = vmatpush.bf16.msra.mxu0 %v155
  %1012 = vmatmul.bf16.gmra.mxu0 %v981
  %v1013 = vpop.f32.mrf.mxu0
  %v1014 = vadd.f32 0.0, %v1013
  %v1015 = vpop.f32.mrf.mxu0
  %1016 = vdwg.mxu0
  %1017 = vmatpush.bf16.msra.mxu0 %v184
  %1018 = vmatpush.bf16.msra.mxu0 %v180
  %1019 = vmatpush.bf16.msra.mxu0 %v176
  %1020 = vmatpush.bf16.msra.mxu0 %v172
  %1021 = vmatpush.bf16.msra.mxu0 %v168
  %1022 = vmatpush.bf16.msra.mxu0 %v164
  %1023 = vmatpush.bf16.msra.mxu0 %v160
  %1024 = vmatpush.bf16.msra.mxu0 %v156
  %1025 = vmatmul.bf16.gmra.mxu0 %v981
  %v1026 = vpop.f32.mrf.mxu0
  %v1027 = vadd.f32 0.0, %v1026
  %v1028 = vpop.f32.mrf.mxu0
  %1029 = vdwg.mxu0
  %1030 = vmatpush.bf16.msra.mxu0 %v185
  %1031 = vmatpush.bf16.msra.mxu0 %v181
  %1032 = vmatpush.bf16.msra.mxu0 %v177
  %1033 = vmatpush.bf16.msra.mxu0 %v173
  %1034 = vmatpush.bf16.msra.mxu0 %v169
  %1035 = vmatpush.bf16.msra.mxu0 %v165
  %1036 = vmatpush.bf16.msra.mxu0 %v161
  %1037 = vmatpush.bf16.msra.mxu0 %v157
  %1038 = vmatmul.bf16.gmra.mxu0 %v981
  %v1039 = vpop.f32.mrf.mxu0
  %v1040 = vadd.f32 0.0, %v1039
  %v1041 = vpop.f32.mrf.mxu0
  %1042 = vdwg.mxu0
  %v1043 = vadd.f32 %v987, %v1001
  %v1044 = vadd.f32 %v988, %v1014
  %v1045 = vadd.f32 %v989, %v1027
  %v1046 = vadd.f32 %v990, %v1040
  %v1047 = vxor.u32 %v1043, 2147483648
  %v1048 = vmul.f32 %v1047, 1.442695
  %v1049 = vpow.pop %v1048
  %v1050 = vadd.f32 %v1049, 1.0
  %v1051 = vrcp.pop %v1050
  %v1052 = vmul.f32 %v1050, %v1051
  %v1053 = vsub.f32 1.0, %v1052
  %v1054 = vmul.f32 %v1051, %v1053
  %v1055 = vadd.f32 %v1051, %v1054
  %vm1056 = vweird.f32 %v1050
  %vm1057 = vweird.f32 %v1051
  %vm1058 = vmor %vm1056, %vm1057
  %v1059 = vsel %vm1058, %v1051, %v1055
  %v1060 = vand.u32 2147483647, %v1050
  %vm1061 = vcmp.eq.f32.partialorder %v1060, 8.507059e+37
  %v1062 = vand.u32 %v1050, 2147483648
  %v1063 = vor.u32 1.1754944e-38, %v1062
  %v1064 = vsel %vm1061, %v1063, %v1059
  %v1065 = vmul.f32 1.0, %v1064
  %v1066 = vxor.u32 %v1044, 2147483648
  %v1067 = vmul.f32 %v1066, 1.442695
  %v1068 = vpow.pop %v1067
  %v1069 = vadd.f32 %v1068, 1.0
  %v1070 = vrcp.pop %v1069
  %v1071 = vmul.f32 %v1069, %v1070
  %v1072 = vsub.f32 1.0, %v1071
  %v1073 = vmul.f32 %v1070, %v1072
  %v1074 = vadd.f32 %v1070, %v1073
  %vm1075 = vweird.f32 %v1069
  %vm1076 = vweird.f32 %v1070
  %vm1077 = vmor %vm1075, %vm1076
  %v1078 = vsel %vm1077, %v1070, %v1074
  %v1079 = vand.u32 2147483647, %v1069
  %vm1080 = vcmp.eq.f32.partialorder %v1079, 8.507059e+37
  %v1081 = vand.u32 %v1069, 2147483648
  %v1082 = vor.u32 1.1754944e-38, %v1081
  %v1083 = vsel %vm1080, %v1082, %v1078
  %v1084 = vmul.f32 1.0, %v1083
  %v1085 = vtanh.pop %v1045
  %v1086 = vxor.u32 %v1046, 2147483648
  %v1087 = vmul.f32 %v1086, 1.442695
  %v1088 = vpow.pop %v1087
  %v1089 = vadd.f32 %v1088, 1.0
  %v1090 = vrcp.pop %v1089
  %v1091 = vmul.f32 %v1089, %v1090
  %v1092 = vsub.f32 1.0, %v1091
  %v1093 = vmul.f32 %v1090, %v1092
  %v1094 = vadd.f32 %v1090, %v1093
  %vm1095 = vweird.f32 %v1089
  %vm1096 = vweird.f32 %v1090
  %vm1097 = vmor %vm1095, %vm1096
  %v1098 = vsel %vm1097, %v1090, %v1094
  %v1099 = vand.u32 2147483647, %v1089
  %vm1100 = vcmp.eq.f32.partialorder %v1099, 8.507059e+37
  %v1101 = vand.u32 %v1089, 2147483648
  %v1102 = vor.u32 1.1754944e-38, %v1101
  %v1103 = vsel %vm1100, %v1102, %v1098
  %v1104 = vmul.f32 1.0, %v1103
  %v1105 = vmul.f32 %v1084, %v978
  %v1106 = vmul.f32 %v1065, %v1085
  %v1107 = vadd.f32 %v1105, %v1106
  %v1108 = vtanh.pop %v1107
  %v1109 = vmul.f32 %v1104, %v1108
  %v1110 = vpack.c.bf16 %v1109, %v1109
  %s1111 = scalar_lea.vmem %s2, 24
  %1112 = vst [vmem:[%s1111] sm:$0xf] %v1110
  %s1113 = scalar_lea.vmem %s0, 112
  %v1114 = vld [vmem:[%s1113] sm:$0xff]
  %v1115 = vld [vmem:[%s1113 + $0x8] sm:$0xff]
  %v1116 = vunpack.c.l.bf16 %v1114
  %v1117 = vunpack.c.h.bf16 %v1114
  %v1118 = vunpack.c.l.bf16 %v1115
  %v1119 = vunpack.c.h.bf16 %v1115
  %1120 = vmatpush.bf16.msra.mxu0 %v182
  %1121 = vmatpush.bf16.msra.mxu0 %v178
  %1122 = vmatpush.bf16.msra.mxu0 %v174
  %1123 = vmatpush.bf16.msra.mxu0 %v170
  %1124 = vmatpush.bf16.msra.mxu0 %v166
  %1125 = vmatpush.bf16.msra.mxu0 %v162
  %1126 = vmatpush.bf16.msra.mxu0 %v158
  %1127 = vmatpush.bf16.msra.mxu0 %v154
  %1128 = vmatmul.bf16.gmra.mxu0 %v1110
  %v1129 = vpop.f32.mrf.mxu0
  %v1130 = vadd.f32 0.0, %v1129
  %v1131 = vpop.f32.mrf.mxu0
  %1132 = vdwg.mxu0
  %1133 = vmatpush.bf16.msra.mxu0 %v183
  %1134 = vmatpush.bf16.msra.mxu0 %v179
  %1135 = vmatpush.bf16.msra.mxu0 %v175
  %1136 = vmatpush.bf16.msra.mxu0 %v171
  %1137 = vmatpush.bf16.msra.mxu0 %v167
  %1138 = vmatpush.bf16.msra.mxu0 %v163
  %1139 = vmatpush.bf16.msra.mxu0 %v159
  %1140 = vmatpush.bf16.msra.mxu0 %v155
  %1141 = vmatmul.bf16.gmra.mxu0 %v1110
  %v1142 = vpop.f32.mrf.mxu0
  %v1143 = vadd.f32 0.0, %v1142
  %v1144 = vpop.f32.mrf.mxu0
  %1145 = vdwg.mxu0
  %1146 = vmatpush.bf16.msra.mxu0 %v184
  %1147 = vmatpush.bf16.msra.mxu0 %v180
  %1148 = vmatpush.bf16.msra.mxu0 %v176
  %1149 = vmatpush.bf16.msra.mxu0 %v172
  %1150 = vmatpush.bf16.msra.mxu0 %v168
  %1151 = vmatpush.bf16.msra.mxu0 %v164
  %1152 = vmatpush.bf16.msra.mxu0 %v160
  %1153 = vmatpush.bf16.msra.mxu0 %v156
  %1154 = vmatmul.bf16.gmra.mxu0 %v1110
  %v1155 = vpop.f32.mrf.mxu0
  %v1156 = vadd.f32 0.0, %v1155
  %v1157 = vpop.f32.mrf.mxu0
  %1158 = vdwg.mxu0
  %1159 = vmatpush.bf16.msra.mxu0 %v185
  %1160 = vmatpush.bf16.msra.mxu0 %v181
  %1161 = vmatpush.bf16.msra.mxu0 %v177
  %1162 = vmatpush.bf16.msra.mxu0 %v173
  %1163 = vmatpush.bf16.msra.mxu0 %v169
  %1164 = vmatpush.bf16.msra.mxu0 %v165
  %1165 = vmatpush.bf16.msra.mxu0 %v161
  %1166 = vmatpush.bf16.msra.mxu0 %v157
  %1167 = vmatmul.bf16.gmra.mxu0 %v1110
  %v1168 = vpop.f32.mrf.mxu0
  %v1169 = vadd.f32 0.0, %v1168
  %v1170 = vpop.f32.mrf.mxu0
  %1171 = vdwg.mxu0
  %v1172 = vadd.f32 %v1116, %v1130
  %v1173 = vadd.f32 %v1117, %v1143
  %v1174 = vadd.f32 %v1118, %v1156
  %v1175 = vadd.f32 %v1119, %v1169
  %v1176 = vxor.u32 %v1172, 2147483648
  %v1177 = vmul.f32 %v1176, 1.442695
  %v1178 = vpow.pop %v1177
  %v1179 = vadd.f32 %v1178, 1.0
  %v1180 = vrcp.pop %v1179
  %v1181 = vmul.f32 %v1179, %v1180
  %v1182 = vsub.f32 1.0, %v1181
  %v1183 = vmul.f32 %v1180, %v1182
  %v1184 = vadd.f32 %v1180, %v1183
  %vm1185 = vweird.f32 %v1179
  %vm1186 = vweird.f32 %v1180
  %vm1187 = vmor %vm1185, %vm1186
  %v1188 = vsel %vm1187, %v1180, %v1184
  %v1189 = vand.u32 2147483647, %v1179
  %vm1190 = vcmp.eq.f32.partialorder %v1189, 8.507059e+37
  %v1191 = vand.u32 %v1179, 2147483648
  %v1192 = vor.u32 1.1754944e-38, %v1191
  %v1193 = vsel %vm1190, %v1192, %v1188
  %v1194 = vmul.f32 1.0, %v1193
  %v1195 = vxor.u32 %v1173, 2147483648
  %v1196 = vmul.f32 %v1195, 1.442695
  %v1197 = vpow.pop %v1196
  %v1198 = vadd.f32 %v1197, 1.0
  %v1199 = vrcp.pop %v1198
  %v1200 = vmul.f32 %v1198, %v1199
  %v1201 = vsub.f32 1.0, %v1200
  %v1202 = vmul.f32 %v1199, %v1201
  %v1203 = vadd.f32 %v1199, %v1202
  %vm1204 = vweird.f32 %v1198
  %vm1205 = vweird.f32 %v1199
  %vm1206 = vmor %vm1204, %vm1205
  %v1207 = vsel %vm1206, %v1199, %v1203
  %v1208 = vand.u32 2147483647, %v1198
  %vm1209 = vcmp.eq.f32.partialorder %v1208, 8.507059e+37
  %v1210 = vand.u32 %v1198, 2147483648
  %v1211 = vor.u32 1.1754944e-38, %v1210
  %v1212 = vsel %vm1209, %v1211, %v1207
  %v1213 = vmul.f32 1.0, %v1212
  %v1214 = vtanh.pop %v1174
  %v1215 = vxor.u32 %v1175, 2147483648
  %v1216 = vmul.f32 %v1215, 1.442695
  %v1217 = vpow.pop %v1216
  %v1218 = vadd.f32 %v1217, 1.0
  %v1219 = vrcp.pop %v1218
  %v1220 = vmul.f32 %v1218, %v1219
  %v1221 = vsub.f32 1.0, %v1220
  %v1222 = vmul.f32 %v1219, %v1221
  %v1223 = vadd.f32 %v1219, %v1222
  %vm1224 = vweird.f32 %v1218
  %vm1225 = vweird.f32 %v1219
  %vm1226 = vmor %vm1224, %vm1225
  %v1227 = vsel %vm1226, %v1219, %v1223
  %v1228 = vand.u32 2147483647, %v1218
  %vm1229 = vcmp.eq.f32.partialorder %v1228, 8.507059e+37
  %v1230 = vand.u32 %v1218, 2147483648
  %v1231 = vor.u32 1.1754944e-38, %v1230
  %v1232 = vsel %vm1229, %v1231, %v1227
  %v1233 = vmul.f32 1.0, %v1232
  %v1234 = vmul.f32 %v1213, %v1107
  %v1235 = vmul.f32 %v1194, %v1214
  %v1236 = vadd.f32 %v1234, %v1235
  %v1237 = vtanh.pop %v1236
  %v1238 = vmul.f32 %v1233, %v1237
  %v1239 = vpack.c.bf16 %v1238, %v1238
  %s1240 = scalar_lea.vmem %s2, 28
  %1241 = vst [vmem:[%s1240] sm:$0xf] %v1239
  %s1242 = scalar_lea.vmem %s0, 128
  %v1243 = vld [vmem:[%s1242] sm:$0xff]
  %v1244 = vld [vmem:[%s1242 + $0x8] sm:$0xff]
  %v1245 = vunpack.c.l.bf16 %v1243
  %v1246 = vunpack.c.h.bf16 %v1243
  %v1247 = vunpack.c.l.bf16 %v1244
  %v1248 = vunpack.c.h.bf16 %v1244
  %1249 = vmatpush.bf16.msra.mxu0 %v182
  %1250 = vmatpush.bf16.msra.mxu0 %v178
  %1251 = vmatpush.bf16.msra.mxu0 %v174
  %1252 = vmatpush.bf16.msra.mxu0 %v170
  %1253 = vmatpush.bf16.msra.mxu0 %v166
  %1254 = vmatpush.bf16.msra.mxu0 %v162
  %1255 = vmatpush.bf16.msra.mxu0 %v158
  %1256 = vmatpush.bf16.msra.mxu0 %v154
  %1257 = vmatmul.bf16.gmra.mxu0 %v1239
  %v1258 = vpop.f32.mrf.mxu0
  %v1259 = vadd.f32 0.0, %v1258
  %v1260 = vpop.f32.mrf.mxu0
  %1261 = vdwg.mxu0
  %1262 = vmatpush.bf16.msra.mxu0 %v183
  %1263 = vmatpush.bf16.msra.mxu0 %v179
  %1264 = vmatpush.bf16.msra.mxu0 %v175
  %1265 = vmatpush.bf16.msra.mxu0 %v171
  %1266 = vmatpush.bf16.msra.mxu0 %v167
  %1267 = vmatpush.bf16.msra.mxu0 %v163
  %1268 = vmatpush.bf16.msra.mxu0 %v159
  %1269 = vmatpush.bf16.msra.mxu0 %v155
  %1270 = vmatmul.bf16.gmra.mxu0 %v1239
  %v1271 = vpop.f32.mrf.mxu0
  %v1272 = vadd.f32 0.0, %v1271
  %v1273 = vpop.f32.mrf.mxu0
  %1274 = vdwg.mxu0
  %1275 = vmatpush.bf16.msra.mxu0 %v184
  %1276 = vmatpush.bf16.msra.mxu0 %v180
  %1277 = vmatpush.bf16.msra.mxu0 %v176
  %1278 = vmatpush.bf16.msra.mxu0 %v172
  %1279 = vmatpush.bf16.msra.mxu0 %v168
  %1280 = vmatpush.bf16.msra.mxu0 %v164
  %1281 = vmatpush.bf16.msra.mxu0 %v160
  %1282 = vmatpush.bf16.msra.mxu0 %v156
  %1283 = vmatmul.bf16.gmra.mxu0 %v1239
  %v1284 = vpop.f32.mrf.mxu0
  %v1285 = vadd.f32 0.0, %v1284
  %v1286 = vpop.f32.mrf.mxu0
  %1287 = vdwg.mxu0
  %1288 = vmatpush.bf16.msra.mxu0 %v185
  %1289 = vmatpush.bf16.msra.mxu0 %v181
  %1290 = vmatpush.bf16.msra.mxu0 %v177
  %1291 = vmatpush.bf16.msra.mxu0 %v173
  %1292 = vmatpush.bf16.msra.mxu0 %v169
  %1293 = vmatpush.bf16.msra.mxu0 %v165
  %1294 = vmatpush.bf16.msra.mxu0 %v161
  %1295 = vmatpush.bf16.msra.mxu0 %v157
  %1296 = vmatmul.bf16.gmra.mxu0 %v1239
  %v1297 = vpop.f32.mrf.mxu0
  %v1298 = vadd.f32 0.0, %v1297
  %v1299 = vpop.f32.mrf.mxu0
  %1300 = vdwg.mxu0
  %v1301 = vadd.f32 %v1245, %v1259
  %v1302 = vadd.f32 %v1246, %v1272
  %v1303 = vadd.f32 %v1247, %v1285
  %v1304 = vadd.f32 %v1248, %v1298
  %v1305 = vxor.u32 %v1301, 2147483648
  %v1306 = vmul.f32 %v1305, 1.442695
  %v1307 = vpow.pop %v1306
  %v1308 = vadd.f32 %v1307, 1.0
  %v1309 = vrcp.pop %v1308
  %v1310 = vmul.f32 %v1308, %v1309
  %v1311 = vsub.f32 1.0, %v1310
  %v1312 = vmul.f32 %v1309, %v1311
  %v1313 = vadd.f32 %v1309, %v1312
  %vm1314 = vweird.f32 %v1308
  %vm1315 = vweird.f32 %v1309
  %vm1316 = vmor %vm1314, %vm1315
  %v1317 = vsel %vm1316, %v1309, %v1313
  %v1318 = vand.u32 2147483647, %v1308
  %vm1319 = vcmp.eq.f32.partialorder %v1318, 8.507059e+37
  %v1320 = vand.u32 %v1308, 2147483648
  %v1321 = vor.u32 1.1754944e-38, %v1320
  %v1322 = vsel %vm1319, %v1321, %v1317
  %v1323 = vmul.f32 1.0, %v1322
  %v1324 = vxor.u32 %v1302, 2147483648
  %v1325 = vmul.f32 %v1324, 1.442695
  %v1326 = vpow.pop %v1325
  %v1327 = vadd.f32 %v1326, 1.0
  %v1328 = vrcp.pop %v1327
  %v1329 = vmul.f32 %v1327, %v1328
  %v1330 = vsub.f32 1.0, %v1329
  %v1331 = vmul.f32 %v1328, %v1330
  %v1332 = vadd.f32 %v1328, %v1331
  %vm1333 = vweird.f32 %v1327
  %vm1334 = vweird.f32 %v1328
  %vm1335 = vmor %vm1333, %vm1334
  %v1336 = vsel %vm1335, %v1328, %v1332
  %v1337 = vand.u32 2147483647, %v1327
  %vm1338 = vcmp.eq.f32.partialorder %v1337, 8.507059e+37
  %v1339 = vand.u32 %v1327, 2147483648
  %v1340 = vor.u32 1.1754944e-38, %v1339
  %v1341 = vsel %vm1338, %v1340, %v1336
  %v1342 = vmul.f32 1.0, %v1341
  %v1343 = vtanh.pop %v1303
  %v1344 = vxor.u32 %v1304, 2147483648
  %v1345 = vmul.f32 %v1344, 1.442695
  %v1346 = vpow.pop %v1345
  %v1347 = vadd.f32 %v1346, 1.0
  %v1348 = vrcp.pop %v1347
  %v1349 = vmul.f32 %v1347, %v1348
  %v1350 = vsub.f32 1.0, %v1349
  %v1351 = vmul.f32 %v1348, %v1350
  %v1352 = vadd.f32 %v1348, %v1351
  %vm1353 = vweird.f32 %v1347
  %vm1354 = vweird.f32 %v1348
  %vm1355 = vmor %vm1353, %vm1354
  %v1356 = vsel %vm1355, %v1348, %v1352
  %v1357 = vand.u32 2147483647, %v1347
  %vm1358 = vcmp.eq.f32.partialorder %v1357, 8.507059e+37
  %v1359 = vand.u32 %v1347, 2147483648
  %v1360 = vor.u32 1.1754944e-38, %v1359
  %v1361 = vsel %vm1358, %v1360, %v1356
  %v1362 = vmul.f32 1.0, %v1361
  %v1363 = vmul.f32 %v1342, %v1236
  %v1364 = vmul.f32 %v1323, %v1343
  %v1365 = vadd.f32 %v1363, %v1364
  %v1366 = vtanh.pop %v1365
  %v1367 = vmul.f32 %v1362, %v1366
  %v1368 = vpack.c.bf16 %v1367, %v1367
  %s1369 = scalar_lea.vmem %s2, 32
  %1370 = vst [vmem:[%s1369] sm:$0xf] %v1368
  %s1371 = scalar_lea.vmem %s0, 144
  %v1372 = vld [vmem:[%s1371] sm:$0xff]
  %v1373 = vld [vmem:[%s1371 + $0x8] sm:$0xff]
  %v1374 = vunpack.c.l.bf16 %v1372
  %v1375 = vunpack.c.h.bf16 %v1372
  %v1376 = vunpack.c.l.bf16 %v1373
  %v1377 = vunpack.c.h.bf16 %v1373
  %1378 = vmatpush.bf16.msra.mxu0 %v182
  %1379 = vmatpush.bf16.msra.mxu0 %v178
  %1380 = vmatpush.bf16.msra.mxu0 %v174
  %1381 = vmatpush.bf16.msra.mxu0 %v170
  %1382 = vmatpush.bf16.msra.mxu0 %v166
  %1383 = vmatpush.bf16.msra.mxu0 %v162
  %1384 = vmatpush.bf16.msra.mxu0 %v158
  %1385 = vmatpush.bf16.msra.mxu0 %v154
  %1386 = vmatmul.bf16.gmra.mxu0 %v1368
  %v1387 = vpop.f32.mrf.mxu0
  %v1388 = vadd.f32 0.0, %v1387
  %v1389 = vpop.f32.mrf.mxu0
  %1390 = vdwg.mxu0
  %1391 = vmatpush.bf16.msra.mxu0 %v183
  %1392 = vmatpush.bf16.msra.mxu0 %v179
  %1393 = vmatpush.bf16.msra.mxu0 %v175
  %1394 = vmatpush.bf16.msra.mxu0 %v171
  %1395 = vmatpush.bf16.msra.mxu0 %v167
  %1396 = vmatpush.bf16.msra.mxu0 %v163
  %1397 = vmatpush.bf16.msra.mxu0 %v159
  %1398 = vmatpush.bf16.msra.mxu0 %v155
  %1399 = vmatmul.bf16.gmra.mxu0 %v1368
  %v1400 = vpop.f32.mrf.mxu0
  %v1401 = vadd.f32 0.0, %v1400
  %v1402 = vpop.f32.mrf.mxu0
  %1403 = vdwg.mxu0
  %1404 = vmatpush.bf16.msra.mxu0 %v184
  %1405 = vmatpush.bf16.msra.mxu0 %v180
  %1406 = vmatpush.bf16.msra.mxu0 %v176
  %1407 = vmatpush.bf16.msra.mxu0 %v172
  %1408 = vmatpush.bf16.msra.mxu0 %v168
  %1409 = vmatpush.bf16.msra.mxu0 %v164
  %1410 = vmatpush.bf16.msra.mxu0 %v160
  %1411 = vmatpush.bf16.msra.mxu0 %v156
  %1412 = vmatmul.bf16.gmra.mxu0 %v1368
  %v1413 = vpop.f32.mrf.mxu0
  %v1414 = vadd.f32 0.0, %v1413
  %v1415 = vpop.f32.mrf.mxu0
  %1416 = vdwg.mxu0
  %1417 = vmatpush.bf16.msra.mxu0 %v185
  %1418 = vmatpush.bf16.msra.mxu0 %v181
  %1419 = vmatpush.bf16.msra.mxu0 %v177
  %1420 = vmatpush.bf16.msra.mxu0 %v173
  %1421 = vmatpush.bf16.msra.mxu0 %v169
  %1422 = vmatpush.bf16.msra.mxu0 %v165
  %1423 = vmatpush.bf16.msra.mxu0 %v161
  %1424 = vmatpush.bf16.msra.mxu0 %v157
  %1425 = vmatmul.bf16.gmra.mxu0 %v1368
  %v1426 = vpop.f32.mrf.mxu0
  %v1427 = vadd.f32 0.0, %v1426
  %v1428 = vpop.f32.mrf.mxu0
  %1429 = vdwg.mxu0
  %v1430 = vadd.f32 %v1374, %v1388
  %v1431 = vadd.f32 %v1375, %v1401
  %v1432 = vadd.f32 %v1376, %v1414
  %v1433 = vadd.f32 %v1377, %v1427
  %v1434 = vxor.u32 %v1430, 2147483648
  %v1435 = vmul.f32 %v1434, 1.442695
  %v1436 = vpow.pop %v1435
  %v1437 = vadd.f32 %v1436, 1.0
  %v1438 = vrcp.pop %v1437
  %v1439 = vmul.f32 %v1437, %v1438
  %v1440 = vsub.f32 1.0, %v1439
  %v1441 = vmul.f32 %v1438, %v1440
  %v1442 = vadd.f32 %v1438, %v1441
  %vm1443 = vweird.f32 %v1437
  %vm1444 = vweird.f32 %v1438
  %vm1445 = vmor %vm1443, %vm1444
  %v1446 = vsel %vm1445, %v1438, %v1442
  %v1447 = vand.u32 2147483647, %v1437
  %vm1448 = vcmp.eq.f32.partialorder %v1447, 8.507059e+37
  %v1449 = vand.u32 %v1437, 2147483648
  %v1450 = vor.u32 1.1754944e-38, %v1449
  %v1451 = vsel %vm1448, %v1450, %v1446
  %v1452 = vmul.f32 1.0, %v1451
  %v1453 = vxor.u32 %v1431, 2147483648
  %v1454 = vmul.f32 %v1453, 1.442695
  %v1455 = vpow.pop %v1454
  %v1456 = vadd.f32 %v1455, 1.0
  %v1457 = vrcp.pop %v1456
  %v1458 = vmul.f32 %v1456, %v1457
  %v1459 = vsub.f32 1.0, %v1458
  %v1460 = vmul.f32 %v1457, %v1459
  %v1461 = vadd.f32 %v1457, %v1460
  %vm1462 = vweird.f32 %v1456
  %vm1463 = vweird.f32 %v1457
  %vm1464 = vmor %vm1462, %vm1463
  %v1465 = vsel %vm1464, %v1457, %v1461
  %v1466 = vand.u32 2147483647, %v1456
  %vm1467 = vcmp.eq.f32.partialorder %v1466, 8.507059e+37
  %v1468 = vand.u32 %v1456, 2147483648
  %v1469 = vor.u32 1.1754944e-38, %v1468
  %v1470 = vsel %vm1467, %v1469, %v1465
  %v1471 = vmul.f32 1.0, %v1470
  %v1472 = vtanh.pop %v1432
  %v1473 = vxor.u32 %v1433, 2147483648
  %v1474 = vmul.f32 %v1473, 1.442695
  %v1475 = vpow.pop %v1474
  %v1476 = vadd.f32 %v1475, 1.0
  %v1477 = vrcp.pop %v1476
  %v1478 = vmul.f32 %v1476, %v1477
  %v1479 = vsub.f32 1.0, %v1478
  %v1480 = vmul.f32 %v1477, %v1479
  %v1481 = vadd.f32 %v1477, %v1480
  %vm1482 = vweird.f32 %v1476
  %vm1483 = vweird.f32 %v1477
  %vm1484 = vmor %vm1482, %vm1483
  %v1485 = vsel %vm1484, %v1477, %v1481
  %v1486 = vand.u32 2147483647, %v1476
  %vm1487 = vcmp.eq.f32.partialorder %v1486, 8.507059e+37
  %v1488 = vand.u32 %v1476, 2147483648
  %v1489 = vor.u32 1.1754944e-38, %v1488
  %v1490 = vsel %vm1487, %v1489, %v1485
  %v1491 = vmul.f32 1.0, %v1490
  %v1492 = vmul.f32 %v1471, %v1365
  %v1493 = vmul.f32 %v1452, %v1472
  %v1494 = vadd.f32 %v1492, %v1493
  %v1495 = vtanh.pop %v1494
  %v1496 = vmul.f32 %v1491, %v1495
  %v1497 = vpack.c.bf16 %v1496, %v1496
  %s1498 = scalar_lea.vmem %s2, 36
  %1499 = vst [vmem:[%s1498] sm:$0xf] %v1497
  %s1500 = scalar_lea.vmem %s0, 160
  %v1501 = vld [vmem:[%s1500] sm:$0xff]
  %v1502 = vld [vmem:[%s1500 + $0x8] sm:$0xff]
  %v1503 = vunpack.c.l.bf16 %v1501
  %v1504 = vunpack.c.h.bf16 %v1501
  %v1505 = vunpack.c.l.bf16 %v1502
  %v1506 = vunpack.c.h.bf16 %v1502
  %1507 = vmatpush.bf16.msra.mxu0 %v182
  %1508 = vmatpush.bf16.msra.mxu0 %v178
  %1509 = vmatpush.bf16.msra.mxu0 %v174
  %1510 = vmatpush.bf16.msra.mxu0 %v170
  %1511 = vmatpush.bf16.msra.mxu0 %v166
  %1512 = vmatpush.bf16.msra.mxu0 %v162
  %1513 = vmatpush.bf16.msra.mxu0 %v158
  %1514 = vmatpush.bf16.msra.mxu0 %v154
  %1515 = vmatmul.bf16.gmra.mxu0 %v1497
  %v1516 = vpop.f32.mrf.mxu0
  %v1517 = vadd.f32 0.0, %v1516
  %v1518 = vpop.f32.mrf.mxu0
  %1519 = vdwg.mxu0
  %1520 = vmatpush.bf16.msra.mxu0 %v183
  %1521 = vmatpush.bf16.msra.mxu0 %v179
  %1522 = vmatpush.bf16.msra.mxu0 %v175
  %1523 = vmatpush.bf16.msra.mxu0 %v171
  %1524 = vmatpush.bf16.msra.mxu0 %v167
  %1525 = vmatpush.bf16.msra.mxu0 %v163
  %1526 = vmatpush.bf16.msra.mxu0 %v159
  %1527 = vmatpush.bf16.msra.mxu0 %v155
  %1528 = vmatmul.bf16.gmra.mxu0 %v1497
  %v1529 = vpop.f32.mrf.mxu0
  %v1530 = vadd.f32 0.0, %v1529
  %v1531 = vpop.f32.mrf.mxu0
  %1532 = vdwg.mxu0
  %1533 = vmatpush.bf16.msra.mxu0 %v184
  %1534 = vmatpush.bf16.msra.mxu0 %v180
  %1535 = vmatpush.bf16.msra.mxu0 %v176
  %1536 = vmatpush.bf16.msra.mxu0 %v172
  %1537 = vmatpush.bf16.msra.mxu0 %v168
  %1538 = vmatpush.bf16.msra.mxu0 %v164
  %1539 = vmatpush.bf16.msra.mxu0 %v160
  %1540 = vmatpush.bf16.msra.mxu0 %v156
  %1541 = vmatmul.bf16.gmra.mxu0 %v1497
  %v1542 = vpop.f32.mrf.mxu0
  %v1543 = vadd.f32 0.0, %v1542
  %v1544 = vpop.f32.mrf.mxu0
  %1545 = vdwg.mxu0
  %1546 = vmatpush.bf16.msra.mxu0 %v185
  %1547 = vmatpush.bf16.msra.mxu0 %v181
  %1548 = vmatpush.bf16.msra.mxu0 %v177
  %1549 = vmatpush.bf16.msra.mxu0 %v173
  %1550 = vmatpush.bf16.msra.mxu0 %v169
  %1551 = vmatpush.bf16.msra.mxu0 %v165
  %1552 = vmatpush.bf16.msra.mxu0 %v161
  %1553 = vmatpush.bf16.msra.mxu0 %v157
  %1554 = vmatmul.bf16.gmra.mxu0 %v1497
  %v1555 = vpop.f32.mrf.mxu0
  %v1556 = vadd.f32 0.0, %v1555
  %v1557 = vpop.f32.mrf.mxu0
  %1558 = vdwg.mxu0
  %v1559 = vadd.f32 %v1503, %v1517
  %v1560 = vadd.f32 %v1504, %v1530
  %v1561 = vadd.f32 %v1505, %v1543
  %v1562 = vadd.f32 %v1506, %v1556
  %v1563 = vxor.u32 %v1559, 2147483648
  %v1564 = vmul.f32 %v1563, 1.442695
  %v1565 = vpow.pop %v1564
  %v1566 = vadd.f32 %v1565, 1.0
  %v1567 = vrcp.pop %v1566
  %v1568 = vmul.f32 %v1566, %v1567
  %v1569 = vsub.f32 1.0, %v1568
  %v1570 = vmul.f32 %v1567, %v1569
  %v1571 = vadd.f32 %v1567, %v1570
  %vm1572 = vweird.f32 %v1566
  %vm1573 = vweird.f32 %v1567
  %vm1574 = vmor %vm1572, %vm1573
  %v1575 = vsel %vm1574, %v1567, %v1571
  %v1576 = vand.u32 2147483647, %v1566
  %vm1577 = vcmp.eq.f32.partialorder %v1576, 8.507059e+37
  %v1578 = vand.u32 %v1566, 2147483648
  %v1579 = vor.u32 1.1754944e-38, %v1578
  %v1580 = vsel %vm1577, %v1579, %v1575
  %v1581 = vmul.f32 1.0, %v1580
  %v1582 = vxor.u32 %v1560, 2147483648
  %v1583 = vmul.f32 %v1582, 1.442695
  %v1584 = vpow.pop %v1583
  %v1585 = vadd.f32 %v1584, 1.0
  %v1586 = vrcp.pop %v1585
  %v1587 = vmul.f32 %v1585, %v1586
  %v1588 = vsub.f32 1.0, %v1587
  %v1589 = vmul.f32 %v1586, %v1588
  %v1590 = vadd.f32 %v1586, %v1589
  %vm1591 = vweird.f32 %v1585
  %vm1592 = vweird.f32 %v1586
  %vm1593 = vmor %vm1591, %vm1592
  %v1594 = vsel %vm1593, %v1586, %v1590
  %v1595 = vand.u32 2147483647, %v1585
  %vm1596 = vcmp.eq.f32.partialorder %v1595, 8.507059e+37
  %v1597 = vand.u32 %v1585, 2147483648
  %v1598 = vor.u32 1.1754944e-38, %v1597
  %v1599 = vsel %vm1596, %v1598, %v1594
  %v1600 = vmul.f32 1.0, %v1599
  %v1601 = vtanh.pop %v1561
  %v1602 = vxor.u32 %v1562, 2147483648
  %v1603 = vmul.f32 %v1602, 1.442695
  %v1604 = vpow.pop %v1603
  %v1605 = vadd.f32 %v1604, 1.0
  %v1606 = vrcp.pop %v1605
  %v1607 = vmul.f32 %v1605, %v1606
  %v1608 = vsub.f32 1.0, %v1607
  %v1609 = vmul.f32 %v1606, %v1608
  %v1610 = vadd.f32 %v1606, %v1609
  %vm1611 = vweird.f32 %v1605
  %vm1612 = vweird.f32 %v1606
  %vm1613 = vmor %vm1611, %vm1612
  %v1614 = vsel %vm1613, %v1606, %v1610
  %v1615 = vand.u32 2147483647, %v1605
  %vm1616 = vcmp.eq.f32.partialorder %v1615, 8.507059e+37
  %v1617 = vand.u32 %v1605, 2147483648
  %v1618 = vor.u32 1.1754944e-38, %v1617
  %v1619 = vsel %vm1616, %v1618, %v1614
  %v1620 = vmul.f32 1.0, %v1619
  %v1621 = vmul.f32 %v1600, %v1494
  %v1622 = vmul.f32 %v1581, %v1601
  %v1623 = vadd.f32 %v1621, %v1622
  %v1624 = vtanh.pop %v1623
  %v1625 = vmul.f32 %v1620, %v1624
  %v1626 = vpack.c.bf16 %v1625, %v1625
  %s1627 = scalar_lea.vmem %s2, 40
  %1628 = vst [vmem:[%s1627] sm:$0xf] %v1626
  %s1629 = scalar_lea.vmem %s0, 176
  %v1630 = vld [vmem:[%s1629] sm:$0xff]
  %v1631 = vld [vmem:[%s1629 + $0x8] sm:$0xff]
  %v1632 = vunpack.c.l.bf16 %v1630
  %v1633 = vunpack.c.h.bf16 %v1630
  %v1634 = vunpack.c.l.bf16 %v1631
  %v1635 = vunpack.c.h.bf16 %v1631
  %1636 = vmatpush.bf16.msra.mxu0 %v182
  %1637 = vmatpush.bf16.msra.mxu0 %v178
  %1638 = vmatpush.bf16.msra.mxu0 %v174
  %1639 = vmatpush.bf16.msra.mxu0 %v170
  %1640 = vmatpush.bf16.msra.mxu0 %v166
  %1641 = vmatpush.bf16.msra.mxu0 %v162
  %1642 = vmatpush.bf16.msra.mxu0 %v158
  %1643 = vmatpush.bf16.msra.mxu0 %v154
  %1644 = vmatmul.bf16.gmra.mxu0 %v1626
  %v1645 = vpop.f32.mrf.mxu0
  %v1646 = vadd.f32 0.0, %v1645
  %v1647 = vpop.f32.mrf.mxu0
  %1648 = vdwg.mxu0
  %1649 = vmatpush.bf16.msra.mxu0 %v183
  %1650 = vmatpush.bf16.msra.mxu0 %v179
  %1651 = vmatpush.bf16.msra.mxu0 %v175
  %1652 = vmatpush.bf16.msra.mxu0 %v171
  %1653 = vmatpush.bf16.msra.mxu0 %v167
  %1654 = vmatpush.bf16.msra.mxu0 %v163
  %1655 = vmatpush.bf16.msra.mxu0 %v159
  %1656 = vmatpush.bf16.msra.mxu0 %v155
  %1657 = vmatmul.bf16.gmra.mxu0 %v1626
  %v1658 = vpop.f32.mrf.mxu0
  %v1659 = vadd.f32 0.0, %v1658
  %v1660 = vpop.f32.mrf.mxu0
  %1661 = vdwg.mxu0
  %1662 = vmatpush.bf16.msra.mxu0 %v184
  %1663 = vmatpush.bf16.msra.mxu0 %v180
  %1664 = vmatpush.bf16.msra.mxu0 %v176
  %1665 = vmatpush.bf16.msra.mxu0 %v172
  %1666 = vmatpush.bf16.msra.mxu0 %v168
  %1667 = vmatpush.bf16.msra.mxu0 %v164
  %1668 = vmatpush.bf16.msra.mxu0 %v160
  %1669 = vmatpush.bf16.msra.mxu0 %v156
  %1670 = vmatmul.bf16.gmra.mxu0 %v1626
  %v1671 = vpop.f32.mrf.mxu0
  %v1672 = vadd.f32 0.0, %v1671
  %v1673 = vpop.f32.mrf.mxu0
  %1674 = vdwg.mxu0
  %1675 = vmatpush.bf16.msra.mxu0 %v185
  %1676 = vmatpush.bf16.msra.mxu0 %v181
  %1677 = vmatpush.bf16.msra.mxu0 %v177
  %1678 = vmatpush.bf16.msra.mxu0 %v173
  %1679 = vmatpush.bf16.msra.mxu0 %v169
  %1680 = vmatpush.bf16.msra.mxu0 %v165
  %1681 = vmatpush.bf16.msra.mxu0 %v161
  %1682 = vmatpush.bf16.msra.mxu0 %v157
  %1683 = vmatmul.bf16.gmra.mxu0 %v1626
  %v1684 = vpop.f32.mrf.mxu0
  %v1685 = vadd.f32 0.0, %v1684
  %v1686 = vpop.f32.mrf.mxu0
  %1687 = vdwg.mxu0
  %v1688 = vadd.f32 %v1632, %v1646
  %v1689 = vadd.f32 %v1633, %v1659
  %v1690 = vadd.f32 %v1634, %v1672
  %v1691 = vadd.f32 %v1635, %v1685
  %v1692 = vxor.u32 %v1688, 2147483648
  %v1693 = vmul.f32 %v1692, 1.442695
  %v1694 = vpow.pop %v1693
  %v1695 = vadd.f32 %v1694, 1.0
  %v1696 = vrcp.pop %v1695
  %v1697 = vmul.f32 %v1695, %v1696
  %v1698 = vsub.f32 1.0, %v1697
  %v1699 = vmul.f32 %v1696, %v1698
  %v1700 = vadd.f32 %v1696, %v1699
  %vm1701 = vweird.f32 %v1695
  %vm1702 = vweird.f32 %v1696
  %vm1703 = vmor %vm1701, %vm1702
  %v1704 = vsel %vm1703, %v1696, %v1700
  %v1705 = vand.u32 2147483647, %v1695
  %vm1706 = vcmp.eq.f32.partialorder %v1705, 8.507059e+37
  %v1707 = vand.u32 %v1695, 2147483648
  %v1708 = vor.u32 1.1754944e-38, %v1707
  %v1709 = vsel %vm1706, %v1708, %v1704
  %v1710 = vmul.f32 1.0, %v1709
  %v1711 = vxor.u32 %v1689, 2147483648
  %v1712 = vmul.f32 %v1711, 1.442695
  %v1713 = vpow.pop %v1712
  %v1714 = vadd.f32 %v1713, 1.0
  %v1715 = vrcp.pop %v1714
  %v1716 = vmul.f32 %v1714, %v1715
  %v1717 = vsub.f32 1.0, %v1716
  %v1718 = vmul.f32 %v1715, %v1717
  %v1719 = vadd.f32 %v1715, %v1718
  %vm1720 = vweird.f32 %v1714
  %vm1721 = vweird.f32 %v1715
  %vm1722 = vmor %vm1720, %vm1721
  %v1723 = vsel %vm1722, %v1715, %v1719
  %v1724 = vand.u32 2147483647, %v1714
  %vm1725 = vcmp.eq.f32.partialorder %v1724, 8.507059e+37
  %v1726 = vand.u32 %v1714, 2147483648
  %v1727 = vor.u32 1.1754944e-38, %v1726
  %v1728 = vsel %vm1725, %v1727, %v1723
  %v1729 = vmul.f32 1.0, %v1728
  %v1730 = vtanh.pop %v1690
  %v1731 = vxor.u32 %v1691, 2147483648
  %v1732 = vmul.f32 %v1731, 1.442695
  %v1733 = vpow.pop %v1732
  %v1734 = vadd.f32 %v1733, 1.0
  %v1735 = vrcp.pop %v1734
  %v1736 = vmul.f32 %v1734, %v1735
  %v1737 = vsub.f32 1.0, %v1736
  %v1738 = vmul.f32 %v1735, %v1737
  %v1739 = vadd.f32 %v1735, %v1738
  %vm1740 = vweird.f32 %v1734
  %vm1741 = vweird.f32 %v1735
  %vm1742 = vmor %vm1740, %vm1741
  %v1743 = vsel %vm1742, %v1735, %v1739
  %v1744 = vand.u32 2147483647, %v1734
  %vm1745 = vcmp.eq.f32.partialorder %v1744, 8.507059e+37
  %v1746 = vand.u32 %v1734, 2147483648
  %v1747 = vor.u32 1.1754944e-38, %v1746
  %v1748 = vsel %vm1745, %v1747, %v1743
  %v1749 = vmul.f32 1.0, %v1748
  %v1750 = vmul.f32 %v1729, %v1623
  %v1751 = vmul.f32 %v1710, %v1730
  %v1752 = vadd.f32 %v1750, %v1751
  %v1753 = vtanh.pop %v1752
  %v1754 = vmul.f32 %v1749, %v1753
  %v1755 = vpack.c.bf16 %v1754, %v1754
  %s1756 = scalar_lea.vmem %s2, 44
  %1757 = vst [vmem:[%s1756] sm:$0xf] %v1755
  %s1758 = scalar_lea.vmem %s0, 192
  %v1759 = vld [vmem:[%s1758] sm:$0xff]
  %v1760 = vld [vmem:[%s1758 + $0x8] sm:$0xff]
  %v1761 = vunpack.c.l.bf16 %v1759
  %v1762 = vunpack.c.h.bf16 %v1759
  %v1763 = vunpack.c.l.bf16 %v1760
  %v1764 = vunpack.c.h.bf16 %v1760
  %1765 = vmatpush.bf16.msra.mxu0 %v182
  %1766 = vmatpush.bf16.msra.mxu0 %v178
  %1767 = vmatpush.bf16.msra.mxu0 %v174
  %1768 = vmatpush.bf16.msra.mxu0 %v170
  %1769 = vmatpush.bf16.msra.mxu0 %v166
  %1770 = vmatpush.bf16.msra.mxu0 %v162
  %1771 = vmatpush.bf16.msra.mxu0 %v158
  %1772 = vmatpush.bf16.msra.mxu0 %v154
  %1773 = vmatmul.bf16.gmra.mxu0 %v1755
  %v1774 = vpop.f32.mrf.mxu0
  %v1775 = vadd.f32 0.0, %v1774
  %v1776 = vpop.f32.mrf.mxu0
  %1777 = vdwg.mxu0
  %1778 = vmatpush.bf16.msra.mxu0 %v183
  %1779 = vmatpush.bf16.msra.mxu0 %v179
  %1780 = vmatpush.bf16.msra.mxu0 %v175
  %1781 = vmatpush.bf16.msra.mxu0 %v171
  %1782 = vmatpush.bf16.msra.mxu0 %v167
  %1783 = vmatpush.bf16.msra.mxu0 %v163
  %1784 = vmatpush.bf16.msra.mxu0 %v159
  %1785 = vmatpush.bf16.msra.mxu0 %v155
  %1786 = vmatmul.bf16.gmra.mxu0 %v1755
  %v1787 = vpop.f32.mrf.mxu0
  %v1788 = vadd.f32 0.0, %v1787
  %v1789 = vpop.f32.mrf.mxu0
  %1790 = vdwg.mxu0
  %1791 = vmatpush.bf16.msra.mxu0 %v184
  %1792 = vmatpush.bf16.msra.mxu0 %v180
  %1793 = vmatpush.bf16.msra.mxu0 %v176
  %1794 = vmatpush.bf16.msra.mxu0 %v172
  %1795 = vmatpush.bf16.msra.mxu0 %v168
  %1796 = vmatpush.bf16.msra.mxu0 %v164
  %1797 = vmatpush.bf16.msra.mxu0 %v160
  %1798 = vmatpush.bf16.msra.mxu0 %v156
  %1799 = vmatmul.bf16.gmra.mxu0 %v1755
  %v1800 = vpop.f32.mrf.mxu0
  %v1801 = vadd.f32 0.0, %v1800
  %v1802 = vpop.f32.mrf.mxu0
  %1803 = vdwg.mxu0
  %1804 = vmatpush.bf16.msra.mxu0 %v185
  %1805 = vmatpush.bf16.msra.mxu0 %v181
  %1806 = vmatpush.bf16.msra.mxu0 %v177
  %1807 = vmatpush.bf16.msra.mxu0 %v173
  %1808 = vmatpush.bf16.msra.mxu0 %v169
  %1809 = vmatpush.bf16.msra.mxu0 %v165
  %1810 = vmatpush.bf16.msra.mxu0 %v161
  %1811 = vmatpush.bf16.msra.mxu0 %v157
  %1812 = vmatmul.bf16.gmra.mxu0 %v1755
  %v1813 = vpop.f32.mrf.mxu0
  %v1814 = vadd.f32 0.0, %v1813
  %v1815 = vpop.f32.mrf.mxu0
  %1816 = vdwg.mxu0
  %v1817 = vadd.f32 %v1761, %v1775
  %v1818 = vadd.f32 %v1762, %v1788
  %v1819 = vadd.f32 %v1763, %v1801
  %v1820 = vadd.f32 %v1764, %v1814
  %v1821 = vxor.u32 %v1817, 2147483648
  %v1822 = vmul.f32 %v1821, 1.442695
  %v1823 = vpow.pop %v1822
  %v1824 = vadd.f32 %v1823, 1.0
  %v1825 = vrcp.pop %v1824
  %v1826 = vmul.f32 %v1824, %v1825
  %v1827 = vsub.f32 1.0, %v1826
  %v1828 = vmul.f32 %v1825, %v1827
  %v1829 = vadd.f32 %v1825, %v1828
  %vm1830 = vweird.f32 %v1824
  %vm1831 = vweird.f32 %v1825
  %vm1832 = vmor %vm1830, %vm1831
  %v1833 = vsel %vm1832, %v1825, %v1829
  %v1834 = vand.u32 2147483647, %v1824
  %vm1835 = vcmp.eq.f32.partialorder %v1834, 8.507059e+37
  %v1836 = vand.u32 %v1824, 2147483648
  %v1837 = vor.u32 1.1754944e-38, %v1836
  %v1838 = vsel %vm1835, %v1837, %v1833
  %v1839 = vmul.f32 1.0, %v1838
  %v1840 = vxor.u32 %v1818, 2147483648
  %v1841 = vmul.f32 %v1840, 1.442695
  %v1842 = vpow.pop %v1841
  %v1843 = vadd.f32 %v1842, 1.0
  %v1844 = vrcp.pop %v1843
  %v1845 = vmul.f32 %v1843, %v1844
  %v1846 = vsub.f32 1.0, %v1845
  %v1847 = vmul.f32 %v1844, %v1846
  %v1848 = vadd.f32 %v1844, %v1847
  %vm1849 = vweird.f32 %v1843
  %vm1850 = vweird.f32 %v1844
  %vm1851 = vmor %vm1849, %vm1850
  %v1852 = vsel %vm1851, %v1844, %v1848
  %v1853 = vand.u32 2147483647, %v1843
  %vm1854 = vcmp.eq.f32.partialorder %v1853, 8.507059e+37
  %v1855 = vand.u32 %v1843, 2147483648
  %v1856 = vor.u32 1.1754944e-38, %v1855
  %v1857 = vsel %vm1854, %v1856, %v1852
  %v1858 = vmul.f32 1.0, %v1857
  %v1859 = vtanh.pop %v1819
  %v1860 = vxor.u32 %v1820, 2147483648
  %v1861 = vmul.f32 %v1860, 1.442695
  %v1862 = vpow.pop %v1861
  %v1863 = vadd.f32 %v1862, 1.0
  %v1864 = vrcp.pop %v1863
  %v1865 = vmul.f32 %v1863, %v1864
  %v1866 = vsub.f32 1.0, %v1865
  %v1867 = vmul.f32 %v1864, %v1866
  %v1868 = vadd.f32 %v1864, %v1867
  %vm1869 = vweird.f32 %v1863
  %vm1870 = vweird.f32 %v1864
  %vm1871 = vmor %vm1869, %vm1870
  %v1872 = vsel %vm1871, %v1864, %v1868
  %v1873 = vand.u32 2147483647, %v1863
  %vm1874 = vcmp.eq.f32.partialorder %v1873, 8.507059e+37
  %v1875 = vand.u32 %v1863, 2147483648
  %v1876 = vor.u32 1.1754944e-38, %v1875
  %v1877 = vsel %vm1874, %v1876, %v1872
  %v1878 = vmul.f32 1.0, %v1877
  %v1879 = vmul.f32 %v1858, %v1752
  %v1880 = vmul.f32 %v1839, %v1859
  %v1881 = vadd.f32 %v1879, %v1880
  %v1882 = vtanh.pop %v1881
  %v1883 = vmul.f32 %v1878, %v1882
  %v1884 = vpack.c.bf16 %v1883, %v1883
  %s1885 = scalar_lea.vmem %s2, 48
  %1886 = vst [vmem:[%s1885] sm:$0xf] %v1884
  %s1887 = scalar_lea.vmem %s0, 208
  %v1888 = vld [vmem:[%s1887] sm:$0xff]
  %v1889 = vld [vmem:[%s1887 + $0x8] sm:$0xff]
  %v1890 = vunpack.c.l.bf16 %v1888
  %v1891 = vunpack.c.h.bf16 %v1888
  %v1892 = vunpack.c.l.bf16 %v1889
  %v1893 = vunpack.c.h.bf16 %v1889
  %1894 = vmatpush.bf16.msra.mxu0 %v182
  %1895 = vmatpush.bf16.msra.mxu0 %v178
  %1896 = vmatpush.bf16.msra.mxu0 %v174
  %1897 = vmatpush.bf16.msra.mxu0 %v170
  %1898 = vmatpush.bf16.msra.mxu0 %v166
  %1899 = vmatpush.bf16.msra.mxu0 %v162
  %1900 = vmatpush.bf16.msra.mxu0 %v158
  %1901 = vmatpush.bf16.msra.mxu0 %v154
  %1902 = vmatmul.bf16.gmra.mxu0 %v1884
  %v1903 = vpop.f32.mrf.mxu0
  %v1904 = vadd.f32 0.0, %v1903
  %v1905 = vpop.f32.mrf.mxu0
  %1906 = vdwg.mxu0
  %1907 = vmatpush.bf16.msra.mxu0 %v183
  %1908 = vmatpush.bf16.msra.mxu0 %v179
  %1909 = vmatpush.bf16.msra.mxu0 %v175
  %1910 = vmatpush.bf16.msra.mxu0 %v171
  %1911 = vmatpush.bf16.msra.mxu0 %v167
  %1912 = vmatpush.bf16.msra.mxu0 %v163
  %1913 = vmatpush.bf16.msra.mxu0 %v159
  %1914 = vmatpush.bf16.msra.mxu0 %v155
  %1915 = vmatmul.bf16.gmra.mxu0 %v1884
  %v1916 = vpop.f32.mrf.mxu0
  %v1917 = vadd.f32 0.0, %v1916
  %v1918 = vpop.f32.mrf.mxu0
  %1919 = vdwg.mxu0
  %1920 = vmatpush.bf16.msra.mxu0 %v184
  %1921 = vmatpush.bf16.msra.mxu0 %v180
  %1922 = vmatpush.bf16.msra.mxu0 %v176
  %1923 = vmatpush.bf16.msra.mxu0 %v172
  %1924 = vmatpush.bf16.msra.mxu0 %v168
  %1925 = vmatpush.bf16.msra.mxu0 %v164
  %1926 = vmatpush.bf16.msra.mxu0 %v160
  %1927 = vmatpush.bf16.msra.mxu0 %v156
  %1928 = vmatmul.bf16.gmra.mxu0 %v1884
  %v1929 = vpop.f32.mrf.mxu0
  %v1930 = vadd.f32 0.0, %v1929
  %v1931 = vpop.f32.mrf.mxu0
  %1932 = vdwg.mxu0
  %1933 = vmatpush.bf16.msra.mxu0 %v185
  %1934 = vmatpush.bf16.msra.mxu0 %v181
  %1935 = vmatpush.bf16.msra.mxu0 %v177
  %1936 = vmatpush.bf16.msra.mxu0 %v173
  %1937 = vmatpush.bf16.msra.mxu0 %v169
  %1938 = vmatpush.bf16.msra.mxu0 %v165
  %1939 = vmatpush.bf16.msra.mxu0 %v161
  %1940 = vmatpush.bf16.msra.mxu0 %v157
  %1941 = vmatmul.bf16.gmra.mxu0 %v1884
  %v1942 = vpop.f32.mrf.mxu0
  %v1943 = vadd.f32 0.0, %v1942
  %v1944 = vpop.f32.mrf.mxu0
  %1945 = vdwg.mxu0
  %v1946 = vadd.f32 %v1890, %v1904
  %v1947 = vadd.f32 %v1891, %v1917
  %v1948 = vadd.f32 %v1892, %v1930
  %v1949 = vadd.f32 %v1893, %v1943
  %v1950 = vxor.u32 %v1946, 2147483648
  %v1951 = vmul.f32 %v1950, 1.442695
  %v1952 = vpow.pop %v1951
  %v1953 = vadd.f32 %v1952, 1.0
  %v1954 = vrcp.pop %v1953
  %v1955 = vmul.f32 %v1953, %v1954
  %v1956 = vsub.f32 1.0, %v1955
  %v1957 = vmul.f32 %v1954, %v1956
  %v1958 = vadd.f32 %v1954, %v1957
  %vm1959 = vweird.f32 %v1953
  %vm1960 = vweird.f32 %v1954
  %vm1961 = vmor %vm1959, %vm1960
  %v1962 = vsel %vm1961, %v1954, %v1958
  %v1963 = vand.u32 2147483647, %v1953
  %vm1964 = vcmp.eq.f32.partialorder %v1963, 8.507059e+37
  %v1965 = vand.u32 %v1953, 2147483648
  %v1966 = vor.u32 1.1754944e-38, %v1965
  %v1967 = vsel %vm1964, %v1966, %v1962
  %v1968 = vmul.f32 1.0, %v1967
  %v1969 = vxor.u32 %v1947, 2147483648
  %v1970 = vmul.f32 %v1969, 1.442695
  %v1971 = vpow.pop %v1970
  %v1972 = vadd.f32 %v1971, 1.0
  %v1973 = vrcp.pop %v1972
  %v1974 = vmul.f32 %v1972, %v1973
  %v1975 = vsub.f32 1.0, %v1974
  %v1976 = vmul.f32 %v1973, %v1975
  %v1977 = vadd.f32 %v1973, %v1976
  %vm1978 = vweird.f32 %v1972
  %vm1979 = vweird.f32 %v1973
  %vm1980 = vmor %vm1978, %vm1979
  %v1981 = vsel %vm1980, %v1973, %v1977
  %v1982 = vand.u32 2147483647, %v1972
  %vm1983 = vcmp.eq.f32.partialorder %v1982, 8.507059e+37
  %v1984 = vand.u32 %v1972, 2147483648
  %v1985 = vor.u32 1.1754944e-38, %v1984
  %v1986 = vsel %vm1983, %v1985, %v1981
  %v1987 = vmul.f32 1.0, %v1986
  %v1988 = vtanh.pop %v1948
  %v1989 = vxor.u32 %v1949, 2147483648
  %v1990 = vmul.f32 %v1989, 1.442695
  %v1991 = vpow.pop %v1990
  %v1992 = vadd.f32 %v1991, 1.0
  %v1993 = vrcp.pop %v1992
  %v1994 = vmul.f32 %v1992, %v1993
  %v1995 = vsub.f32 1.0, %v1994
  %v1996 = vmul.f32 %v1993, %v1995
  %v1997 = vadd.f32 %v1993, %v1996
  %vm1998 = vweird.f32 %v1992
  %vm1999 = vweird.f32 %v1993
  %vm2000 = vmor %vm1998, %vm1999
  %v2001 = vsel %vm2000, %v1993, %v1997
  %v2002 = vand.u32 2147483647, %v1992
  %vm2003 = vcmp.eq.f32.partialorder %v2002, 8.507059e+37
  %v2004 = vand.u32 %v1992, 2147483648
  %v2005 = vor.u32 1.1754944e-38, %v2004
  %v2006 = vsel %vm2003, %v2005, %v2001
  %v2007 = vmul.f32 1.0, %v2006
  %v2008 = vmul.f32 %v1987, %v1881
  %v2009 = vmul.f32 %v1968, %v1988
  %v2010 = vadd.f32 %v2008, %v2009
  %v2011 = vtanh.pop %v2010
  %v2012 = vmul.f32 %v2007, %v2011
  %v2013 = vpack.c.bf16 %v2012, %v2012
  %s2014 = scalar_lea.vmem %s2, 52
  %2015 = vst [vmem:[%s2014] sm:$0xf] %v2013
  %s2016 = scalar_lea.vmem %s0, 224
  %v2017 = vld [vmem:[%s2016] sm:$0xff]
  %v2018 = vld [vmem:[%s2016 + $0x8] sm:$0xff]
  %v2019 = vunpack.c.l.bf16 %v2017
  %v2020 = vunpack.c.h.bf16 %v2017
  %v2021 = vunpack.c.l.bf16 %v2018
  %v2022 = vunpack.c.h.bf16 %v2018
  %2023 = vmatpush.bf16.msra.mxu0 %v182
  %2024 = vmatpush.bf16.msra.mxu0 %v178
  %2025 = vmatpush.bf16.msra.mxu0 %v174
  %2026 = vmatpush.bf16.msra.mxu0 %v170
  %2027 = vmatpush.bf16.msra.mxu0 %v166
  %2028 = vmatpush.bf16.msra.mxu0 %v162
  %2029 = vmatpush.bf16.msra.mxu0 %v158
  %2030 = vmatpush.bf16.msra.mxu0 %v154
  %2031 = vmatmul.bf16.gmra.mxu0 %v2013
  %v2032 = vpop.f32.mrf.mxu0
  %v2033 = vadd.f32 0.0, %v2032
  %v2034 = vpop.f32.mrf.mxu0
  %2035 = vdwg.mxu0
  %2036 = vmatpush.bf16.msra.mxu0 %v183
  %2037 = vmatpush.bf16.msra.mxu0 %v179
  %2038 = vmatpush.bf16.msra.mxu0 %v175
  %2039 = vmatpush.bf16.msra.mxu0 %v171
  %2040 = vmatpush.bf16.msra.mxu0 %v167
  %2041 = vmatpush.bf16.msra.mxu0 %v163
  %2042 = vmatpush.bf16.msra.mxu0 %v159
  %2043 = vmatpush.bf16.msra.mxu0 %v155
  %2044 = vmatmul.bf16.gmra.mxu0 %v2013
  %v2045 = vpop.f32.mrf.mxu0
  %v2046 = vadd.f32 0.0, %v2045
  %v2047 = vpop.f32.mrf.mxu0
  %2048 = vdwg.mxu0
  %2049 = vmatpush.bf16.msra.mxu0 %v184
  %2050 = vmatpush.bf16.msra.mxu0 %v180
  %2051 = vmatpush.bf16.msra.mxu0 %v176
  %2052 = vmatpush.bf16.msra.mxu0 %v172
  %2053 = vmatpush.bf16.msra.mxu0 %v168
  %2054 = vmatpush.bf16.msra.mxu0 %v164
  %2055 = vmatpush.bf16.msra.mxu0 %v160
  %2056 = vmatpush.bf16.msra.mxu0 %v156
  %2057 = vmatmul.bf16.gmra.mxu0 %v2013
  %v2058 = vpop.f32.mrf.mxu0
  %v2059 = vadd.f32 0.0, %v2058
  %v2060 = vpop.f32.mrf.mxu0
  %2061 = vdwg.mxu0
  %2062 = vmatpush.bf16.msra.mxu0 %v185
  %2063 = vmatpush.bf16.msra.mxu0 %v181
  %2064 = vmatpush.bf16.msra.mxu0 %v177
  %2065 = vmatpush.bf16.msra.mxu0 %v173
  %2066 = vmatpush.bf16.msra.mxu0 %v169
  %2067 = vmatpush.bf16.msra.mxu0 %v165
  %2068 = vmatpush.bf16.msra.mxu0 %v161
  %2069 = vmatpush.bf16.msra.mxu0 %v157
  %2070 = vmatmul.bf16.gmra.mxu0 %v2013
  %v2071 = vpop.f32.mrf.mxu0
  %v2072 = vadd.f32 0.0, %v2071
  %v2073 = vpop.f32.mrf.mxu0
  %2074 = vdwg.mxu0
  %v2075 = vadd.f32 %v2019, %v2033
  %v2076 = vadd.f32 %v2020, %v2046
  %v2077 = vadd.f32 %v2021, %v2059
  %v2078 = vadd.f32 %v2022, %v2072
  %v2079 = vxor.u32 %v2075, 2147483648
  %v2080 = vmul.f32 %v2079, 1.442695
  %v2081 = vpow.pop %v2080
  %v2082 = vadd.f32 %v2081, 1.0
  %v2083 = vrcp.pop %v2082
  %v2084 = vmul.f32 %v2082, %v2083
  %v2085 = vsub.f32 1.0, %v2084
  %v2086 = vmul.f32 %v2083, %v2085
  %v2087 = vadd.f32 %v2083, %v2086
  %vm2088 = vweird.f32 %v2082
  %vm2089 = vweird.f32 %v2083
  %vm2090 = vmor %vm2088, %vm2089
  %v2091 = vsel %vm2090, %v2083, %v2087
  %v2092 = vand.u32 2147483647, %v2082
  %vm2093 = vcmp.eq.f32.partialorder %v2092, 8.507059e+37
  %v2094 = vand.u32 %v2082, 2147483648
  %v2095 = vor.u32 1.1754944e-38, %v2094
  %v2096 = vsel %vm2093, %v2095, %v2091
  %v2097 = vmul.f32 1.0, %v2096
  %v2098 = vxor.u32 %v2076, 2147483648
  %v2099 = vmul.f32 %v2098, 1.442695
  %v2100 = vpow.pop %v2099
  %v2101 = vadd.f32 %v2100, 1.0
  %v2102 = vrcp.pop %v2101
  %v2103 = vmul.f32 %v2101, %v2102
  %v2104 = vsub.f32 1.0, %v2103
  %v2105 = vmul.f32 %v2102, %v2104
  %v2106 = vadd.f32 %v2102, %v2105
  %vm2107 = vweird.f32 %v2101
  %vm2108 = vweird.f32 %v2102
  %vm2109 = vmor %vm2107, %vm2108
  %v2110 = vsel %vm2109, %v2102, %v2106
  %v2111 = vand.u32 2147483647, %v2101
  %vm2112 = vcmp.eq.f32.partialorder %v2111, 8.507059e+37
  %v2113 = vand.u32 %v2101, 2147483648
  %v2114 = vor.u32 1.1754944e-38, %v2113
  %v2115 = vsel %vm2112, %v2114, %v2110
  %v2116 = vmul.f32 1.0, %v2115
  %v2117 = vtanh.pop %v2077
  %v2118 = vxor.u32 %v2078, 2147483648
  %v2119 = vmul.f32 %v2118, 1.442695
  %v2120 = vpow.pop %v2119
  %v2121 = vadd.f32 %v2120, 1.0
  %v2122 = vrcp.pop %v2121
  %v2123 = vmul.f32 %v2121, %v2122
  %v2124 = vsub.f32 1.0, %v2123
  %v2125 = vmul.f32 %v2122, %v2124
  %v2126 = vadd.f32 %v2122, %v2125
  %vm2127 = vweird.f32 %v2121
  %vm2128 = vweird.f32 %v2122
  %vm2129 = vmor %vm2127, %vm2128
  %v2130 = vsel %vm2129, %v2122, %v2126
  %v2131 = vand.u32 2147483647, %v2121
  %vm2132 = vcmp.eq.f32.partialorder %v2131, 8.507059e+37
  %v2133 = vand.u32 %v2121, 2147483648
  %v2134 = vor.u32 1.1754944e-38, %v2133
  %v2135 = vsel %vm2132, %v2134, %v2130
  %v2136 = vmul.f32 1.0, %v2135
  %v2137 = vmul.f32 %v2116, %v2010
  %v2138 = vmul.f32 %v2097, %v2117
  %v2139 = vadd.f32 %v2137, %v2138
  %v2140 = vtanh.pop %v2139
  %v2141 = vmul.f32 %v2136, %v2140
  %v2142 = vpack.c.bf16 %v2141, %v2141
  %s2143 = scalar_lea.vmem %s2, 56
  %2144 = vst [vmem:[%s2143] sm:$0xf] %v2142
  %s2145 = scalar_lea.vmem %s0, 240
  %v2146 = vld [vmem:[%s2145] sm:$0xff]
  %v2147 = vld [vmem:[%s2145 + $0x8] sm:$0xff]
  %v2148 = vunpack.c.l.bf16 %v2146
  %v2149 = vunpack.c.h.bf16 %v2146
  %v2150 = vunpack.c.l.bf16 %v2147
  %v2151 = vunpack.c.h.bf16 %v2147
  %2152 = vmatpush.bf16.msra.mxu0 %v182
  %2153 = vmatpush.bf16.msra.mxu0 %v178
  %2154 = vmatpush.bf16.msra.mxu0 %v174
  %2155 = vmatpush.bf16.msra.mxu0 %v170
  %2156 = vmatpush.bf16.msra.mxu0 %v166
  %2157 = vmatpush.bf16.msra.mxu0 %v162
  %2158 = vmatpush.bf16.msra.mxu0 %v158
  %2159 = vmatpush.bf16.msra.mxu0 %v154
  %2160 = vmatmul.bf16.gmra.mxu0 %v2142
  %v2161 = vpop.f32.mrf.mxu0
  %v2162 = vadd.f32 0.0, %v2161
  %v2163 = vpop.f32.mrf.mxu0
  %2164 = vdwg.mxu0
  %2165 = vmatpush.bf16.msra.mxu0 %v183
  %2166 = vmatpush.bf16.msra.mxu0 %v179
  %2167 = vmatpush.bf16.msra.mxu0 %v175
  %2168 = vmatpush.bf16.msra.mxu0 %v171
  %2169 = vmatpush.bf16.msra.mxu0 %v167
  %2170 = vmatpush.bf16.msra.mxu0 %v163
  %2171 = vmatpush.bf16.msra.mxu0 %v159
  %2172 = vmatpush.bf16.msra.mxu0 %v155
  %2173 = vmatmul.bf16.gmra.mxu0 %v2142
  %v2174 = vpop.f32.mrf.mxu0
  %v2175 = vadd.f32 0.0, %v2174
  %v2176 = vpop.f32.mrf.mxu0
  %2177 = vdwg.mxu0
  %2178 = vmatpush.bf16.msra.mxu0 %v184
  %2179 = vmatpush.bf16.msra.mxu0 %v180
  %2180 = vmatpush.bf16.msra.mxu0 %v176
  %2181 = vmatpush.bf16.msra.mxu0 %v172
  %2182 = vmatpush.bf16.msra.mxu0 %v168
  %2183 = vmatpush.bf16.msra.mxu0 %v164
  %2184 = vmatpush.bf16.msra.mxu0 %v160
  %2185 = vmatpush.bf16.msra.mxu0 %v156
  %2186 = vmatmul.bf16.gmra.mxu0 %v2142
  %v2187 = vpop.f32.mrf.mxu0
  %v2188 = vadd.f32 0.0, %v2187
  %v2189 = vpop.f32.mrf.mxu0
  %2190 = vdwg.mxu0
  %2191 = vmatpush.bf16.msra.mxu0 %v185
  %2192 = vmatpush.bf16.msra.mxu0 %v181
  %2193 = vmatpush.bf16.msra.mxu0 %v177
  %2194 = vmatpush.bf16.msra.mxu0 %v173
  %2195 = vmatpush.bf16.msra.mxu0 %v169
  %2196 = vmatpush.bf16.msra.mxu0 %v165
  %2197 = vmatpush.bf16.msra.mxu0 %v161
  %2198 = vmatpush.bf16.msra.mxu0 %v157
  %2199 = vmatmul.bf16.gmra.mxu0 %v2142
  %v2200 = vpop.f32.mrf.mxu0
  %v2201 = vadd.f32 0.0, %v2200
  %v2202 = vpop.f32.mrf.mxu0
  %2203 = vdwg.mxu0
  %v2204 = vadd.f32 %v2148, %v2162
  %v2205 = vadd.f32 %v2149, %v2175
  %v2206 = vadd.f32 %v2150, %v2188
  %v2207 = vadd.f32 %v2151, %v2201
  %v2208 = vxor.u32 %v2204, 2147483648
  %v2209 = vmul.f32 %v2208, 1.442695
  %v2210 = vpow.pop %v2209
  %v2211 = vadd.f32 %v2210, 1.0
  %v2212 = vrcp.pop %v2211
  %v2213 = vmul.f32 %v2211, %v2212
  %v2214 = vsub.f32 1.0, %v2213
  %v2215 = vmul.f32 %v2212, %v2214
  %v2216 = vadd.f32 %v2212, %v2215
  %vm2217 = vweird.f32 %v2211
  %vm2218 = vweird.f32 %v2212
  %vm2219 = vmor %vm2217, %vm2218
  %v2220 = vsel %vm2219, %v2212, %v2216
  %v2221 = vand.u32 2147483647, %v2211
  %vm2222 = vcmp.eq.f32.partialorder %v2221, 8.507059e+37
  %v2223 = vand.u32 %v2211, 2147483648
  %v2224 = vor.u32 1.1754944e-38, %v2223
  %v2225 = vsel %vm2222, %v2224, %v2220
  %v2226 = vmul.f32 1.0, %v2225
  %v2227 = vxor.u32 %v2205, 2147483648
  %v2228 = vmul.f32 %v2227, 1.442695
  %v2229 = vpow.pop %v2228
  %v2230 = vadd.f32 %v2229, 1.0
  %v2231 = vrcp.pop %v2230
  %v2232 = vmul.f32 %v2230, %v2231
  %v2233 = vsub.f32 1.0, %v2232
  %v2234 = vmul.f32 %v2231, %v2233
  %v2235 = vadd.f32 %v2231, %v2234
  %vm2236 = vweird.f32 %v2230
  %vm2237 = vweird.f32 %v2231
  %vm2238 = vmor %vm2236, %vm2237
  %v2239 = vsel %vm2238, %v2231, %v2235
  %v2240 = vand.u32 2147483647, %v2230
  %vm2241 = vcmp.eq.f32.partialorder %v2240, 8.507059e+37
  %v2242 = vand.u32 %v2230, 2147483648
  %v2243 = vor.u32 1.1754944e-38, %v2242
  %v2244 = vsel %vm2241, %v2243, %v2239
  %v2245 = vmul.f32 1.0, %v2244
  %v2246 = vtanh.pop %v2206
  %v2247 = vxor.u32 %v2207, 2147483648
  %v2248 = vmul.f32 %v2247, 1.442695
  %v2249 = vpow.pop %v2248
  %v2250 = vadd.f32 %v2249, 1.0
  %v2251 = vrcp.pop %v2250
  %v2252 = vmul.f32 %v2250, %v2251
  %v2253 = vsub.f32 1.0, %v2252
  %v2254 = vmul.f32 %v2251, %v2253
  %v2255 = vadd.f32 %v2251, %v2254
  %vm2256 = vweird.f32 %v2250
  %vm2257 = vweird.f32 %v2251
  %vm2258 = vmor %vm2256, %vm2257
  %v2259 = vsel %vm2258, %v2251, %v2255
  %v2260 = vand.u32 2147483647, %v2250
  %vm2261 = vcmp.eq.f32.partialorder %v2260, 8.507059e+37
  %v2262 = vand.u32 %v2250, 2147483648
  %v2263 = vor.u32 1.1754944e-38, %v2262
  %v2264 = vsel %vm2261, %v2263, %v2259
  %v2265 = vmul.f32 1.0, %v2264
  %v2266 = vmul.f32 %v2245, %v2139
  %v2267 = vmul.f32 %v2226, %v2246
  %v2268 = vadd.f32 %v2266, %v2267
  %v2269 = vtanh.pop %v2268
  %v2270 = vmul.f32 %v2265, %v2269
  %v2271 = vpack.c.bf16 %v2270, %v2270
  %s2272 = scalar_lea.vmem %s2, 60
  %2273 = vst [vmem:[%s2272] sm:$0xf] %v2271
  %2274 = vst [vmem:[#allocation2] sm:$0xff] %v2270
  %2275 = vst [vmem:[#allocation3] sm:$0xff] %v2268
  // Predicated region
  $region14: #{decoder_rnn_forward.4} parent=0 // pred_check
    _
  $region15: #{decoder_rnn_forward.4} parent=0 // pred_check_branch
    %2277 = sbr.rel (0) target = $region17
  $region16: #{decoder_rnn_forward.4} parent=0 // pred_region
    _
  $region17: #{decoder_rnn_forward.4} parent=0 // pred_fallthru
    _
  // Predicated region
  $region18: #{decoder_rnn_forward.4} parent=0 // pred_check
    _
  $region19: #{decoder_rnn_forward.4} parent=0 // pred_check_branch
    %2279 = sbr.rel (0) target = $region21
  $region20: #{decoder_rnn_forward.4} parent=0 // pred_region
    _
  $region21: #{decoder_rnn_forward.4} parent=0 // pred_fallthru
    _

</llo_original>
